<compile_context>
chip_gen: v5e
topology: v5e:2x2
jax: 0.10.0
libtpu: 0.0.40
codegen_flags: <defaults>
</compile_context>

<pallas_src>
import functools
import math

import jax
import jax.numpy as jnp
from jax.experimental import pallas as pl
from jax.experimental.pallas import tpu as pltpu

_LANE = 128            # lane width
_FT_MAX = 512          # max feature-tile rows of 128 lanes (256 KiB f32 per sample-tile)
_TB_MAX = 16           # samples per grid step
_MIN_PALLAS_BYTES = 4 * 1024 * 1024   # below this, plain JAX wins (overhead-bound)
_MIN_PALLAS_F_ROWS = 64               # per-row gather DMAs too small below this


def _mixup_kernel(perm_ref, lam_ref, x_ref, x_hbm_ref, ox_ref, gbuf_ref, sem_ref,
                  *, tb, ft, n_rows, f_blocks):
    # perm_ref : (n,) int32 in SMEM (scalar prefetch)
    # lam_ref  : (1,) f32 in SMEM
    # x_ref    : (tb, ft, 128) VMEM block of rows [i*tb, (i+1)*tb), feature tile j
    # x_hbm_ref: full (n, f_rows, 128) input left in HBM (pl.ANY) for the gather
    # ox_ref   : (tb, ft, 128) output block
    # gbuf_ref : (2, tb, ft, 128) VMEM double buffer for the permuted rows
    # sem_ref  : (2, tb) DMA semaphores
    i = pl.program_id(0)          # batch block   ("parallel" -> megacore shardable)
    j = pl.program_id(1)          # feature tile  ("arbitrary" -> innermost, sequential)
    base = i * tb

    def start_gather(tile_j, slot):
        # Issue tb per-row gather DMAs (feature tile `tile_j`) into gbuf[slot].
        fstart = tile_j * ft
        for r in range(tb):                                  # tb is static -> unrolled
            row = jnp.minimum(base + r, n_rows - 1)          # clamp ragged batch tail
            src = perm_ref[row]
            pltpu.make_async_copy(
                x_hbm_ref.at[src, pl.ds(fstart, ft)],
                gbuf_ref.at[slot, r],
                sem_ref.at[slot, r],
            ).start()

    # First feature tile of this batch block: nothing was prefetched for it yet.
    @pl.when(j == 0)
    def _():
        start_gather(0, 0)

    # Lookahead: prefetch the NEXT feature tile of the SAME batch block into the
    # other slot, so its HBM traffic overlaps this step's compute + writeback.
    if f_blocks > 1:
        @pl.when(j + 1 < f_blocks)
        def _():
            start_gather(j + 1, (j + 1) % 2)

    # Wait for this tile's permuted rows (started this step if j == 0, otherwise
    # prefetched during the previous feature tile).
    slot = j % 2
    for r in range(tb):
        pltpu.make_async_copy(
            x_hbm_ref.at[0, pl.ds(j * ft, ft)],   # shape/size only, for the wait
            gbuf_ref.at[slot, r],
            sem_ref.at[slot, r],
        ).wait()

    lam = lam_ref[0]
    mixed = (lam * x_ref[...].astype(jnp.float32)
             + (1.0 - lam) * gbuf_ref[slot].astype(jnp.float32))
    ox_ref[...] = mixed.astype(ox_ref.dtype)


def _pick_feat_tile(f_rows, feat_tile=None):
    """Choose ft (feature-tile rows).  Prefer a tile that divides f_rows so no
    feature padding is ever materialized."""
    if feat_tile is not None:
        ft = min(int(feat_tile), f_rows)
        if ft != f_rows and ft % 8 != 0:
            ft = max(8, (ft // 8) * 8)          # keep the (8,128) constraint
        return max(ft, 1)
    if f_rows <= _FT_MAX:
        return f_rows                            # single full-extent tile
    for d in range(_FT_MAX, 7, -8):              # largest mult-of-8 divisor <= _FT_MAX
        if f_rows % d == 0:
            return d
    return _FT_MAX                               # awkward shape -> pad path


def _mixup_inputs_pallas(inputs, perm, lam, *, feat_tile=None):
    """mixed = lam * inputs + (1 - lam) * inputs[perm], via Pallas."""
    n = inputs.shape[0]
    feat = math.prod(inputs.shape[1:])
    f_rows = -(-feat // _LANE)

    ft = _pick_feat_tile(f_rows, feat_tile)
    f_pad_rows = -(-f_rows // ft) * ft
    feat_pad = f_pad_rows * _LANE

    x2 = inputs.reshape(n, feat)
    if feat_pad != feat:
        # Only for awkward feature sizes (feat % 128 != 0 or no clean divisor).
        x2 = jnp.pad(x2, ((0, 0), (0, feat_pad - feat)))
    x3 = x2.reshape(n, f_pad_rows, _LANE)

    tb = min(_TB_MAX, n)
    n_blocks = pl.cdiv(n, tb)        # ragged batch tail handled in-kernel (no pad)
    f_blocks = f_pad_rows // ft

    kernel = functools.partial(_mixup_kernel, tb=tb, ft=ft, n_rows=n,
                               f_blocks=f_blocks)

    grid_spec = pltpu.PrefetchScalarGridSpec(
        num_scalar_prefetch=1,   # perm -> SMEM, visible to index_maps + kernel body
        grid=(n_blocks, f_blocks),
        in_specs=[
            pl.BlockSpec(memory_space=pltpu.MemorySpace.SMEM),             # lam (1,)
            pl.BlockSpec((tb, ft, _LANE), lambda i, j, perm: (i, j, 0)),   # x stream
            pl.BlockSpec(memory_space=pl.ANY),                             # x in HBM
        ],
        out_specs=pl.BlockSpec((tb, ft, _LANE), lambda i, j, perm: (i, j, 0)),
        scratch_shapes=[
            pltpu.VMEM((2, tb, ft, _LANE), inputs.dtype),   # gather double buffer
            pltpu.SemaphoreType.DMA((2, tb)),
        ],
    )

    out = pl.pallas_call(
        kernel,
        out_shape=jax.ShapeDtypeStruct((n, f_pad_rows, _LANE), inputs.dtype),
        grid_spec=grid_spec,
        compiler_params=pltpu.CompilerParams(
            # Batch axis megacore-shardable on v7x; feature axis must stay
            # sequential/innermost so the gather lookahead is always consumed.
            dimension_semantics=("parallel", "arbitrary"),
            vmem_limit_bytes=40 * 1024 * 1024,   # ~24 MiB used; safe on v5e..v7x
        ),
    )(perm, lam, x3, x3)

    if feat_pad != feat:
        out = out.reshape(n, feat_pad)[:, :feat]
    return out.reshape(inputs.shape)


def mixup(inputs, targets, *, num_classes, alpha, key, use_pallas=None,
          feat_tile=None):
    """JAX/Pallas equivalent of holocron Mixup.forward.

    Returns (mixed_inputs, mixed_targets, lam, perm) so callers can verify
    against a reference (the torch module draws its randomness internally).
    """
    # ---- glue: one-hot encode targets like torch.nn.functional.one_hot ----
    if targets.ndim == 1:
        if num_classes > 1:
            targets = jax.nn.one_hot(targets, num_classes, dtype=inputs.dtype)
        elif num_classes == 1:
            targets = targets[:, None]
    targets = targets.astype(inputs.dtype)

    n = inputs.shape[0]
    if alpha == 0:
        return (inputs, targets,
                jnp.ones((1,), jnp.float32),
                jnp.arange(n, dtype=jnp.int32))

    # ---- random mixing coefficients (host/JAX glue, like np/torch RNG) ----
    k_lam, k_perm = jax.random.split(key)
    lam = jax.random.beta(k_lam, alpha, alpha, shape=(1,), dtype=jnp.float32)
    perm = jax.random.permutation(k_perm, n).astype(jnp.int32)
    lam_s = lam[0]

    # Targets are tiny (n x num_classes): blend in plain JAX, not in the kernel.
    mixed_t = (lam_s * targets.astype(jnp.float32)
               + (1.0 - lam_s) * targets[perm].astype(jnp.float32)
               ).astype(inputs.dtype)

    # Small-input cutoff: per-row gather DMAs and per-step overhead dominate for
    # tiny tensors, so XLA's fused gather+FMA is faster there.
    if use_pallas is None:
        feat = math.prod(inputs.shape[1:])
        f_rows = -(-feat // _LANE)
        total_bytes = inputs.size * inputs.dtype.itemsize
        use_pallas = (total_bytes >= _MIN_PALLAS_BYTES
                      and f_rows >= _MIN_PALLAS_F_ROWS)

    if use_pallas:
        mixed_x = _mixup_inputs_pallas(inputs, perm, lam, feat_tile=feat_tile)
    else:
        mixed_x = (lam_s * inputs.astype(jnp.float32)
                   + (1.0 - lam_s) * inputs[perm].astype(jnp.float32)
                   ).astype(inputs.dtype)
    return mixed_x, mixed_t, lam, perm


if __name__ == "__main__":
    num_classes = 10
    alpha = 0.4

    def check(x, y, k, **kw):
        mx, mt, lam, perm = mixup(x, y, num_classes=num_classes, alpha=alpha,
                                  key=k, **kw)
        jax.block_until_ready((mx, mt))
        t_oh = jax.nn.one_hot(y, num_classes, dtype=x.dtype)
        lam_s = lam[0]
        ref_x = lam_s * x + (1.0 - lam_s) * x[perm]
        ref_t = lam_s * t_oh + (1.0 - lam_s) * t_oh[perm]
        assert mx.shape == x.shape and mx.dtype == x.dtype
        assert mt.shape == (x.shape[0], num_classes) and mt.dtype == x.dtype
        assert jnp.allclose(mx, ref_x, atol=1e-5, rtol=1e-5)
        assert jnp.allclose(mt, ref_t, atol=1e-5, rtol=1e-5)

    key = jax.random.PRNGKey(0)
    k1, k2, k3, k4, k5, k6, k7, k8, k9 = jax.random.split(key, 9)

    # 1) Small module-consistent shape: auto-heuristic routes to the plain-JAX
    #    path (the Pallas kernel would be pure overhead at this size).
    x1 = jax.random.normal(k1, (4, 4, 16, 16), dtype=jnp.float32)
    y1 = jax.random.randint(k2, (4,), 0, num_classes)
    check(x1, y1, k3)

    # 2) Pallas path: ragged batch (20 % 16 != 0, handled in-kernel without
    #    padding), feat = 6*32*64 = 12288 = 96*128 (no feature padding), and a
    #    small feat_tile=32 so f_blocks = 3 exercises the double-buffered
    #    lookahead gather.
    x2 = jax.random.normal(k4, (20, 6, 32, 64), dtype=jnp.float32)
    y2 = jax.random.randint(k5, (20,), 0, num_classes)
    check(x2, y2, k6, use_pallas=True, feat_tile=32)

    # 3) Pallas path with an awkward feature size (feat = 300, not a multiple
    #    of 128) -> single lane-pad + crop fallback inside the wrapper.
    x3 = jax.random.normal(k7, (4, 3, 10, 10), dtype=jnp.float32)
    y3 = jax.random.randint(k8, (4,), 0, num_classes)
    check(x3, y3, k9, use_pallas=True)

    print("KERNEL_OK")
</pallas_src>

<mosaic_0001>
module attributes {stable_mosaic.version = 11 : i64} {
  func.func @_mixup_kernel(%arg0: i32, %arg1: i32, %arg2: memref<20xi32, #tpu.memory_space<smem>>, %arg3: memref<1xf32, #tpu.memory_space<smem>>, %arg4: memref<16x32x128xf32, #tpu.memory_space<vmem>>, %arg5: memref<20x96x128xf32, #tpu.memory_space<any>>, %arg6: memref<16x32x128xf32, #tpu.memory_space<vmem>>, %arg7: memref<2x16x32x128xf32, #tpu.memory_space<vmem>>, %arg8: memref<2x16x!tpu.dma_semaphore, #tpu.memory_space<semaphore_mem>>) attributes {dimension_semantics = [#tpu.dimension_semantics<parallel>, #tpu.dimension_semantics<arbitrary>], iteration_bounds = array<i64: 2, 3>, scalar_prefetch = 1 : i64, scratch_operands = 2 : i64, tpu.core_type = #tpu.core_type<tc>, window_params = [{transform_indices = @transform_0, window_bounds = array<i64: 1>}, {transform_indices = @transform_1, window_bounds = array<i64: 16, 32, 128>}, {}, {transform_indices = @transform_3, window_bounds = array<i64: 16, 32, 128>}]} {
    %c16_i32 = arith.constant 16 : i32
    %0 = arith.muli %arg0, %c16_i32 : i32
    %c0_i32 = arith.constant 0 : i32
    %1 = arith.cmpi eq, %arg1, %c0_i32 : i32
    %2 = arith.extui %1 : i1 to i32
    %c0_i32_0 = arith.constant 0 : i32
    %3 = arith.cmpi ne, %2, %c0_i32_0 : i32
    scf.if %3 {
      %c0_i32_115 = arith.constant 0 : i32
      %142 = arith.addi %0, %c0_i32_115 : i32
      %c19_i32 = arith.constant 19 : i32
      %143 = arith.minsi %142, %c19_i32 : i32
      %144 = arith.index_cast %143 : i32 to index
      %145 = memref.load %arg2[%144] : memref<20xi32, #tpu.memory_space<smem>>
      %c0_i32_116 = arith.constant 0 : i32
      %c0_i32_117 = arith.constant 0 : i32
      %c0_i32_118 = arith.constant 0 : i32
      %c0_i32_119 = arith.constant 0 : i32
      %c0_i32_120 = arith.constant 0 : i32
      %c0_i32_121 = arith.constant 0 : i32
      %146 = tpu.memref_slice %arg5[%145, %c0_i32_120, %c0_i32_121] : memref<20x96x128xf32, #tpu.memory_space<any>> -> memref<1x32x128xf32, #tpu.memory_space<any>>
      %147 = tpu.memref_squeeze %146 : memref<1x32x128xf32, #tpu.memory_space<any>> -> memref<32x128xf32, #tpu.memory_space<any>>
      %c0_i32_122 = arith.constant 0 : i32
      %c0_i32_123 = arith.constant 0 : i32
      %148 = tpu.memref_slice %arg7[%c0_i32_116, %c0_i32_117, %c0_i32_122, %c0_i32_123] : memref<2x16x32x128xf32, #tpu.memory_space<vmem>> -> memref<1x1x32x128xf32, #tpu.memory_space<vmem>>
      %149 = tpu.memref_squeeze %148 : memref<1x1x32x128xf32, #tpu.memory_space<vmem>> -> memref<32x128xf32, #tpu.memory_space<vmem>>
      %150 = tpu.memref_slice %arg8[%c0_i32_118, %c0_i32_119] : memref<2x16x!tpu.dma_semaphore, #tpu.memory_space<semaphore_mem>> -> memref<1x1x!tpu.dma_semaphore, #tpu.memory_space<semaphore_mem>>
      %151 = tpu.memref_squeeze %150 : memref<1x1x!tpu.dma_semaphore, #tpu.memory_space<semaphore_mem>> -> memref<!tpu.dma_semaphore, #tpu.memory_space<semaphore_mem>>
      tpu.enqueue_dma source(%147 : memref<32x128xf32, #tpu.memory_space<any>>) target(%149 : memref<32x128xf32, #tpu.memory_space<vmem>>) target_semaphore(%151 : memref<!tpu.dma_semaphore, #tpu.memory_space<semaphore_mem>>)
      %c1_i32_124 = arith.constant 1 : i32
      %152 = arith.addi %0, %c1_i32_124 : i32
      %c19_i32_125 = arith.constant 19 : i32
      %153 = arith.minsi %152, %c19_i32_125 : i32
      %154 = arith.index_cast %153 : i32 to index
      %155 = memref.load %arg2[%154] : memref<20xi32, #tpu.memory_space<smem>>
      %c0_i32_126 = arith.constant 0 : i32
      %c1_i32_127 = arith.constant 1 : i32
      %c0_i32_128 = arith.constant 0 : i32
      %c1_i32_129 = arith.constant 1 : i32
      %c0_i32_130 = arith.constant 0 : i32
      %c0_i32_131 = arith.constant 0 : i32
      %156 = tpu.memref_slice %arg5[%155, %c0_i32_130, %c0_i32_131] : memref<20x96x128xf32, #tpu.memory_space<any>> -> memref<1x32x128xf32, #tpu.memory_space<any>>
      %157 = tpu.memref_squeeze %156 : memref<1x32x128xf32, #tpu.memory_space<any>> -> memref<32x128xf32, #tpu.memory_space<any>>
      %c0_i32_132 = arith.constant 0 : i32
      %c0_i32_133 = arith.constant 0 : i32
      %158 = tpu.memref_slice %arg7[%c0_i32_126, %c1_i32_127, %c0_i32_132, %c0_i32_133] : memref<2x16x32x128xf32, #tpu.memory_space<vmem>> -> memref<1x1x32x128xf32, #tpu.memory_space<vmem>>
      %159 = tpu.memref_squeeze %158 : memref<1x1x32x128xf32, #tpu.memory_space<vmem>> -> memref<32x128xf32, #tpu.memory_space<vmem>>
      %160 = tpu.memref_slice %arg8[%c0_i32_128, %c1_i32_129] : memref<2x16x!tpu.dma_semaphore, #tpu.memory_space<semaphore_mem>> -> memref<1x1x!tpu.dma_semaphore, #tpu.memory_space<semaphore_mem>>
      %161 = tpu.memref_squeeze %160 : memref<1x1x!tpu.dma_semaphore, #tpu.memory_space<semaphore_mem>> -> memref<!tpu.dma_semaphore, #tpu.memory_space<semaphore_mem>>
      tpu.enqueue_dma source(%157 : memref<32x128xf32, #tpu.memory_space<any>>) target(%159 : memref<32x128xf32, #tpu.memory_space<vmem>>) target_semaphore(%161 : memref<!tpu.dma_semaphore, #tpu.memory_space<semaphore_mem>>)
      %c2_i32_134 = arith.constant 2 : i32
      %162 = arith.addi %0, %c2_i32_134 : i32
      %c19_i32_135 = arith.constant 19 : i32
      %163 = arith.minsi %162, %c19_i32_135 : i32
      %164 = arith.index_cast %163 : i32 to index
      %165 = memref.load %arg2[%164] : memref<20xi32, #tpu.memory_space<smem>>
      %c0_i32_136 = arith.constant 0 : i32
      %c2_i32_137 = arith.constant 2 : i32
      %c0_i32_138 = arith.constant 0 : i32
      %c2_i32_139 = arith.constant 2 : i32
      %c0_i32_140 = arith.constant 0 : i32
      %c0_i32_141 = arith.constant 0 : i32
      %166 = tpu.memref_slice %arg5[%165, %c0_i32_140, %c0_i32_141] : memref<20x96x128xf32, #tpu.memory_space<any>> -> memref<1x32x128xf32, #tpu.memory_space<any>>
      %167 = tpu.memref_squeeze %166 : memref<1x32x128xf32, #tpu.memory_space<any>> -> memref<32x128xf32, #tpu.memory_space<any>>
      %c0_i32_142 = arith.constant 0 : i32
      %c0_i32_143 = arith.constant 0 : i32
      %168 = tpu.memref_slice %arg7[%c0_i32_136, %c2_i32_137, %c0_i32_142, %c0_i32_143] : memref<2x16x32x128xf32, #tpu.memory_space<vmem>> -> memref<1x1x32x128xf32, #tpu.memory_space<vmem>>
      %169 = tpu.memref_squeeze %168 : memref<1x1x32x128xf32, #tpu.memory_space<vmem>> -> memref<32x128xf32, #tpu.memory_space<vmem>>
      %170 = tpu.memref_slice %arg8[%c0_i32_138, %c2_i32_139] : memref<2x16x!tpu.dma_semaphore, #tpu.memory_space<semaphore_mem>> -> memref<1x1x!tpu.dma_semaphore, #tpu.memory_space<semaphore_mem>>
      %171 = tpu.memref_squeeze %170 : memref<1x1x!tpu.dma_semaphore, #tpu.memory_space<semaphore_mem>> -> memref<!tpu.dma_semaphore, #tpu.memory_space<semaphore_mem>>
      tpu.enqueue_dma source(%167 : memref<32x128xf32, #tpu.memory_space<any>>) target(%169 : memref<32x128xf32, #tpu.memory_space<vmem>>) target_semaphore(%171 : memref<!tpu.dma_semaphore, #tpu.memory_space<semaphore_mem>>)
      %c3_i32_144 = arith.constant 3 : i32
      %172 = arith.addi %0, %c3_i32_144 : i32
      %c19_i32_145 = arith.constant 19 : i32
      %173 = arith.minsi %172, %c19_i32_145 : i32
      %174 = arith.index_cast %173 : i32 to index
      %175 = memref.load %arg2[%174] : memref<20xi32, #tpu.memory_space<smem>>
      %c0_i32_146 = arith.constant 0 : i32
      %c3_i32_147 = arith.constant 3 : i32
      %c0_i32_148 = arith.constant 0 : i32
      %c3_i32_149 = arith.constant 3 : i32
      %c0_i32_150 = arith.constant 0 : i32
      %c0_i32_151 = arith.constant 0 : i32
      %176 = tpu.memref_slice %arg5[%175, %c0_i32_150, %c0_i32_151] : memref<20x96x128xf32, #tpu.memory_space<any>> -> memref<1x32x128xf32, #tpu.memory_space<any>>
      %177 = tpu.memref_squeeze %176 : memref<1x32x128xf32, #tpu.memory_space<any>> -> memref<32x128xf32, #tpu.memory_space<any>>
      %c0_i32_152 = arith.constant 0 : i32
      %c0_i32_153 = arith.constant 0 : i32
      %178 = tpu.memref_slice %arg7[%c0_i32_146, %c3_i32_147, %c0_i32_152, %c0_i32_153] : memref<2x16x32x128xf32, #tpu.memory_space<vmem>> -> memref<1x1x32x128xf32, #tpu.memory_space<vmem>>
      %179 = tpu.memref_squeeze %178 : memref<1x1x32x128xf32, #tpu.memory_space<vmem>> -> memref<32x128xf32, #tpu.memory_space<vmem>>
      %180 = tpu.memref_slice %arg8[%c0_i32_148, %c3_i32_149] : memref<2x16x!tpu.dma_semaphore, #tpu.memory_space<semaphore_mem>> -> memref<1x1x!tpu.dma_semaphore, #tpu.memory_space<semaphore_mem>>
      %181 = tpu.memref_squeeze %180 : memref<1x1x!tpu.dma_semaphore, #tpu.memory_space<semaphore_mem>> -> memref<!tpu.dma_semaphore, #tpu.memory_space<semaphore_mem>>
      tpu.enqueue_dma source(%177 : memref<32x128xf32, #tpu.memory_space<any>>) target(%179 : memref<32x128xf32, #tpu.memory_space<vmem>>) target_semaphore(%181 : memref<!tpu.dma_semaphore, #tpu.memory_space<semaphore_mem>>)
      %c4_i32_154 = arith.constant 4 : i32
      %182 = arith.addi %0, %c4_i32_154 : i32
      %c19_i32_155 = arith.constant 19 : i32
      %183 = arith.minsi %182, %c19_i32_155 : i32
      %184 = arith.index_cast %183 : i32 to index
      %185 = memref.load %arg2[%184] : memref<20xi32, #tpu.memory_space<smem>>
      %c0_i32_156 = arith.constant 0 : i32
      %c4_i32_157 = arith.constant 4 : i32
      %c0_i32_158 = arith.constant 0 : i32
      %c4_i32_159 = arith.constant 4 : i32
      %c0_i32_160 = arith.constant 0 : i32
      %c0_i32_161 = arith.constant 0 : i32
      %186 = tpu.memref_slice %arg5[%185, %c0_i32_160, %c0_i32_161] : memref<20x96x128xf32, #tpu.memory_space<any>> -> memref<1x32x128xf32, #tpu.memory_space<any>>
      %187 = tpu.memref_squeeze %186 : memref<1x32x128xf32, #tpu.memory_space<any>> -> memref<32x128xf32, #tpu.memory_space<any>>
      %c0_i32_162 = arith.constant 0 : i32
      %c0_i32_163 = arith.constant 0 : i32
      %188 = tpu.memref_slice %arg7[%c0_i32_156, %c4_i32_157, %c0_i32_162, %c0_i32_163] : memref<2x16x32x128xf32, #tpu.memory_space<vmem>> -> memref<1x1x32x128xf32, #tpu.memory_space<vmem>>
      %189 = tpu.memref_squeeze %188 : memref<1x1x32x128xf32, #tpu.memory_space<vmem>> -> memref<32x128xf32, #tpu.memory_space<vmem>>
      %190 = tpu.memref_slice %arg8[%c0_i32_158, %c4_i32_159] : memref<2x16x!tpu.dma_semaphore, #tpu.memory_space<semaphore_mem>> -> memref<1x1x!tpu.dma_semaphore, #tpu.memory_space<semaphore_mem>>
      %191 = tpu.memref_squeeze %190 : memref<1x1x!tpu.dma_semaphore, #tpu.memory_space<semaphore_mem>> -> memref<!tpu.dma_semaphore, #tpu.memory_space<semaphore_mem>>
      tpu.enqueue_dma source(%187 : memref<32x128xf32, #tpu.memory_space<any>>) target(%189 : memref<32x128xf32, #tpu.memory_space<vmem>>) target_semaphore(%191 : memref<!tpu.dma_semaphore, #tpu.memory_space<semaphore_mem>>)
      %c5_i32_164 = arith.constant 5 : i32
      %192 = arith.addi %0, %c5_i32_164 : i32
      %c19_i32_165 = arith.constant 19 : i32
      %193 = arith.minsi %192, %c19_i32_165 : i32
      %194 = arith.index_cast %193 : i32 to index
      %195 = memref.load %arg2[%194] : memref<20xi32, #tpu.memory_space<smem>>
      %c0_i32_166 = arith.constant 0 : i32
      %c5_i32_167 = arith.constant 5 : i32
      %c0_i32_168 = arith.constant 0 : i32
      %c5_i32_169 = arith.constant 5 : i32
      %c0_i32_170 = arith.constant 0 : i32
      %c0_i32_171 = arith.constant 0 : i32
      %196 = tpu.memref_slice %arg5[%195, %c0_i32_170, %c0_i32_171] : memref<20x96x128xf32, #tpu.memory_space<any>> -> memref<1x32x128xf32, #tpu.memory_space<any>>
      %197 = tpu.memref_squeeze %196 : memref<1x32x128xf32, #tpu.memory_space<any>> -> memref<32x128xf32, #tpu.memory_space<any>>
      %c0_i32_172 = arith.constant 0 : i32
      %c0_i32_173 = arith.constant 0 : i32
      %198 = tpu.memref_slice %arg7[%c0_i32_166, %c5_i32_167, %c0_i32_172, %c0_i32_173] : memref<2x16x32x128xf32, #tpu.memory_space<vmem>> -> memref<1x1x32x128xf32, #tpu.memory_space<vmem>>
      %199 = tpu.memref_squeeze %198 : memref<1x1x32x128xf32, #tpu.memory_space<vmem>> -> memref<32x128xf32, #tpu.memory_space<vmem>>
      %200 = tpu.memref_slice %arg8[%c0_i32_168, %c5_i32_169] : memref<2x16x!tpu.dma_semaphore, #tpu.memory_space<semaphore_mem>> -> memref<1x1x!tpu.dma_semaphore, #tpu.memory_space<semaphore_mem>>
      %201 = tpu.memref_squeeze %200 : memref<1x1x!tpu.dma_semaphore, #tpu.memory_space<semaphore_mem>> -> memref<!tpu.dma_semaphore, #tpu.memory_space<semaphore_mem>>
      tpu.enqueue_dma source(%197 : memref<32x128xf32, #tpu.memory_space<any>>) target(%199 : memref<32x128xf32, #tpu.memory_space<vmem>>) target_semaphore(%201 : memref<!tpu.dma_semaphore, #tpu.memory_space<semaphore_mem>>)
      %c6_i32_174 = arith.constant 6 : i32
      %202 = arith.addi %0, %c6_i32_174 : i32
      %c19_i32_175 = arith.constant 19 : i32
      %203 = arith.minsi %202, %c19_i32_175 : i32
      %204 = arith.index_cast %203 : i32 to index
      %205 = memref.load %arg2[%204] : memref<20xi32, #tpu.memory_space<smem>>
      %c0_i32_176 = arith.constant 0 : i32
      %c6_i32_177 = arith.constant 6 : i32
      %c0_i32_178 = arith.constant 0 : i32
      %c6_i32_179 = arith.constant 6 : i32
      %c0_i32_180 = arith.constant 0 : i32
      %c0_i32_181 = arith.constant 0 : i32
      %206 = tpu.memref_slice %arg5[%205, %c0_i32_180, %c0_i32_181] : memref<20x96x128xf32, #tpu.memory_space<any>> -> memref<1x32x128xf32, #tpu.memory_space<any>>
      %207 = tpu.memref_squeeze %206 : memref<1x32x128xf32, #tpu.memory_space<any>> -> memref<32x128xf32, #tpu.memory_space<any>>
      %c0_i32_182 = arith.constant 0 : i32
      %c0_i32_183 = arith.constant 0 : i32
      %208 = tpu.memref_slice %arg7[%c0_i32_176, %c6_i32_177, %c0_i32_182, %c0_i32_183] : memref<2x16x32x128xf32, #tpu.memory_space<vmem>> -> memref<1x1x32x128xf32, #tpu.memory_space<vmem>>
      %209 = tpu.memref_squeeze %208 : memref<1x1x32x128xf32, #tpu.memory_space<vmem>> -> memref<32x128xf32, #tpu.memory_space<vmem>>
      %210 = tpu.memref_slice %arg8[%c0_i32_178, %c6_i32_179] : memref<2x16x!tpu.dma_semaphore, #tpu.memory_space<semaphore_mem>> -> memref<1x1x!tpu.dma_semaphore, #tpu.memory_space<semaphore_mem>>
      %211 = tpu.memref_squeeze %210 : memref<1x1x!tpu.dma_semaphore, #tpu.memory_space<semaphore_mem>> -> memref<!tpu.dma_semaphore, #tpu.memory_space<semaphore_mem>>
      tpu.enqueue_dma source(%207 : memref<32x128xf32, #tpu.memory_space<any>>) target(%209 : memref<32x128xf32, #tpu.memory_space<vmem>>) target_semaphore(%211 : memref<!tpu.dma_semaphore, #tpu.memory_space<semaphore_mem>>)
      %c7_i32_184 = arith.constant 7 : i32
      %212 = arith.addi %0, %c7_i32_184 : i32
      %c19_i32_185 = arith.constant 19 : i32
      %213 = arith.minsi %212, %c19_i32_185 : i32
      %214 = arith.index_cast %213 : i32 to index
      %215 = memref.load %arg2[%214] : memref<20xi32, #tpu.memory_space<smem>>
      %c0_i32_186 = arith.constant 0 : i32
      %c7_i32_187 = arith.constant 7 : i32
      %c0_i32_188 = arith.constant 0 : i32
      %c7_i32_189 = arith.constant 7 : i32
      %c0_i32_190 = arith.constant 0 : i32
      %c0_i32_191 = arith.constant 0 : i32
      %216 = tpu.memref_slice %arg5[%215, %c0_i32_190, %c0_i32_191] : memref<20x96x128xf32, #tpu.memory_space<any>> -> memref<1x32x128xf32, #tpu.memory_space<any>>
      %217 = tpu.memref_squeeze %216 : memref<1x32x128xf32, #tpu.memory_space<any>> -> memref<32x128xf32, #tpu.memory_space<any>>
      %c0_i32_192 = arith.constant 0 : i32
      %c0_i32_193 = arith.constant 0 : i32
      %218 = tpu.memref_slice %arg7[%c0_i32_186, %c7_i32_187, %c0_i32_192, %c0_i32_193] : memref<2x16x32x128xf32, #tpu.memory_space<vmem>> -> memref<1x1x32x128xf32, #tpu.memory_space<vmem>>
      %219 = tpu.memref_squeeze %218 : memref<1x1x32x128xf32, #tpu.memory_space<vmem>> -> memref<32x128xf32, #tpu.memory_space<vmem>>
      %220 = tpu.memref_slice %arg8[%c0_i32_188, %c7_i32_189] : memref<2x16x!tpu.dma_semaphore, #tpu.memory_space<semaphore_mem>> -> memref<1x1x!tpu.dma_semaphore, #tpu.memory_space<semaphore_mem>>
      %221 = tpu.memref_squeeze %220 : memref<1x1x!tpu.dma_semaphore, #tpu.memory_space<semaphore_mem>> -> memref<!tpu.dma_semaphore, #tpu.memory_space<semaphore_mem>>
      tpu.enqueue_dma source(%217 : memref<32x128xf32, #tpu.memory_space<any>>) target(%219 : memref<32x128xf32, #tpu.memory_space<vmem>>) target_semaphore(%221 : memref<!tpu.dma_semaphore, #tpu.memory_space<semaphore_mem>>)
      %c8_i32_194 = arith.constant 8 : i32
      %222 = arith.addi %0, %c8_i32_194 : i32
      %c19_i32_195 = arith.constant 19 : i32
      %223 = arith.minsi %222, %c19_i32_195 : i32
      %224 = arith.index_cast %223 : i32 to index
      %225 = memref.load %arg2[%224] : memref<20xi32, #tpu.memory_space<smem>>
      %c0_i32_196 = arith.constant 0 : i32
      %c8_i32_197 = arith.constant 8 : i32
      %c0_i32_198 = arith.constant 0 : i32
      %c8_i32_199 = arith.constant 8 : i32
      %c0_i32_200 = arith.constant 0 : i32
      %c0_i32_201 = arith.constant 0 : i32
      %226 = tpu.memref_slice %arg5[%225, %c0_i32_200, %c0_i32_201] : memref<20x96x128xf32, #tpu.memory_space<any>> -> memref<1x32x128xf32, #tpu.memory_space<any>>
      %227 = tpu.memref_squeeze %226 : memref<1x32x128xf32, #tpu.memory_space<any>> -> memref<32x128xf32, #tpu.memory_space<any>>
      %c0_i32_202 = arith.constant 0 : i32
      %c0_i32_203 = arith.constant 0 : i32
      %228 = tpu.memref_slice %arg7[%c0_i32_196, %c8_i32_197, %c0_i32_202, %c0_i32_203] : memref<2x16x32x128xf32, #tpu.memory_space<vmem>> -> memref<1x1x32x128xf32, #tpu.memory_space<vmem>>
      %229 = tpu.memref_squeeze %228 : memref<1x1x32x128xf32, #tpu.memory_space<vmem>> -> memref<32x128xf32, #tpu.memory_space<vmem>>
      %230 = tpu.memref_slice %arg8[%c0_i32_198, %c8_i32_199] : memref<2x16x!tpu.dma_semaphore, #tpu.memory_space<semaphore_mem>> -> memref<1x1x!tpu.dma_semaphore, #tpu.memory_space<semaphore_mem>>
      %231 = tpu.memref_squeeze %230 : memref<1x1x!tpu.dma_semaphore, #tpu.memory_space<semaphore_mem>> -> memref<!tpu.dma_semaphore, #tpu.memory_space<semaphore_mem>>
      tpu.enqueue_dma source(%227 : memref<32x128xf32, #tpu.memory_space<any>>) target(%229 : memref<32x128xf32, #tpu.memory_space<vmem>>) target_semaphore(%231 : memref<!tpu.dma_semaphore, #tpu.memory_space<semaphore_mem>>)
      %c9_i32_204 = arith.constant 9 : i32
      %232 = arith.addi %0, %c9_i32_204 : i32
      %c19_i32_205 = arith.constant 19 : i32
      %233 = arith.minsi %232, %c19_i32_205 : i32
      %234 = arith.index_cast %233 : i32 to index
      %235 = memref.load %arg2[%234] : memref<20xi32, #tpu.memory_space<smem>>
      %c0_i32_206 = arith.constant 0 : i32
      %c9_i32_207 = arith.constant 9 : i32
      %c0_i32_208 = arith.constant 0 : i32
      %c9_i32_209 = arith.constant 9 : i32
      %c0_i32_210 = arith.constant 0 : i32
      %c0_i32_211 = arith.constant 0 : i32
      %236 = tpu.memref_slice %arg5[%235, %c0_i32_210, %c0_i32_211] : memref<20x96x128xf32, #tpu.memory_space<any>> -> memref<1x32x128xf32, #tpu.memory_space<any>>
      %237 = tpu.memref_squeeze %236 : memref<1x32x128xf32, #tpu.memory_space<any>> -> memref<32x128xf32, #tpu.memory_space<any>>
      %c0_i32_212 = arith.constant 0 : i32
      %c0_i32_213 = arith.constant 0 : i32
      %238 = tpu.memref_slice %arg7[%c0_i32_206, %c9_i32_207, %c0_i32_212, %c0_i32_213] : memref<2x16x32x128xf32, #tpu.memory_space<vmem>> -> memref<1x1x32x128xf32, #tpu.memory_space<vmem>>
      %239 = tpu.memref_squeeze %238 : memref<1x1x32x128xf32, #tpu.memory_space<vmem>> -> memref<32x128xf32, #tpu.memory_space<vmem>>
      %240 = tpu.memref_slice %arg8[%c0_i32_208, %c9_i32_209] : memref<2x16x!tpu.dma_semaphore, #tpu.memory_space<semaphore_mem>> -> memref<1x1x!tpu.dma_semaphore, #tpu.memory_space<semaphore_mem>>
      %241 = tpu.memref_squeeze %240 : memref<1x1x!tpu.dma_semaphore, #tpu.memory_space<semaphore_mem>> -> memref<!tpu.dma_semaphore, #tpu.memory_space<semaphore_mem>>
      tpu.enqueue_dma source(%237 : memref<32x128xf32, #tpu.memory_space<any>>) target(%239 : memref<32x128xf32, #tpu.memory_space<vmem>>) target_semaphore(%241 : memref<!tpu.dma_semaphore, #tpu.memory_space<semaphore_mem>>)
      %c10_i32_214 = arith.constant 10 : i32
      %242 = arith.addi %0, %c10_i32_214 : i32
      %c19_i32_215 = arith.constant 19 : i32
      %243 = arith.minsi %242, %c19_i32_215 : i32
      %244 = arith.index_cast %243 : i32 to index
      %245 = memref.load %arg2[%244] : memref<20xi32, #tpu.memory_space<smem>>
      %c0_i32_216 = arith.constant 0 : i32
      %c10_i32_217 = arith.constant 10 : i32
      %c0_i32_218 = arith.constant 0 : i32
      %c10_i32_219 = arith.constant 10 : i32
      %c0_i32_220 = arith.constant 0 : i32
      %c0_i32_221 = arith.constant 0 : i32
      %246 = tpu.memref_slice %arg5[%245, %c0_i32_220, %c0_i32_221] : memref<20x96x128xf32, #tpu.memory_space<any>> -> memref<1x32x128xf32, #tpu.memory_space<any>>
      %247 = tpu.memref_squeeze %246 : memref<1x32x128xf32, #tpu.memory_space<any>> -> memref<32x128xf32, #tpu.memory_space<any>>
      %c0_i32_222 = arith.constant 0 : i32
      %c0_i32_223 = arith.constant 0 : i32
      %248 = tpu.memref_slice %arg7[%c0_i32_216, %c10_i32_217, %c0_i32_222, %c0_i32_223] : memref<2x16x32x128xf32, #tpu.memory_space<vmem>> -> memref<1x1x32x128xf32, #tpu.memory_space<vmem>>
      %249 = tpu.memref_squeeze %248 : memref<1x1x32x128xf32, #tpu.memory_space<vmem>> -> memref<32x128xf32, #tpu.memory_space<vmem>>
      %250 = tpu.memref_slice %arg8[%c0_i32_218, %c10_i32_219] : memref<2x16x!tpu.dma_semaphore, #tpu.memory_space<semaphore_mem>> -> memref<1x1x!tpu.dma_semaphore, #tpu.memory_space<semaphore_mem>>
      %251 = tpu.memref_squeeze %250 : memref<1x1x!tpu.dma_semaphore, #tpu.memory_space<semaphore_mem>> -> memref<!tpu.dma_semaphore, #tpu.memory_space<semaphore_mem>>
      tpu.enqueue_dma source(%247 : memref<32x128xf32, #tpu.memory_space<any>>) target(%249 : memref<32x128xf32, #tpu.memory_space<vmem>>) target_semaphore(%251 : memref<!tpu.dma_semaphore, #tpu.memory_space<semaphore_mem>>)
      %c11_i32_224 = arith.constant 11 : i32
      %252 = arith.addi %0, %c11_i32_224 : i32
      %c19_i32_225 = arith.constant 19 : i32
      %253 = arith.minsi %252, %c19_i32_225 : i32
      %254 = arith.index_cast %253 : i32 to index
      %255 = memref.load %arg2[%254] : memref<20xi32, #tpu.memory_space<smem>>
      %c0_i32_226 = arith.constant 0 : i32
      %c11_i32_227 = arith.constant 11 : i32
      %c0_i32_228 = arith.constant 0 : i32
      %c11_i32_229 = arith.constant 11 : i32
      %c0_i32_230 = arith.constant 0 : i32
      %c0_i32_231 = arith.constant 0 : i32
      %256 = tpu.memref_slice %arg5[%255, %c0_i32_230, %c0_i32_231] : memref<20x96x128xf32, #tpu.memory_space<any>> -> memref<1x32x128xf32, #tpu.memory_space<any>>
      %257 = tpu.memref_squeeze %256 : memref<1x32x128xf32, #tpu.memory_space<any>> -> memref<32x128xf32, #tpu.memory_space<any>>
      %c0_i32_232 = arith.constant 0 : i32
      %c0_i32_233 = arith.constant 0 : i32
      %258 = tpu.memref_slice %arg7[%c0_i32_226, %c11_i32_227, %c0_i32_232, %c0_i32_233] : memref<2x16x32x128xf32, #tpu.memory_space<vmem>> -> memref<1x1x32x128xf32, #tpu.memory_space<vmem>>
      %259 = tpu.memref_squeeze %258 : memref<1x1x32x128xf32, #tpu.memory_space<vmem>> -> memref<32x128xf32, #tpu.memory_space<vmem>>
      %260 = tpu.memref_slice %arg8[%c0_i32_228, %c11_i32_229] : memref<2x16x!tpu.dma_semaphore, #tpu.memory_space<semaphore_mem>> -> memref<1x1x!tpu.dma_semaphore, #tpu.memory_space<semaphore_mem>>
      %261 = tpu.memref_squeeze %260 : memref<1x1x!tpu.dma_semaphore, #tpu.memory_space<semaphore_mem>> -> memref<!tpu.dma_semaphore, #tpu.memory_space<semaphore_mem>>
      tpu.enqueue_dma source(%257 : memref<32x128xf32, #tpu.memory_space<any>>) target(%259 : memref<32x128xf32, #tpu.memory_space<vmem>>) target_semaphore(%261 : memref<!tpu.dma_semaphore, #tpu.memory_space<semaphore_mem>>)
      %c12_i32_234 = arith.constant 12 : i32
      %262 = arith.addi %0, %c12_i32_234 : i32
      %c19_i32_235 = arith.constant 19 : i32
      %263 = arith.minsi %262, %c19_i32_235 : i32
      %264 = arith.index_cast %263 : i32 to index
      %265 = memref.load %arg2[%264] : memref<20xi32, #tpu.memory_space<smem>>
      %c0_i32_236 = arith.constant 0 : i32
      %c12_i32_237 = arith.constant 12 : i32
      %c0_i32_238 = arith.constant 0 : i32
      %c12_i32_239 = arith.constant 12 : i32
      %c0_i32_240 = arith.constant 0 : i32
      %c0_i32_241 = arith.constant 0 : i32
      %266 = tpu.memref_slice %arg5[%265, %c0_i32_240, %c0_i32_241] : memref<20x96x128xf32, #tpu.memory_space<any>> -> memref<1x32x128xf32, #tpu.memory_space<any>>
      %267 = tpu.memref_squeeze %266 : memref<1x32x128xf32, #tpu.memory_space<any>> -> memref<32x128xf32, #tpu.memory_space<any>>
      %c0_i32_242 = arith.constant 0 : i32
      %c0_i32_243 = arith.constant 0 : i32
      %268 = tpu.memref_slice %arg7[%c0_i32_236, %c12_i32_237, %c0_i32_242, %c0_i32_243] : memref<2x16x32x128xf32, #tpu.memory_space<vmem>> -> memref<1x1x32x128xf32, #tpu.memory_space<vmem>>
      %269 = tpu.memref_squeeze %268 : memref<1x1x32x128xf32, #tpu.memory_space<vmem>> -> memref<32x128xf32, #tpu.memory_space<vmem>>
      %270 = tpu.memref_slice %arg8[%c0_i32_238, %c12_i32_239] : memref<2x16x!tpu.dma_semaphore, #tpu.memory_space<semaphore_mem>> -> memref<1x1x!tpu.dma_semaphore, #tpu.memory_space<semaphore_mem>>
      %271 = tpu.memref_squeeze %270 : memref<1x1x!tpu.dma_semaphore, #tpu.memory_space<semaphore_mem>> -> memref<!tpu.dma_semaphore, #tpu.memory_space<semaphore_mem>>
      tpu.enqueue_dma source(%267 : memref<32x128xf32, #tpu.memory_space<any>>) target(%269 : memref<32x128xf32, #tpu.memory_space<vmem>>) target_semaphore(%271 : memref<!tpu.dma_semaphore, #tpu.memory_space<semaphore_mem>>)
      %c13_i32_244 = arith.constant 13 : i32
      %272 = arith.addi %0, %c13_i32_244 : i32
      %c19_i32_245 = arith.constant 19 : i32
      %273 = arith.minsi %272, %c19_i32_245 : i32
      %274 = arith.index_cast %273 : i32 to index
      %275 = memref.load %arg2[%274] : memref<20xi32, #tpu.memory_space<smem>>
      %c0_i32_246 = arith.constant 0 : i32
      %c13_i32_247 = arith.constant 13 : i32
      %c0_i32_248 = arith.constant 0 : i32
      %c13_i32_249 = arith.constant 13 : i32
      %c0_i32_250 = arith.constant 0 : i32
      %c0_i32_251 = arith.constant 0 : i32
      %276 = tpu.memref_slice %arg5[%275, %c0_i32_250, %c0_i32_251] : memref<20x96x128xf32, #tpu.memory_space<any>> -> memref<1x32x128xf32, #tpu.memory_space<any>>
      %277 = tpu.memref_squeeze %276 : memref<1x32x128xf32, #tpu.memory_space<any>> -> memref<32x128xf32, #tpu.memory_space<any>>
      %c0_i32_252 = arith.constant 0 : i32
      %c0_i32_253 = arith.constant 0 : i32
      %278 = tpu.memref_slice %arg7[%c0_i32_246, %c13_i32_247, %c0_i32_252, %c0_i32_253] : memref<2x16x32x128xf32, #tpu.memory_space<vmem>> -> memref<1x1x32x128xf32, #tpu.memory_space<vmem>>
      %279 = tpu.memref_squeeze %278 : memref<1x1x32x128xf32, #tpu.memory_space<vmem>> -> memref<32x128xf32, #tpu.memory_space<vmem>>
      %280 = tpu.memref_slice %arg8[%c0_i32_248, %c13_i32_249] : memref<2x16x!tpu.dma_semaphore, #tpu.memory_space<semaphore_mem>> -> memref<1x1x!tpu.dma_semaphore, #tpu.memory_space<semaphore_mem>>
      %281 = tpu.memref_squeeze %280 : memref<1x1x!tpu.dma_semaphore, #tpu.memory_space<semaphore_mem>> -> memref<!tpu.dma_semaphore, #tpu.memory_space<semaphore_mem>>
      tpu.enqueue_dma source(%277 : memref<32x128xf32, #tpu.memory_space<any>>) target(%279 : memref<32x128xf32, #tpu.memory_space<vmem>>) target_semaphore(%281 : memref<!tpu.dma_semaphore, #tpu.memory_space<semaphore_mem>>)
      %c14_i32_254 = arith.constant 14 : i32
      %282 = arith.addi %0, %c14_i32_254 : i32
      %c19_i32_255 = arith.constant 19 : i32
      %283 = arith.minsi %282, %c19_i32_255 : i32
      %284 = arith.index_cast %283 : i32 to index
      %285 = memref.load %arg2[%284] : memref<20xi32, #tpu.memory_space<smem>>
      %c0_i32_256 = arith.constant 0 : i32
      %c14_i32_257 = arith.constant 14 : i32
      %c0_i32_258 = arith.constant 0 : i32
      %c14_i32_259 = arith.constant 14 : i32
      %c0_i32_260 = arith.constant 0 : i32
      %c0_i32_261 = arith.constant 0 : i32
      %286 = tpu.memref_slice %arg5[%285, %c0_i32_260, %c0_i32_261] : memref<20x96x128xf32, #tpu.memory_space<any>> -> memref<1x32x128xf32, #tpu.memory_space<any>>
      %287 = tpu.memref_squeeze %286 : memref<1x32x128xf32, #tpu.memory_space<any>> -> memref<32x128xf32, #tpu.memory_space<any>>
      %c0_i32_262 = arith.constant 0 : i32
      %c0_i32_263 = arith.constant 0 : i32
      %288 = tpu.memref_slice %arg7[%c0_i32_256, %c14_i32_257, %c0_i32_262, %c0_i32_263] : memref<2x16x32x128xf32, #tpu.memory_space<vmem>> -> memref<1x1x32x128xf32, #tpu.memory_space<vmem>>
      %289 = tpu.memref_squeeze %288 : memref<1x1x32x128xf32, #tpu.memory_space<vmem>> -> memref<32x128xf32, #tpu.memory_space<vmem>>
      %290 = tpu.memref_slice %arg8[%c0_i32_258, %c14_i32_259] : memref<2x16x!tpu.dma_semaphore, #tpu.memory_space<semaphore_mem>> -> memref<1x1x!tpu.dma_semaphore, #tpu.memory_space<semaphore_mem>>
      %291 = tpu.memref_squeeze %290 : memref<1x1x!tpu.dma_semaphore, #tpu.memory_space<semaphore_mem>> -> memref<!tpu.dma_semaphore, #tpu.memory_space<semaphore_mem>>
      tpu.enqueue_dma source(%287 : memref<32x128xf32, #tpu.memory_space<any>>) target(%289 : memref<32x128xf32, #tpu.memory_space<vmem>>) target_semaphore(%291 : memref<!tpu.dma_semaphore, #tpu.memory_space<semaphore_mem>>)
      %c15_i32_264 = arith.constant 15 : i32
      %292 = arith.addi %0, %c15_i32_264 : i32
      %c19_i32_265 = arith.constant 19 : i32
      %293 = arith.minsi %292, %c19_i32_265 : i32
      %294 = arith.index_cast %293 : i32 to index
      %295 = memref.load %arg2[%294] : memref<20xi32, #tpu.memory_space<smem>>
      %c0_i32_266 = arith.constant 0 : i32
      %c15_i32_267 = arith.constant 15 : i32
      %c0_i32_268 = arith.constant 0 : i32
      %c15_i32_269 = arith.constant 15 : i32
      %c0_i32_270 = arith.constant 0 : i32
      %c0_i32_271 = arith.constant 0 : i32
      %296 = tpu.memref_slice %arg5[%295, %c0_i32_270, %c0_i32_271] : memref<20x96x128xf32, #tpu.memory_space<any>> -> memref<1x32x128xf32, #tpu.memory_space<any>>
      %297 = tpu.memref_squeeze %296 : memref<1x32x128xf32, #tpu.memory_space<any>> -> memref<32x128xf32, #tpu.memory_space<any>>
      %c0_i32_272 = arith.constant 0 : i32
      %c0_i32_273 = arith.constant 0 : i32
      %298 = tpu.memref_slice %arg7[%c0_i32_266, %c15_i32_267, %c0_i32_272, %c0_i32_273] : memref<2x16x32x128xf32, #tpu.memory_space<vmem>> -> memref<1x1x32x128xf32, #tpu.memory_space<vmem>>
      %299 = tpu.memref_squeeze %298 : memref<1x1x32x128xf32, #tpu.memory_space<vmem>> -> memref<32x128xf32, #tpu.memory_space<vmem>>
      %300 = tpu.memref_slice %arg8[%c0_i32_268, %c15_i32_269] : memref<2x16x!tpu.dma_semaphore, #tpu.memory_space<semaphore_mem>> -> memref<1x1x!tpu.dma_semaphore, #tpu.memory_space<semaphore_mem>>
      %301 = tpu.memref_squeeze %300 : memref<1x1x!tpu.dma_semaphore, #tpu.memory_space<semaphore_mem>> -> memref<!tpu.dma_semaphore, #tpu.memory_space<semaphore_mem>>
      tpu.enqueue_dma source(%297 : memref<32x128xf32, #tpu.memory_space<any>>) target(%299 : memref<32x128xf32, #tpu.memory_space<vmem>>) target_semaphore(%301 : memref<!tpu.dma_semaphore, #tpu.memory_space<semaphore_mem>>)
    } else {
    }
    %c1_i32 = arith.constant 1 : i32
    %4 = arith.addi %arg1, %c1_i32 : i32
    %c3_i32 = arith.constant 3 : i32
    %5 = arith.cmpi slt, %4, %c3_i32 : i32
    %6 = arith.extui %5 : i1 to i32
    %c0_i32_1 = arith.constant 0 : i32
    %7 = arith.cmpi ne, %6, %c0_i32_1 : i32
    scf.if %7 {
      %c1_i32_115 = arith.constant 1 : i32
      %142 = arith.addi %arg1, %c1_i32_115 : i32
      %c1_i32_116 = arith.constant 1 : i32
      %143 = arith.addi %arg1, %c1_i32_116 : i32
      %c2_i32_117 = arith.constant 2 : i32
      %c0_i32_118 = arith.constant 0 : i32
      %144 = arith.cmpi eq, %c2_i32_117, %c0_i32_118 : i32
      %c1_i32_119 = arith.constant 1 : i32
      %145 = arith.select %144, %c1_i32_119, %c2_i32_117 : i32
      %146 = arith.remsi %143, %145 : i32
      %c0_i32_120 = arith.constant 0 : i32
      %147 = arith.cmpi ne, %146, %c0_i32_120 : i32
      %c0_i32_121 = arith.constant 0 : i32
      %148 = arith.cmpi slt, %146, %c0_i32_121 : i32
      %c0_i32_122 = arith.constant 0 : i32
      %149 = arith.cmpi slt, %145, %c0_i32_122 : i32
      %150 = arith.xori %148, %149 : i1
      %151 = arith.andi %150, %147 : i1
      %152 = arith.addi %146, %145 : i32
      %153 = arith.select %151, %152, %146 : i32
      %c32_i32_123 = arith.constant 32 : i32
      %154 = arith.muli %142, %c32_i32_123 : i32
      %c0_i32_124 = arith.constant 0 : i32
      %155 = arith.addi %0, %c0_i32_124 : i32
      %c19_i32 = arith.constant 19 : i32
      %156 = arith.minsi %155, %c19_i32 : i32
      %157 = arith.index_cast %156 : i32 to index
      %158 = memref.load %arg2[%157] : memref<20xi32, #tpu.memory_space<smem>>
      %c0_i32_125 = arith.constant 0 : i32
      %c0_i32_126 = arith.constant 0 : i32
      %c0_i32_127 = arith.constant 0 : i32
      %159 = tpu.memref_slice %arg5[%158, %154, %c0_i32_127] : memref<20x96x128xf32, #tpu.memory_space<any>> -> memref<1x32x128xf32, #tpu.memory_space<any>>
      %160 = tpu.memref_squeeze %159 : memref<1x32x128xf32, #tpu.memory_space<any>> -> memref<32x128xf32, #tpu.memory_space<any>>
      %c0_i32_128 = arith.constant 0 : i32
      %c0_i32_129 = arith.constant 0 : i32
      %161 = tpu.memref_slice %arg7[%153, %c0_i32_125, %c0_i32_128, %c0_i32_129] : memref<2x16x32x128xf32, #tpu.memory_space<vmem>> -> memref<1x1x32x128xf32, #tpu.memory_space<vmem>>
      %162 = tpu.memref_squeeze %161 : memref<1x1x32x128xf32, #tpu.memory_space<vmem>> -> memref<32x128xf32, #tpu.memory_space<vmem>>
      %163 = tpu.memref_slice %arg8[%153, %c0_i32_126] : memref<2x16x!tpu.dma_semaphore, #tpu.memory_space<semaphore_mem>> -> memref<1x1x!tpu.dma_semaphore, #tpu.memory_space<semaphore_mem>>
      %164 = tpu.memref_squeeze %163 : memref<1x1x!tpu.dma_semaphore, #tpu.memory_space<semaphore_mem>> -> memref<!tpu.dma_semaphore, #tpu.memory_space<semaphore_mem>>
      tpu.enqueue_dma source(%160 : memref<32x128xf32, #tpu.memory_space<any>>) target(%162 : memref<32x128xf32, #tpu.memory_space<vmem>>) target_semaphore(%164 : memref<!tpu.dma_semaphore, #tpu.memory_space<semaphore_mem>>)
      %c1_i32_130 = arith.constant 1 : i32
      %165 = arith.addi %0, %c1_i32_130 : i32
      %c19_i32_131 = arith.constant 19 : i32
      %166 = arith.minsi %165, %c19_i32_131 : i32
      %167 = arith.index_cast %166 : i32 to index
      %168 = memref.load %arg2[%167] : memref<20xi32, #tpu.memory_space<smem>>
      %c1_i32_132 = arith.constant 1 : i32
      %c1_i32_133 = arith.constant 1 : i32
      %c0_i32_134 = arith.constant 0 : i32
      %169 = tpu.memref_slice %arg5[%168, %154, %c0_i32_134] : memref<20x96x128xf32, #tpu.memory_space<any>> -> memref<1x32x128xf32, #tpu.memory_space<any>>
      %170 = tpu.memref_squeeze %169 : memref<1x32x128xf32, #tpu.memory_space<any>> -> memref<32x128xf32, #tpu.memory_space<any>>
      %c0_i32_135 = arith.constant 0 : i32
      %c0_i32_136 = arith.constant 0 : i32
      %171 = tpu.memref_slice %arg7[%153, %c1_i32_132, %c0_i32_135, %c0_i32_136] : memref<2x16x32x128xf32, #tpu.memory_space<vmem>> -> memref<1x1x32x128xf32, #tpu.memory_space<vmem>>
      %172 = tpu.memref_squeeze %171 : memref<1x1x32x128xf32, #tpu.memory_space<vmem>> -> memref<32x128xf32, #tpu.memory_space<vmem>>
      %173 = tpu.memref_slice %arg8[%153, %c1_i32_133] : memref<2x16x!tpu.dma_semaphore, #tpu.memory_space<semaphore_mem>> -> memref<1x1x!tpu.dma_semaphore, #tpu.memory_space<semaphore_mem>>
      %174 = tpu.memref_squeeze %173 : memref<1x1x!tpu.dma_semaphore, #tpu.memory_space<semaphore_mem>> -> memref<!tpu.dma_semaphore, #tpu.memory_space<semaphore_mem>>
      tpu.enqueue_dma source(%170 : memref<32x128xf32, #tpu.memory_space<any>>) target(%172 : memref<32x128xf32, #tpu.memory_space<vmem>>) target_semaphore(%174 : memref<!tpu.dma_semaphore, #tpu.memory_space<semaphore_mem>>)
      %c2_i32_137 = arith.constant 2 : i32
      %175 = arith.addi %0, %c2_i32_137 : i32
      %c19_i32_138 = arith.constant 19 : i32
      %176 = arith.minsi %175, %c19_i32_138 : i32
      %177 = arith.index_cast %176 : i32 to index
      %178 = memref.load %arg2[%177] : memref<20xi32, #tpu.memory_space<smem>>
      %c2_i32_139 = arith.constant 2 : i32
      %c2_i32_140 = arith.constant 2 : i32
      %c0_i32_141 = arith.constant 0 : i32
      %179 = tpu.memref_slice %arg5[%178, %154, %c0_i32_141] : memref<20x96x128xf32, #tpu.memory_space<any>> -> memref<1x32x128xf32, #tpu.memory_space<any>>
      %180 = tpu.memref_squeeze %179 : memref<1x32x128xf32, #tpu.memory_space<any>> -> memref<32x128xf32, #tpu.memory_space<any>>
      %c0_i32_142 = arith.constant 0 : i32
      %c0_i32_143 = arith.constant 0 : i32
      %181 = tpu.memref_slice %arg7[%153, %c2_i32_139, %c0_i32_142, %c0_i32_143] : memref<2x16x32x128xf32, #tpu.memory_space<vmem>> -> memref<1x1x32x128xf32, #tpu.memory_space<vmem>>
      %182 = tpu.memref_squeeze %181 : memref<1x1x32x128xf32, #tpu.memory_space<vmem>> -> memref<32x128xf32, #tpu.memory_space<vmem>>
      %183 = tpu.memref_slice %arg8[%153, %c2_i32_140] : memref<2x16x!tpu.dma_semaphore, #tpu.memory_space<semaphore_mem>> -> memref<1x1x!tpu.dma_semaphore, #tpu.memory_space<semaphore_mem>>
      %184 = tpu.memref_squeeze %183 : memref<1x1x!tpu.dma_semaphore, #tpu.memory_space<semaphore_mem>> -> memref<!tpu.dma_semaphore, #tpu.memory_space<semaphore_mem>>
      tpu.enqueue_dma source(%180 : memref<32x128xf32, #tpu.memory_space<any>>) target(%182 : memref<32x128xf32, #tpu.memory_space<vmem>>) target_semaphore(%184 : memref<!tpu.dma_semaphore, #tpu.memory_space<semaphore_mem>>)
      %c3_i32_144 = arith.constant 3 : i32
      %185 = arith.addi %0, %c3_i32_144 : i32
      %c19_i32_145 = arith.constant 19 : i32
      %186 = arith.minsi %185, %c19_i32_145 : i32
      %187 = arith.index_cast %186 : i32 to index
      %188 = memref.load %arg2[%187] : memref<20xi32, #tpu.memory_space<smem>>
      %c3_i32_146 = arith.constant 3 : i32
      %c3_i32_147 = arith.constant 3 : i32
      %c0_i32_148 = arith.constant 0 : i32
      %189 = tpu.memref_slice %arg5[%188, %154, %c0_i32_148] : memref<20x96x128xf32, #tpu.memory_space<any>> -> memref<1x32x128xf32, #tpu.memory_space<any>>
      %190 = tpu.memref_squeeze %189 : memref<1x32x128xf32, #tpu.memory_space<any>> -> memref<32x128xf32, #tpu.memory_space<any>>
      %c0_i32_149 = arith.constant 0 : i32
      %c0_i32_150 = arith.constant 0 : i32
      %191 = tpu.memref_slice %arg7[%153, %c3_i32_146, %c0_i32_149, %c0_i32_150] : memref<2x16x32x128xf32, #tpu.memory_space<vmem>> -> memref<1x1x32x128xf32, #tpu.memory_space<vmem>>
      %192 = tpu.memref_squeeze %191 : memref<1x1x32x128xf32, #tpu.memory_space<vmem>> -> memref<32x128xf32, #tpu.memory_space<vmem>>
      %193 = tpu.memref_slice %arg8[%153, %c3_i32_147] : memref<2x16x!tpu.dma_semaphore, #tpu.memory_space<semaphore_mem>> -> memref<1x1x!tpu.dma_semaphore, #tpu.memory_space<semaphore_mem>>
      %194 = tpu.memref_squeeze %193 : memref<1x1x!tpu.dma_semaphore, #tpu.memory_space<semaphore_mem>> -> memref<!tpu.dma_semaphore, #tpu.memory_space<semaphore_mem>>
      tpu.enqueue_dma source(%190 : memref<32x128xf32, #tpu.memory_space<any>>) target(%192 : memref<32x128xf32, #tpu.memory_space<vmem>>) target_semaphore(%194 : memref<!tpu.dma_semaphore, #tpu.memory_space<semaphore_mem>>)
      %c4_i32_151 = arith.constant 4 : i32
      %195 = arith.addi %0, %c4_i32_151 : i32
      %c19_i32_152 = arith.constant 19 : i32
      %196 = arith.minsi %195, %c19_i32_152 : i32
      %197 = arith.index_cast %196 : i32 to index
      %198 = memref.load %arg2[%197] : memref<20xi32, #tpu.memory_space<smem>>
      %c4_i32_153 = arith.constant 4 : i32
      %c4_i32_154 = arith.constant 4 : i32
      %c0_i32_155 = arith.constant 0 : i32
      %199 = tpu.memref_slice %arg5[%198, %154, %c0_i32_155] : memref<20x96x128xf32, #tpu.memory_space<any>> -> memref<1x32x128xf32, #tpu.memory_space<any>>
      %200 = tpu.memref_squeeze %199 : memref<1x32x128xf32, #tpu.memory_space<any>> -> memref<32x128xf32, #tpu.memory_space<any>>
      %c0_i32_156 = arith.constant 0 : i32
      %c0_i32_157 = arith.constant 0 : i32
      %201 = tpu.memref_slice %arg7[%153, %c4_i32_153, %c0_i32_156, %c0_i32_157] : memref<2x16x32x128xf32, #tpu.memory_space<vmem>> -> memref<1x1x32x128xf32, #tpu.memory_space<vmem>>
      %202 = tpu.memref_squeeze %201 : memref<1x1x32x128xf32, #tpu.memory_space<vmem>> -> memref<32x128xf32, #tpu.memory_space<vmem>>
      %203 = tpu.memref_slice %arg8[%153, %c4_i32_154] : memref<2x16x!tpu.dma_semaphore, #tpu.memory_space<semaphore_mem>> -> memref<1x1x!tpu.dma_semaphore, #tpu.memory_space<semaphore_mem>>
      %204 = tpu.memref_squeeze %203 : memref<1x1x!tpu.dma_semaphore, #tpu.memory_space<semaphore_mem>> -> memref<!tpu.dma_semaphore, #tpu.memory_space<semaphore_mem>>
      tpu.enqueue_dma source(%200 : memref<32x128xf32, #tpu.memory_space<any>>) target(%202 : memref<32x128xf32, #tpu.memory_space<vmem>>) target_semaphore(%204 : memref<!tpu.dma_semaphore, #tpu.memory_space<semaphore_mem>>)
      %c5_i32_158 = arith.constant 5 : i32
      %205 = arith.addi %0, %c5_i32_158 : i32
      %c19_i32_159 = arith.constant 19 : i32
      %206 = arith.minsi %205, %c19_i32_159 : i32
      %207 = arith.index_cast %206 : i32 to index
      %208 = memref.load %arg2[%207] : memref<20xi32, #tpu.memory_space<smem>>
      %c5_i32_160 = arith.constant 5 : i32
      %c5_i32_161 = arith.constant 5 : i32
      %c0_i32_162 = arith.constant 0 : i32
      %209 = tpu.memref_slice %arg5[%208, %154, %c0_i32_162] : memref<20x96x128xf32, #tpu.memory_space<any>> -> memref<1x32x128xf32, #tpu.memory_space<any>>
      %210 = tpu.memref_squeeze %209 : memref<1x32x128xf32, #tpu.memory_space<any>> -> memref<32x128xf32, #tpu.memory_space<any>>
      %c0_i32_163 = arith.constant 0 : i32
      %c0_i32_164 = arith.constant 0 : i32
      %211 = tpu.memref_slice %arg7[%153, %c5_i32_160, %c0_i32_163, %c0_i32_164] : memref<2x16x32x128xf32, #tpu.memory_space<vmem>> -> memref<1x1x32x128xf32, #tpu.memory_space<vmem>>
      %212 = tpu.memref_squeeze %211 : memref<1x1x32x128xf32, #tpu.memory_space<vmem>> -> memref<32x128xf32, #tpu.memory_space<vmem>>
      %213 = tpu.memref_slice %arg8[%153, %c5_i32_161] : memref<2x16x!tpu.dma_semaphore, #tpu.memory_space<semaphore_mem>> -> memref<1x1x!tpu.dma_semaphore, #tpu.memory_space<semaphore_mem>>
      %214 = tpu.memref_squeeze %213 : memref<1x1x!tpu.dma_semaphore, #tpu.memory_space<semaphore_mem>> -> memref<!tpu.dma_semaphore, #tpu.memory_space<semaphore_mem>>
      tpu.enqueue_dma source(%210 : memref<32x128xf32, #tpu.memory_space<any>>) target(%212 : memref<32x128xf32, #tpu.memory_space<vmem>>) target_semaphore(%214 : memref<!tpu.dma_semaphore, #tpu.memory_space<semaphore_mem>>)
      %c6_i32_165 = arith.constant 6 : i32
      %215 = arith.addi %0, %c6_i32_165 : i32
      %c19_i32_166 = arith.constant 19 : i32
      %216 = arith.minsi %215, %c19_i32_166 : i32
      %217 = arith.index_cast %216 : i32 to index
      %218 = memref.load %arg2[%217] : memref<20xi32, #tpu.memory_space<smem>>
      %c6_i32_167 = arith.constant 6 : i32
      %c6_i32_168 = arith.constant 6 : i32
      %c0_i32_169 = arith.constant 0 : i32
      %219 = tpu.memref_slice %arg5[%218, %154, %c0_i32_169] : memref<20x96x128xf32, #tpu.memory_space<any>> -> memref<1x32x128xf32, #tpu.memory_space<any>>
      %220 = tpu.memref_squeeze %219 : memref<1x32x128xf32, #tpu.memory_space<any>> -> memref<32x128xf32, #tpu.memory_space<any>>
      %c0_i32_170 = arith.constant 0 : i32
      %c0_i32_171 = arith.constant 0 : i32
      %221 = tpu.memref_slice %arg7[%153, %c6_i32_167, %c0_i32_170, %c0_i32_171] : memref<2x16x32x128xf32, #tpu.memory_space<vmem>> -> memref<1x1x32x128xf32, #tpu.memory_space<vmem>>
      %222 = tpu.memref_squeeze %221 : memref<1x1x32x128xf32, #tpu.memory_space<vmem>> -> memref<32x128xf32, #tpu.memory_space<vmem>>
      %223 = tpu.memref_slice %arg8[%153, %c6_i32_168] : memref<2x16x!tpu.dma_semaphore, #tpu.memory_space<semaphore_mem>> -> memref<1x1x!tpu.dma_semaphore, #tpu.memory_space<semaphore_mem>>
      %224 = tpu.memref_squeeze %223 : memref<1x1x!tpu.dma_semaphore, #tpu.memory_space<semaphore_mem>> -> memref<!tpu.dma_semaphore, #tpu.memory_space<semaphore_mem>>
      tpu.enqueue_dma source(%220 : memref<32x128xf32, #tpu.memory_space<any>>) target(%222 : memref<32x128xf32, #tpu.memory_space<vmem>>) target_semaphore(%224 : memref<!tpu.dma_semaphore, #tpu.memory_space<semaphore_mem>>)
      %c7_i32_172 = arith.constant 7 : i32
      %225 = arith.addi %0, %c7_i32_172 : i32
      %c19_i32_173 = arith.constant 19 : i32
      %226 = arith.minsi %225, %c19_i32_173 : i32
      %227 = arith.index_cast %226 : i32 to index
      %228 = memref.load %arg2[%227] : memref<20xi32, #tpu.memory_space<smem>>
      %c7_i32_174 = arith.constant 7 : i32
      %c7_i32_175 = arith.constant 7 : i32
      %c0_i32_176 = arith.constant 0 : i32
      %229 = tpu.memref_slice %arg5[%228, %154, %c0_i32_176] : memref<20x96x128xf32, #tpu.memory_space<any>> -> memref<1x32x128xf32, #tpu.memory_space<any>>
      %230 = tpu.memref_squeeze %229 : memref<1x32x128xf32, #tpu.memory_space<any>> -> memref<32x128xf32, #tpu.memory_space<any>>
      %c0_i32_177 = arith.constant 0 : i32
      %c0_i32_178 = arith.constant 0 : i32
      %231 = tpu.memref_slice %arg7[%153, %c7_i32_174, %c0_i32_177, %c0_i32_178] : memref<2x16x32x128xf32, #tpu.memory_space<vmem>> -> memref<1x1x32x128xf32, #tpu.memory_space<vmem>>
      %232 = tpu.memref_squeeze %231 : memref<1x1x32x128xf32, #tpu.memory_space<vmem>> -> memref<32x128xf32, #tpu.memory_space<vmem>>
      %233 = tpu.memref_slice %arg8[%153, %c7_i32_175] : memref<2x16x!tpu.dma_semaphore, #tpu.memory_space<semaphore_mem>> -> memref<1x1x!tpu.dma_semaphore, #tpu.memory_space<semaphore_mem>>
      %234 = tpu.memref_squeeze %233 : memref<1x1x!tpu.dma_semaphore, #tpu.memory_space<semaphore_mem>> -> memref<!tpu.dma_semaphore, #tpu.memory_space<semaphore_mem>>
      tpu.enqueue_dma source(%230 : memref<32x128xf32, #tpu.memory_space<any>>) target(%232 : memref<32x128xf32, #tpu.memory_space<vmem>>) target_semaphore(%234 : memref<!tpu.dma_semaphore, #tpu.memory_space<semaphore_mem>>)
      %c8_i32_179 = arith.constant 8 : i32
      %235 = arith.addi %0, %c8_i32_179 : i32
      %c19_i32_180 = arith.constant 19 : i32
      %236 = arith.minsi %235, %c19_i32_180 : i32
      %237 = arith.index_cast %236 : i32 to index
      %238 = memref.load %arg2[%237] : memref<20xi32, #tpu.memory_space<smem>>
      %c8_i32_181 = arith.constant 8 : i32
      %c8_i32_182 = arith.constant 8 : i32
      %c0_i32_183 = arith.constant 0 : i32
      %239 = tpu.memref_slice %arg5[%238, %154, %c0_i32_183] : memref<20x96x128xf32, #tpu.memory_space<any>> -> memref<1x32x128xf32, #tpu.memory_space<any>>
      %240 = tpu.memref_squeeze %239 : memref<1x32x128xf32, #tpu.memory_space<any>> -> memref<32x128xf32, #tpu.memory_space<any>>
      %c0_i32_184 = arith.constant 0 : i32
      %c0_i32_185 = arith.constant 0 : i32
      %241 = tpu.memref_slice %arg7[%153, %c8_i32_181, %c0_i32_184, %c0_i32_185] : memref<2x16x32x128xf32, #tpu.memory_space<vmem>> -> memref<1x1x32x128xf32, #tpu.memory_space<vmem>>
      %242 = tpu.memref_squeeze %241 : memref<1x1x32x128xf32, #tpu.memory_space<vmem>> -> memref<32x128xf32, #tpu.memory_space<vmem>>
      %243 = tpu.memref_slice %arg8[%153, %c8_i32_182] : memref<2x16x!tpu.dma_semaphore, #tpu.memory_space<semaphore_mem>> -> memref<1x1x!tpu.dma_semaphore, #tpu.memory_space<semaphore_mem>>
      %244 = tpu.memref_squeeze %243 : memref<1x1x!tpu.dma_semaphore, #tpu.memory_space<semaphore_mem>> -> memref<!tpu.dma_semaphore, #tpu.memory_space<semaphore_mem>>
      tpu.enqueue_dma source(%240 : memref<32x128xf32, #tpu.memory_space<any>>) target(%242 : memref<32x128xf32, #tpu.memory_space<vmem>>) target_semaphore(%244 : memref<!tpu.dma_semaphore, #tpu.memory_space<semaphore_mem>>)
      %c9_i32_186 = arith.constant 9 : i32
      %245 = arith.addi %0, %c9_i32_186 : i32
      %c19_i32_187 = arith.constant 19 : i32
      %246 = arith.minsi %245, %c19_i32_187 : i32
      %247 = arith.index_cast %246 : i32 to index
      %248 = memref.load %arg2[%247] : memref<20xi32, #tpu.memory_space<smem>>
      %c9_i32_188 = arith.constant 9 : i32
      %c9_i32_189 = arith.constant 9 : i32
      %c0_i32_190 = arith.constant 0 : i32
      %249 = tpu.memref_slice %arg5[%248, %154, %c0_i32_190] : memref<20x96x128xf32, #tpu.memory_space<any>> -> memref<1x32x128xf32, #tpu.memory_space<any>>
      %250 = tpu.memref_squeeze %249 : memref<1x32x128xf32, #tpu.memory_space<any>> -> memref<32x128xf32, #tpu.memory_space<any>>
      %c0_i32_191 = arith.constant 0 : i32
      %c0_i32_192 = arith.constant 0 : i32
      %251 = tpu.memref_slice %arg7[%153, %c9_i32_188, %c0_i32_191, %c0_i32_192] : memref<2x16x32x128xf32, #tpu.memory_space<vmem>> -> memref<1x1x32x128xf32, #tpu.memory_space<vmem>>
      %252 = tpu.memref_squeeze %251 : memref<1x1x32x128xf32, #tpu.memory_space<vmem>> -> memref<32x128xf32, #tpu.memory_space<vmem>>
      %253 = tpu.memref_slice %arg8[%153, %c9_i32_189] : memref<2x16x!tpu.dma_semaphore, #tpu.memory_space<semaphore_mem>> -> memref<1x1x!tpu.dma_semaphore, #tpu.memory_space<semaphore_mem>>
      %254 = tpu.memref_squeeze %253 : memref<1x1x!tpu.dma_semaphore, #tpu.memory_space<semaphore_mem>> -> memref<!tpu.dma_semaphore, #tpu.memory_space<semaphore_mem>>
      tpu.enqueue_dma source(%250 : memref<32x128xf32, #tpu.memory_space<any>>) target(%252 : memref<32x128xf32, #tpu.memory_space<vmem>>) target_semaphore(%254 : memref<!tpu.dma_semaphore, #tpu.memory_space<semaphore_mem>>)
      %c10_i32_193 = arith.constant 10 : i32
      %255 = arith.addi %0, %c10_i32_193 : i32
      %c19_i32_194 = arith.constant 19 : i32
      %256 = arith.minsi %255, %c19_i32_194 : i32
      %257 = arith.index_cast %256 : i32 to index
      %258 = memref.load %arg2[%257] : memref<20xi32, #tpu.memory_space<smem>>
      %c10_i32_195 = arith.constant 10 : i32
      %c10_i32_196 = arith.constant 10 : i32
      %c0_i32_197 = arith.constant 0 : i32
      %259 = tpu.memref_slice %arg5[%258, %154, %c0_i32_197] : memref<20x96x128xf32, #tpu.memory_space<any>> -> memref<1x32x128xf32, #tpu.memory_space<any>>
      %260 = tpu.memref_squeeze %259 : memref<1x32x128xf32, #tpu.memory_space<any>> -> memref<32x128xf32, #tpu.memory_space<any>>
      %c0_i32_198 = arith.constant 0 : i32
      %c0_i32_199 = arith.constant 0 : i32
      %261 = tpu.memref_slice %arg7[%153, %c10_i32_195, %c0_i32_198, %c0_i32_199] : memref<2x16x32x128xf32, #tpu.memory_space<vmem>> -> memref<1x1x32x128xf32, #tpu.memory_space<vmem>>
      %262 = tpu.memref_squeeze %261 : memref<1x1x32x128xf32, #tpu.memory_space<vmem>> -> memref<32x128xf32, #tpu.memory_space<vmem>>
      %263 = tpu.memref_slice %arg8[%153, %c10_i32_196] : memref<2x16x!tpu.dma_semaphore, #tpu.memory_space<semaphore_mem>> -> memref<1x1x!tpu.dma_semaphore, #tpu.memory_space<semaphore_mem>>
      %264 = tpu.memref_squeeze %263 : memref<1x1x!tpu.dma_semaphore, #tpu.memory_space<semaphore_mem>> -> memref<!tpu.dma_semaphore, #tpu.memory_space<semaphore_mem>>
      tpu.enqueue_dma source(%260 : memref<32x128xf32, #tpu.memory_space<any>>) target(%262 : memref<32x128xf32, #tpu.memory_space<vmem>>) target_semaphore(%264 : memref<!tpu.dma_semaphore, #tpu.memory_space<semaphore_mem>>)
      %c11_i32_200 = arith.constant 11 : i32
      %265 = arith.addi %0, %c11_i32_200 : i32
      %c19_i32_201 = arith.constant 19 : i32
      %266 = arith.minsi %265, %c19_i32_201 : i32
      %267 = arith.index_cast %266 : i32 to index
      %268 = memref.load %arg2[%267] : memref<20xi32, #tpu.memory_space<smem>>
      %c11_i32_202 = arith.constant 11 : i32
      %c11_i32_203 = arith.constant 11 : i32
      %c0_i32_204 = arith.constant 0 : i32
      %269 = tpu.memref_slice %arg5[%268, %154, %c0_i32_204] : memref<20x96x128xf32, #tpu.memory_space<any>> -> memref<1x32x128xf32, #tpu.memory_space<any>>
      %270 = tpu.memref_squeeze %269 : memref<1x32x128xf32, #tpu.memory_space<any>> -> memref<32x128xf32, #tpu.memory_space<any>>
      %c0_i32_205 = arith.constant 0 : i32
      %c0_i32_206 = arith.constant 0 : i32
      %271 = tpu.memref_slice %arg7[%153, %c11_i32_202, %c0_i32_205, %c0_i32_206] : memref<2x16x32x128xf32, #tpu.memory_space<vmem>> -> memref<1x1x32x128xf32, #tpu.memory_space<vmem>>
      %272 = tpu.memref_squeeze %271 : memref<1x1x32x128xf32, #tpu.memory_space<vmem>> -> memref<32x128xf32, #tpu.memory_space<vmem>>
      %273 = tpu.memref_slice %arg8[%153, %c11_i32_203] : memref<2x16x!tpu.dma_semaphore, #tpu.memory_space<semaphore_mem>> -> memref<1x1x!tpu.dma_semaphore, #tpu.memory_space<semaphore_mem>>
      %274 = tpu.memref_squeeze %273 : memref<1x1x!tpu.dma_semaphore, #tpu.memory_space<semaphore_mem>> -> memref<!tpu.dma_semaphore, #tpu.memory_space<semaphore_mem>>
      tpu.enqueue_dma source(%270 : memref<32x128xf32, #tpu.memory_space<any>>) target(%272 : memref<32x128xf32, #tpu.memory_space<vmem>>) target_semaphore(%274 : memref<!tpu.dma_semaphore, #tpu.memory_space<semaphore_mem>>)
      %c12_i32_207 = arith.constant 12 : i32
      %275 = arith.addi %0, %c12_i32_207 : i32
      %c19_i32_208 = arith.constant 19 : i32
      %276 = arith.minsi %275, %c19_i32_208 : i32
      %277 = arith.index_cast %276 : i32 to index
      %278 = memref.load %arg2[%277] : memref<20xi32, #tpu.memory_space<smem>>
      %c12_i32_209 = arith.constant 12 : i32
      %c12_i32_210 = arith.constant 12 : i32
      %c0_i32_211 = arith.constant 0 : i32
      %279 = tpu.memref_slice %arg5[%278, %154, %c0_i32_211] : memref<20x96x128xf32, #tpu.memory_space<any>> -> memref<1x32x128xf32, #tpu.memory_space<any>>
      %280 = tpu.memref_squeeze %279 : memref<1x32x128xf32, #tpu.memory_space<any>> -> memref<32x128xf32, #tpu.memory_space<any>>
      %c0_i32_212 = arith.constant 0 : i32
      %c0_i32_213 = arith.constant 0 : i32
      %281 = tpu.memref_slice %arg7[%153, %c12_i32_209, %c0_i32_212, %c0_i32_213] : memref<2x16x32x128xf32, #tpu.memory_space<vmem>> -> memref<1x1x32x128xf32, #tpu.memory_space<vmem>>
      %282 = tpu.memref_squeeze %281 : memref<1x1x32x128xf32, #tpu.memory_space<vmem>> -> memref<32x128xf32, #tpu.memory_space<vmem>>
      %283 = tpu.memref_slice %arg8[%153, %c12_i32_210] : memref<2x16x!tpu.dma_semaphore, #tpu.memory_space<semaphore_mem>> -> memref<1x1x!tpu.dma_semaphore, #tpu.memory_space<semaphore_mem>>
      %284 = tpu.memref_squeeze %283 : memref<1x1x!tpu.dma_semaphore, #tpu.memory_space<semaphore_mem>> -> memref<!tpu.dma_semaphore, #tpu.memory_space<semaphore_mem>>
      tpu.enqueue_dma source(%280 : memref<32x128xf32, #tpu.memory_space<any>>) target(%282 : memref<32x128xf32, #tpu.memory_space<vmem>>) target_semaphore(%284 : memref<!tpu.dma_semaphore, #tpu.memory_space<semaphore_mem>>)
      %c13_i32_214 = arith.constant 13 : i32
      %285 = arith.addi %0, %c13_i32_214 : i32
      %c19_i32_215 = arith.constant 19 : i32
      %286 = arith.minsi %285, %c19_i32_215 : i32
      %287 = arith.index_cast %286 : i32 to index
      %288 = memref.load %arg2[%287] : memref<20xi32, #tpu.memory_space<smem>>
      %c13_i32_216 = arith.constant 13 : i32
      %c13_i32_217 = arith.constant 13 : i32
      %c0_i32_218 = arith.constant 0 : i32
      %289 = tpu.memref_slice %arg5[%288, %154, %c0_i32_218] : memref<20x96x128xf32, #tpu.memory_space<any>> -> memref<1x32x128xf32, #tpu.memory_space<any>>
      %290 = tpu.memref_squeeze %289 : memref<1x32x128xf32, #tpu.memory_space<any>> -> memref<32x128xf32, #tpu.memory_space<any>>
      %c0_i32_219 = arith.constant 0 : i32
      %c0_i32_220 = arith.constant 0 : i32
      %291 = tpu.memref_slice %arg7[%153, %c13_i32_216, %c0_i32_219, %c0_i32_220] : memref<2x16x32x128xf32, #tpu.memory_space<vmem>> -> memref<1x1x32x128xf32, #tpu.memory_space<vmem>>
      %292 = tpu.memref_squeeze %291 : memref<1x1x32x128xf32, #tpu.memory_space<vmem>> -> memref<32x128xf32, #tpu.memory_space<vmem>>
      %293 = tpu.memref_slice %arg8[%153, %c13_i32_217] : memref<2x16x!tpu.dma_semaphore, #tpu.memory_space<semaphore_mem>> -> memref<1x1x!tpu.dma_semaphore, #tpu.memory_space<semaphore_mem>>
      %294 = tpu.memref_squeeze %293 : memref<1x1x!tpu.dma_semaphore, #tpu.memory_space<semaphore_mem>> -> memref<!tpu.dma_semaphore, #tpu.memory_space<semaphore_mem>>
      tpu.enqueue_dma source(%290 : memref<32x128xf32, #tpu.memory_space<any>>) target(%292 : memref<32x128xf32, #tpu.memory_space<vmem>>) target_semaphore(%294 : memref<!tpu.dma_semaphore, #tpu.memory_space<semaphore_mem>>)
      %c14_i32_221 = arith.constant 14 : i32
      %295 = arith.addi %0, %c14_i32_221 : i32
      %c19_i32_222 = arith.constant 19 : i32
      %296 = arith.minsi %295, %c19_i32_222 : i32
      %297 = arith.index_cast %296 : i32 to index
      %298 = memref.load %arg2[%297] : memref<20xi32, #tpu.memory_space<smem>>
      %c14_i32_223 = arith.constant 14 : i32
      %c14_i32_224 = arith.constant 14 : i32
      %c0_i32_225 = arith.constant 0 : i32
      %299 = tpu.memref_slice %arg5[%298, %154, %c0_i32_225] : memref<20x96x128xf32, #tpu.memory_space<any>> -> memref<1x32x128xf32, #tpu.memory_space<any>>
      %300 = tpu.memref_squeeze %299 : memref<1x32x128xf32, #tpu.memory_space<any>> -> memref<32x128xf32, #tpu.memory_space<any>>
      %c0_i32_226 = arith.constant 0 : i32
      %c0_i32_227 = arith.constant 0 : i32
      %301 = tpu.memref_slice %arg7[%153, %c14_i32_223, %c0_i32_226, %c0_i32_227] : memref<2x16x32x128xf32, #tpu.memory_space<vmem>> -> memref<1x1x32x128xf32, #tpu.memory_space<vmem>>
      %302 = tpu.memref_squeeze %301 : memref<1x1x32x128xf32, #tpu.memory_space<vmem>> -> memref<32x128xf32, #tpu.memory_space<vmem>>
      %303 = tpu.memref_slice %arg8[%153, %c14_i32_224] : memref<2x16x!tpu.dma_semaphore, #tpu.memory_space<semaphore_mem>> -> memref<1x1x!tpu.dma_semaphore, #tpu.memory_space<semaphore_mem>>
      %304 = tpu.memref_squeeze %303 : memref<1x1x!tpu.dma_semaphore, #tpu.memory_space<semaphore_mem>> -> memref<!tpu.dma_semaphore, #tpu.memory_space<semaphore_mem>>
      tpu.enqueue_dma source(%300 : memref<32x128xf32, #tpu.memory_space<any>>) target(%302 : memref<32x128xf32, #tpu.memory_space<vmem>>) target_semaphore(%304 : memref<!tpu.dma_semaphore, #tpu.memory_space<semaphore_mem>>)
      %c15_i32_228 = arith.constant 15 : i32
      %305 = arith.addi %0, %c15_i32_228 : i32
      %c19_i32_229 = arith.constant 19 : i32
      %306 = arith.minsi %305, %c19_i32_229 : i32
      %307 = arith.index_cast %306 : i32 to index
      %308 = memref.load %arg2[%307] : memref<20xi32, #tpu.memory_space<smem>>
      %c15_i32_230 = arith.constant 15 : i32
      %c15_i32_231 = arith.constant 15 : i32
      %c0_i32_232 = arith.constant 0 : i32
      %309 = tpu.memref_slice %arg5[%308, %154, %c0_i32_232] : memref<20x96x128xf32, #tpu.memory_space<any>> -> memref<1x32x128xf32, #tpu.memory_space<any>>
      %310 = tpu.memref_squeeze %309 : memref<1x32x128xf32, #tpu.memory_space<any>> -> memref<32x128xf32, #tpu.memory_space<any>>
      %c0_i32_233 = arith.constant 0 : i32
      %c0_i32_234 = arith.constant 0 : i32
      %311 = tpu.memref_slice %arg7[%153, %c15_i32_230, %c0_i32_233, %c0_i32_234] : memref<2x16x32x128xf32, #tpu.memory_space<vmem>> -> memref<1x1x32x128xf32, #tpu.memory_space<vmem>>
      %312 = tpu.memref_squeeze %311 : memref<1x1x32x128xf32, #tpu.memory_space<vmem>> -> memref<32x128xf32, #tpu.memory_space<vmem>>
      %313 = tpu.memref_slice %arg8[%153, %c15_i32_231] : memref<2x16x!tpu.dma_semaphore, #tpu.memory_space<semaphore_mem>> -> memref<1x1x!tpu.dma_semaphore, #tpu.memory_space<semaphore_mem>>
      %314 = tpu.memref_squeeze %313 : memref<1x1x!tpu.dma_semaphore, #tpu.memory_space<semaphore_mem>> -> memref<!tpu.dma_semaphore, #tpu.memory_space<semaphore_mem>>
      tpu.enqueue_dma source(%310 : memref<32x128xf32, #tpu.memory_space<any>>) target(%312 : memref<32x128xf32, #tpu.memory_space<vmem>>) target_semaphore(%314 : memref<!tpu.dma_semaphore, #tpu.memory_space<semaphore_mem>>)
    } else {
    }
    %c2_i32 = arith.constant 2 : i32
    %c0_i32_2 = arith.constant 0 : i32
    %8 = arith.cmpi eq, %c2_i32, %c0_i32_2 : i32
    %c1_i32_3 = arith.constant 1 : i32
    %9 = arith.select %8, %c1_i32_3, %c2_i32 : i32
    %10 = arith.remsi %arg1, %9 : i32
    %c0_i32_4 = arith.constant 0 : i32
    %11 = arith.cmpi ne, %10, %c0_i32_4 : i32
    %c0_i32_5 = arith.constant 0 : i32
    %12 = arith.cmpi slt, %10, %c0_i32_5 : i32
    %c0_i32_6 = arith.constant 0 : i32
    %13 = arith.cmpi slt, %9, %c0_i32_6 : i32
    %14 = arith.xori %12, %13 : i1
    %15 = arith.andi %14, %11 : i1
    %16 = arith.addi %10, %9 : i32
    %17 = arith.select %15, %16, %10 : i32
    %c32_i32 = arith.constant 32 : i32
    %18 = arith.muli %arg1, %c32_i32 : i32
    %c0_i32_7 = arith.constant 0 : i32
    %c0_i32_8 = arith.constant 0 : i32
    %c0_i32_9 = arith.constant 0 : i32
    %c0_i32_10 = arith.constant 0 : i32
    %19 = tpu.memref_slice %arg5[%c0_i32_7, %18, %c0_i32_10] : memref<20x96x128xf32, #tpu.memory_space<any>> -> memref<1x32x128xf32, #tpu.memory_space<any>>
    %20 = tpu.memref_squeeze %19 : memref<1x32x128xf32, #tpu.memory_space<any>> -> memref<32x128xf32, #tpu.memory_space<any>>
    %c0_i32_11 = arith.constant 0 : i32
    %c0_i32_12 = arith.constant 0 : i32
    %21 = tpu.memref_slice %arg7[%17, %c0_i32_8, %c0_i32_11, %c0_i32_12] : memref<2x16x32x128xf32, #tpu.memory_space<vmem>> -> memref<1x1x32x128xf32, #tpu.memory_space<vmem>>
    %22 = tpu.memref_squeeze %21 : memref<1x1x32x128xf32, #tpu.memory_space<vmem>> -> memref<32x128xf32, #tpu.memory_space<vmem>>
    %23 = tpu.memref_slice %arg8[%17, %c0_i32_9] : memref<2x16x!tpu.dma_semaphore, #tpu.memory_space<semaphore_mem>> -> memref<1x1x!tpu.dma_semaphore, #tpu.memory_space<semaphore_mem>>
    %24 = tpu.memref_squeeze %23 : memref<1x1x!tpu.dma_semaphore, #tpu.memory_space<semaphore_mem>> -> memref<!tpu.dma_semaphore, #tpu.memory_space<semaphore_mem>>
    tpu.wait_dma2 semaphore(%24 : memref<!tpu.dma_semaphore, #tpu.memory_space<semaphore_mem>>) src(%20 : memref<32x128xf32, #tpu.memory_space<any>>) dst(%22 : memref<32x128xf32, #tpu.memory_space<vmem>>)
    %c32_i32_13 = arith.constant 32 : i32
    %25 = arith.muli %arg1, %c32_i32_13 : i32
    %c0_i32_14 = arith.constant 0 : i32
    %c1_i32_15 = arith.constant 1 : i32
    %c1_i32_16 = arith.constant 1 : i32
    %c0_i32_17 = arith.constant 0 : i32
    %26 = tpu.memref_slice %arg5[%c0_i32_14, %25, %c0_i32_17] : memref<20x96x128xf32, #tpu.memory_space<any>> -> memref<1x32x128xf32, #tpu.memory_space<any>>
    %27 = tpu.memref_squeeze %26 : memref<1x32x128xf32, #tpu.memory_space<any>> -> memref<32x128xf32, #tpu.memory_space<any>>
    %c0_i32_18 = arith.constant 0 : i32
    %c0_i32_19 = arith.constant 0 : i32
    %28 = tpu.memref_slice %arg7[%17, %c1_i32_15, %c0_i32_18, %c0_i32_19] : memref<2x16x32x128xf32, #tpu.memory_space<vmem>> -> memref<1x1x32x128xf32, #tpu.memory_space<vmem>>
    %29 = tpu.memref_squeeze %28 : memref<1x1x32x128xf32, #tpu.memory_space<vmem>> -> memref<32x128xf32, #tpu.memory_space<vmem>>
    %30 = tpu.memref_slice %arg8[%17, %c1_i32_16] : memref<2x16x!tpu.dma_semaphore, #tpu.memory_space<semaphore_mem>> -> memref<1x1x!tpu.dma_semaphore, #tpu.memory_space<semaphore_mem>>
    %31 = tpu.memref_squeeze %30 : memref<1x1x!tpu.dma_semaphore, #tpu.memory_space<semaphore_mem>> -> memref<!tpu.dma_semaphore, #tpu.memory_space<semaphore_mem>>
    tpu.wait_dma2 semaphore(%31 : memref<!tpu.dma_semaphore, #tpu.memory_space<semaphore_mem>>) src(%27 : memref<32x128xf32, #tpu.memory_space<any>>) dst(%29 : memref<32x128xf32, #tpu.memory_space<vmem>>)
    %c32_i32_20 = arith.constant 32 : i32
    %32 = arith.muli %arg1, %c32_i32_20 : i32
    %c0_i32_21 = arith.constant 0 : i32
    %c2_i32_22 = arith.constant 2 : i32
    %c2_i32_23 = arith.constant 2 : i32
    %c0_i32_24 = arith.constant 0 : i32
    %33 = tpu.memref_slice %arg5[%c0_i32_21, %32, %c0_i32_24] : memref<20x96x128xf32, #tpu.memory_space<any>> -> memref<1x32x128xf32, #tpu.memory_space<any>>
    %34 = tpu.memref_squeeze %33 : memref<1x32x128xf32, #tpu.memory_space<any>> -> memref<32x128xf32, #tpu.memory_space<any>>
    %c0_i32_25 = arith.constant 0 : i32
    %c0_i32_26 = arith.constant 0 : i32
    %35 = tpu.memref_slice %arg7[%17, %c2_i32_22, %c0_i32_25, %c0_i32_26] : memref<2x16x32x128xf32, #tpu.memory_space<vmem>> -> memref<1x1x32x128xf32, #tpu.memory_space<vmem>>
    %36 = tpu.memref_squeeze %35 : memref<1x1x32x128xf32, #tpu.memory_space<vmem>> -> memref<32x128xf32, #tpu.memory_space<vmem>>
    %37 = tpu.memref_slice %arg8[%17, %c2_i32_23] : memref<2x16x!tpu.dma_semaphore, #tpu.memory_space<semaphore_mem>> -> memref<1x1x!tpu.dma_semaphore, #tpu.memory_space<semaphore_mem>>
    %38 = tpu.memref_squeeze %37 : memref<1x1x!tpu.dma_semaphore, #tpu.memory_space<semaphore_mem>> -> memref<!tpu.dma_semaphore, #tpu.memory_space<semaphore_mem>>
    tpu.wait_dma2 semaphore(%38 : memref<!tpu.dma_semaphore, #tpu.memory_space<semaphore_mem>>) src(%34 : memref<32x128xf32, #tpu.memory_space<any>>) dst(%36 : memref<32x128xf32, #tpu.memory_space<vmem>>)
    %c32_i32_27 = arith.constant 32 : i32
    %39 = arith.muli %arg1, %c32_i32_27 : i32
    %c0_i32_28 = arith.constant 0 : i32
    %c3_i32_29 = arith.constant 3 : i32
    %c3_i32_30 = arith.constant 3 : i32
    %c0_i32_31 = arith.constant 0 : i32
    %40 = tpu.memref_slice %arg5[%c0_i32_28, %39, %c0_i32_31] : memref<20x96x128xf32, #tpu.memory_space<any>> -> memref<1x32x128xf32, #tpu.memory_space<any>>
    %41 = tpu.memref_squeeze %40 : memref<1x32x128xf32, #tpu.memory_space<any>> -> memref<32x128xf32, #tpu.memory_space<any>>
    %c0_i32_32 = arith.constant 0 : i32
    %c0_i32_33 = arith.constant 0 : i32
    %42 = tpu.memref_slice %arg7[%17, %c3_i32_29, %c0_i32_32, %c0_i32_33] : memref<2x16x32x128xf32, #tpu.memory_space<vmem>> -> memref<1x1x32x128xf32, #tpu.memory_space<vmem>>
    %43 = tpu.memref_squeeze %42 : memref<1x1x32x128xf32, #tpu.memory_space<vmem>> -> memref<32x128xf32, #tpu.memory_space<vmem>>
    %44 = tpu.memref_slice %arg8[%17, %c3_i32_30] : memref<2x16x!tpu.dma_semaphore, #tpu.memory_space<semaphore_mem>> -> memref<1x1x!tpu.dma_semaphore, #tpu.memory_space<semaphore_mem>>
    %45 = tpu.memref_squeeze %44 : memref<1x1x!tpu.dma_semaphore, #tpu.memory_space<semaphore_mem>> -> memref<!tpu.dma_semaphore, #tpu.memory_space<semaphore_mem>>
    tpu.wait_dma2 semaphore(%45 : memref<!tpu.dma_semaphore, #tpu.memory_space<semaphore_mem>>) src(%41 : memref<32x128xf32, #tpu.memory_space<any>>) dst(%43 : memref<32x128xf32, #tpu.memory_space<vmem>>)
    %c32_i32_34 = arith.constant 32 : i32
    %46 = arith.muli %arg1, %c32_i32_34 : i32
    %c0_i32_35 = arith.constant 0 : i32
    %c4_i32 = arith.constant 4 : i32
    %c4_i32_36 = arith.constant 4 : i32
    %c0_i32_37 = arith.constant 0 : i32
    %47 = tpu.memref_slice %arg5[%c0_i32_35, %46, %c0_i32_37] : memref<20x96x128xf32, #tpu.memory_space<any>> -> memref<1x32x128xf32, #tpu.memory_space<any>>
    %48 = tpu.memref_squeeze %47 : memref<1x32x128xf32, #tpu.memory_space<any>> -> memref<32x128xf32, #tpu.memory_space<any>>
    %c0_i32_38 = arith.constant 0 : i32
    %c0_i32_39 = arith.constant 0 : i32
    %49 = tpu.memref_slice %arg7[%17, %c4_i32, %c0_i32_38, %c0_i32_39] : memref<2x16x32x128xf32, #tpu.memory_space<vmem>> -> memref<1x1x32x128xf32, #tpu.memory_space<vmem>>
    %50 = tpu.memref_squeeze %49 : memref<1x1x32x128xf32, #tpu.memory_space<vmem>> -> memref<32x128xf32, #tpu.memory_space<vmem>>
    %51 = tpu.memref_slice %arg8[%17, %c4_i32_36] : memref<2x16x!tpu.dma_semaphore, #tpu.memory_space<semaphore_mem>> -> memref<1x1x!tpu.dma_semaphore, #tpu.memory_space<semaphore_mem>>
    %52 = tpu.memref_squeeze %51 : memref<1x1x!tpu.dma_semaphore, #tpu.memory_space<semaphore_mem>> -> memref<!tpu.dma_semaphore, #tpu.memory_space<semaphore_mem>>
    tpu.wait_dma2 semaphore(%52 : memref<!tpu.dma_semaphore, #tpu.memory_space<semaphore_mem>>) src(%48 : memref<32x128xf32, #tpu.memory_space<any>>) dst(%50 : memref<32x128xf32, #tpu.memory_space<vmem>>)
    %c32_i32_40 = arith.constant 32 : i32
    %53 = arith.muli %arg1, %c32_i32_40 : i32
    %c0_i32_41 = arith.constant 0 : i32
    %c5_i32 = arith.constant 5 : i32
    %c5_i32_42 = arith.constant 5 : i32
    %c0_i32_43 = arith.constant 0 : i32
    %54 = tpu.memref_slice %arg5[%c0_i32_41, %53, %c0_i32_43] : memref<20x96x128xf32, #tpu.memory_space<any>> -> memref<1x32x128xf32, #tpu.memory_space<any>>
    %55 = tpu.memref_squeeze %54 : memref<1x32x128xf32, #tpu.memory_space<any>> -> memref<32x128xf32, #tpu.memory_space<any>>
    %c0_i32_44 = arith.constant 0 : i32
    %c0_i32_45 = arith.constant 0 : i32
    %56 = tpu.memref_slice %arg7[%17, %c5_i32, %c0_i32_44, %c0_i32_45] : memref<2x16x32x128xf32, #tpu.memory_space<vmem>> -> memref<1x1x32x128xf32, #tpu.memory_space<vmem>>
    %57 = tpu.memref_squeeze %56 : memref<1x1x32x128xf32, #tpu.memory_space<vmem>> -> memref<32x128xf32, #tpu.memory_space<vmem>>
    %58 = tpu.memref_slice %arg8[%17, %c5_i32_42] : memref<2x16x!tpu.dma_semaphore, #tpu.memory_space<semaphore_mem>> -> memref<1x1x!tpu.dma_semaphore, #tpu.memory_space<semaphore_mem>>
    %59 = tpu.memref_squeeze %58 : memref<1x1x!tpu.dma_semaphore, #tpu.memory_space<semaphore_mem>> -> memref<!tpu.dma_semaphore, #tpu.memory_space<semaphore_mem>>
    tpu.wait_dma2 semaphore(%59 : memref<!tpu.dma_semaphore, #tpu.memory_space<semaphore_mem>>) src(%55 : memref<32x128xf32, #tpu.memory_space<any>>) dst(%57 : memref<32x128xf32, #tpu.memory_space<vmem>>)
    %c32_i32_46 = arith.constant 32 : i32
    %60 = arith.muli %arg1, %c32_i32_46 : i32
    %c0_i32_47 = arith.constant 0 : i32
    %c6_i32 = arith.constant 6 : i32
    %c6_i32_48 = arith.constant 6 : i32
    %c0_i32_49 = arith.constant 0 : i32
    %61 = tpu.memref_slice %arg5[%c0_i32_47, %60, %c0_i32_49] : memref<20x96x128xf32, #tpu.memory_space<any>> -> memref<1x32x128xf32, #tpu.memory_space<any>>
    %62 = tpu.memref_squeeze %61 : memref<1x32x128xf32, #tpu.memory_space<any>> -> memref<32x128xf32, #tpu.memory_space<any>>
    %c0_i32_50 = arith.constant 0 : i32
    %c0_i32_51 = arith.constant 0 : i32
    %63 = tpu.memref_slice %arg7[%17, %c6_i32, %c0_i32_50, %c0_i32_51] : memref<2x16x32x128xf32, #tpu.memory_space<vmem>> -> memref<1x1x32x128xf32, #tpu.memory_space<vmem>>
    %64 = tpu.memref_squeeze %63 : memref<1x1x32x128xf32, #tpu.memory_space<vmem>> -> memref<32x128xf32, #tpu.memory_space<vmem>>
    %65 = tpu.memref_slice %arg8[%17, %c6_i32_48] : memref<2x16x!tpu.dma_semaphore, #tpu.memory_space<semaphore_mem>> -> memref<1x1x!tpu.dma_semaphore, #tpu.memory_space<semaphore_mem>>
    %66 = tpu.memref_squeeze %65 : memref<1x1x!tpu.dma_semaphore, #tpu.memory_space<semaphore_mem>> -> memref<!tpu.dma_semaphore, #tpu.memory_space<semaphore_mem>>
    tpu.wait_dma2 semaphore(%66 : memref<!tpu.dma_semaphore, #tpu.memory_space<semaphore_mem>>) src(%62 : memref<32x128xf32, #tpu.memory_space<any>>) dst(%64 : memref<32x128xf32, #tpu.memory_space<vmem>>)
    %c32_i32_52 = arith.constant 32 : i32
    %67 = arith.muli %arg1, %c32_i32_52 : i32
    %c0_i32_53 = arith.constant 0 : i32
    %c7_i32 = arith.constant 7 : i32
    %c7_i32_54 = arith.constant 7 : i32
    %c0_i32_55 = arith.constant 0 : i32
    %68 = tpu.memref_slice %arg5[%c0_i32_53, %67, %c0_i32_55] : memref<20x96x128xf32, #tpu.memory_space<any>> -> memref<1x32x128xf32, #tpu.memory_space<any>>
    %69 = tpu.memref_squeeze %68 : memref<1x32x128xf32, #tpu.memory_space<any>> -> memref<32x128xf32, #tpu.memory_space<any>>
    %c0_i32_56 = arith.constant 0 : i32
    %c0_i32_57 = arith.constant 0 : i32
    %70 = tpu.memref_slice %arg7[%17, %c7_i32, %c0_i32_56, %c0_i32_57] : memref<2x16x32x128xf32, #tpu.memory_space<vmem>> -> memref<1x1x32x128xf32, #tpu.memory_space<vmem>>
    %71 = tpu.memref_squeeze %70 : memref<1x1x32x128xf32, #tpu.memory_space<vmem>> -> memref<32x128xf32, #tpu.memory_space<vmem>>
    %72 = tpu.memref_slice %arg8[%17, %c7_i32_54] : memref<2x16x!tpu.dma_semaphore, #tpu.memory_space<semaphore_mem>> -> memref<1x1x!tpu.dma_semaphore, #tpu.memory_space<semaphore_mem>>
    %73 = tpu.memref_squeeze %72 : memref<1x1x!tpu.dma_semaphore, #tpu.memory_space<semaphore_mem>> -> memref<!tpu.dma_semaphore, #tpu.memory_space<semaphore_mem>>
    tpu.wait_dma2 semaphore(%73 : memref<!tpu.dma_semaphore, #tpu.memory_space<semaphore_mem>>) src(%69 : memref<32x128xf32, #tpu.memory_space<any>>) dst(%71 : memref<32x128xf32, #tpu.memory_space<vmem>>)
    %c32_i32_58 = arith.constant 32 : i32
    %74 = arith.muli %arg1, %c32_i32_58 : i32
    %c0_i32_59 = arith.constant 0 : i32
    %c8_i32 = arith.constant 8 : i32
    %c8_i32_60 = arith.constant 8 : i32
    %c0_i32_61 = arith.constant 0 : i32
    %75 = tpu.memref_slice %arg5[%c0_i32_59, %74, %c0_i32_61] : memref<20x96x128xf32, #tpu.memory_space<any>> -> memref<1x32x128xf32, #tpu.memory_space<any>>
    %76 = tpu.memref_squeeze %75 : memref<1x32x128xf32, #tpu.memory_space<any>> -> memref<32x128xf32, #tpu.memory_space<any>>
    %c0_i32_62 = arith.constant 0 : i32
    %c0_i32_63 = arith.constant 0 : i32
    %77 = tpu.memref_slice %arg7[%17, %c8_i32, %c0_i32_62, %c0_i32_63] : memref<2x16x32x128xf32, #tpu.memory_space<vmem>> -> memref<1x1x32x128xf32, #tpu.memory_space<vmem>>
    %78 = tpu.memref_squeeze %77 : memref<1x1x32x128xf32, #tpu.memory_space<vmem>> -> memref<32x128xf32, #tpu.memory_space<vmem>>
    %79 = tpu.memref_slice %arg8[%17, %c8_i32_60] : memref<2x16x!tpu.dma_semaphore, #tpu.memory_space<semaphore_mem>> -> memref<1x1x!tpu.dma_semaphore, #tpu.memory_space<semaphore_mem>>
    %80 = tpu.memref_squeeze %79 : memref<1x1x!tpu.dma_semaphore, #tpu.memory_space<semaphore_mem>> -> memref<!tpu.dma_semaphore, #tpu.memory_space<semaphore_mem>>
    tpu.wait_dma2 semaphore(%80 : memref<!tpu.dma_semaphore, #tpu.memory_space<semaphore_mem>>) src(%76 : memref<32x128xf32, #tpu.memory_space<any>>) dst(%78 : memref<32x128xf32, #tpu.memory_space<vmem>>)
    %c32_i32_64 = arith.constant 32 : i32
    %81 = arith.muli %arg1, %c32_i32_64 : i32
    %c0_i32_65 = arith.constant 0 : i32
    %c9_i32 = arith.constant 9 : i32
    %c9_i32_66 = arith.constant 9 : i32
    %c0_i32_67 = arith.constant 0 : i32
    %82 = tpu.memref_slice %arg5[%c0_i32_65, %81, %c0_i32_67] : memref<20x96x128xf32, #tpu.memory_space<any>> -> memref<1x32x128xf32, #tpu.memory_space<any>>
    %83 = tpu.memref_squeeze %82 : memref<1x32x128xf32, #tpu.memory_space<any>> -> memref<32x128xf32, #tpu.memory_space<any>>
    %c0_i32_68 = arith.constant 0 : i32
    %c0_i32_69 = arith.constant 0 : i32
    %84 = tpu.memref_slice %arg7[%17, %c9_i32, %c0_i32_68, %c0_i32_69] : memref<2x16x32x128xf32, #tpu.memory_space<vmem>> -> memref<1x1x32x128xf32, #tpu.memory_space<vmem>>
    %85 = tpu.memref_squeeze %84 : memref<1x1x32x128xf32, #tpu.memory_space<vmem>> -> memref<32x128xf32, #tpu.memory_space<vmem>>
    %86 = tpu.memref_slice %arg8[%17, %c9_i32_66] : memref<2x16x!tpu.dma_semaphore, #tpu.memory_space<semaphore_mem>> -> memref<1x1x!tpu.dma_semaphore, #tpu.memory_space<semaphore_mem>>
    %87 = tpu.memref_squeeze %86 : memref<1x1x!tpu.dma_semaphore, #tpu.memory_space<semaphore_mem>> -> memref<!tpu.dma_semaphore, #tpu.memory_space<semaphore_mem>>
    tpu.wait_dma2 semaphore(%87 : memref<!tpu.dma_semaphore, #tpu.memory_space<semaphore_mem>>) src(%83 : memref<32x128xf32, #tpu.memory_space<any>>) dst(%85 : memref<32x128xf32, #tpu.memory_space<vmem>>)
    %c32_i32_70 = arith.constant 32 : i32
    %88 = arith.muli %arg1, %c32_i32_70 : i32
    %c0_i32_71 = arith.constant 0 : i32
    %c10_i32 = arith.constant 10 : i32
    %c10_i32_72 = arith.constant 10 : i32
    %c0_i32_73 = arith.constant 0 : i32
    %89 = tpu.memref_slice %arg5[%c0_i32_71, %88, %c0_i32_73] : memref<20x96x128xf32, #tpu.memory_space<any>> -> memref<1x32x128xf32, #tpu.memory_space<any>>
    %90 = tpu.memref_squeeze %89 : memref<1x32x128xf32, #tpu.memory_space<any>> -> memref<32x128xf32, #tpu.memory_space<any>>
    %c0_i32_74 = arith.constant 0 : i32
    %c0_i32_75 = arith.constant 0 : i32
    %91 = tpu.memref_slice %arg7[%17, %c10_i32, %c0_i32_74, %c0_i32_75] : memref<2x16x32x128xf32, #tpu.memory_space<vmem>> -> memref<1x1x32x128xf32, #tpu.memory_space<vmem>>
    %92 = tpu.memref_squeeze %91 : memref<1x1x32x128xf32, #tpu.memory_space<vmem>> -> memref<32x128xf32, #tpu.memory_space<vmem>>
    %93 = tpu.memref_slice %arg8[%17, %c10_i32_72] : memref<2x16x!tpu.dma_semaphore, #tpu.memory_space<semaphore_mem>> -> memref<1x1x!tpu.dma_semaphore, #tpu.memory_space<semaphore_mem>>
    %94 = tpu.memref_squeeze %93 : memref<1x1x!tpu.dma_semaphore, #tpu.memory_space<semaphore_mem>> -> memref<!tpu.dma_semaphore, #tpu.memory_space<semaphore_mem>>
    tpu.wait_dma2 semaphore(%94 : memref<!tpu.dma_semaphore, #tpu.memory_space<semaphore_mem>>) src(%90 : memref<32x128xf32, #tpu.memory_space<any>>) dst(%92 : memref<32x128xf32, #tpu.memory_space<vmem>>)
    %c32_i32_76 = arith.constant 32 : i32
    %95 = arith.muli %arg1, %c32_i32_76 : i32
    %c0_i32_77 = arith.constant 0 : i32
    %c11_i32 = arith.constant 11 : i32
    %c11_i32_78 = arith.constant 11 : i32
    %c0_i32_79 = arith.constant 0 : i32
    %96 = tpu.memref_slice %arg5[%c0_i32_77, %95, %c0_i32_79] : memref<20x96x128xf32, #tpu.memory_space<any>> -> memref<1x32x128xf32, #tpu.memory_space<any>>
    %97 = tpu.memref_squeeze %96 : memref<1x32x128xf32, #tpu.memory_space<any>> -> memref<32x128xf32, #tpu.memory_space<any>>
    %c0_i32_80 = arith.constant 0 : i32
    %c0_i32_81 = arith.constant 0 : i32
    %98 = tpu.memref_slice %arg7[%17, %c11_i32, %c0_i32_80, %c0_i32_81] : memref<2x16x32x128xf32, #tpu.memory_space<vmem>> -> memref<1x1x32x128xf32, #tpu.memory_space<vmem>>
    %99 = tpu.memref_squeeze %98 : memref<1x1x32x128xf32, #tpu.memory_space<vmem>> -> memref<32x128xf32, #tpu.memory_space<vmem>>
    %100 = tpu.memref_slice %arg8[%17, %c11_i32_78] : memref<2x16x!tpu.dma_semaphore, #tpu.memory_space<semaphore_mem>> -> memref<1x1x!tpu.dma_semaphore, #tpu.memory_space<semaphore_mem>>
    %101 = tpu.memref_squeeze %100 : memref<1x1x!tpu.dma_semaphore, #tpu.memory_space<semaphore_mem>> -> memref<!tpu.dma_semaphore, #tpu.memory_space<semaphore_mem>>
    tpu.wait_dma2 semaphore(%101 : memref<!tpu.dma_semaphore, #tpu.memory_space<semaphore_mem>>) src(%97 : memref<32x128xf32, #tpu.memory_space<any>>) dst(%99 : memref<32x128xf32, #tpu.memory_space<vmem>>)
    %c32_i32_82 = arith.constant 32 : i32
    %102 = arith.muli %arg1, %c32_i32_82 : i32
    %c0_i32_83 = arith.constant 0 : i32
    %c12_i32 = arith.constant 12 : i32
    %c12_i32_84 = arith.constant 12 : i32
    %c0_i32_85 = arith.constant 0 : i32
    %103 = tpu.memref_slice %arg5[%c0_i32_83, %102, %c0_i32_85] : memref<20x96x128xf32, #tpu.memory_space<any>> -> memref<1x32x128xf32, #tpu.memory_space<any>>
    %104 = tpu.memref_squeeze %103 : memref<1x32x128xf32, #tpu.memory_space<any>> -> memref<32x128xf32, #tpu.memory_space<any>>
    %c0_i32_86 = arith.constant 0 : i32
    %c0_i32_87 = arith.constant 0 : i32
    %105 = tpu.memref_slice %arg7[%17, %c12_i32, %c0_i32_86, %c0_i32_87] : memref<2x16x32x128xf32, #tpu.memory_space<vmem>> -> memref<1x1x32x128xf32, #tpu.memory_space<vmem>>
    %106 = tpu.memref_squeeze %105 : memref<1x1x32x128xf32, #tpu.memory_space<vmem>> -> memref<32x128xf32, #tpu.memory_space<vmem>>
    %107 = tpu.memref_slice %arg8[%17, %c12_i32_84] : memref<2x16x!tpu.dma_semaphore, #tpu.memory_space<semaphore_mem>> -> memref<1x1x!tpu.dma_semaphore, #tpu.memory_space<semaphore_mem>>
    %108 = tpu.memref_squeeze %107 : memref<1x1x!tpu.dma_semaphore, #tpu.memory_space<semaphore_mem>> -> memref<!tpu.dma_semaphore, #tpu.memory_space<semaphore_mem>>
    tpu.wait_dma2 semaphore(%108 : memref<!tpu.dma_semaphore, #tpu.memory_space<semaphore_mem>>) src(%104 : memref<32x128xf32, #tpu.memory_space<any>>) dst(%106 : memref<32x128xf32, #tpu.memory_space<vmem>>)
    %c32_i32_88 = arith.constant 32 : i32
    %109 = arith.muli %arg1, %c32_i32_88 : i32
    %c0_i32_89 = arith.constant 0 : i32
    %c13_i32 = arith.constant 13 : i32
    %c13_i32_90 = arith.constant 13 : i32
    %c0_i32_91 = arith.constant 0 : i32
    %110 = tpu.memref_slice %arg5[%c0_i32_89, %109, %c0_i32_91] : memref<20x96x128xf32, #tpu.memory_space<any>> -> memref<1x32x128xf32, #tpu.memory_space<any>>
    %111 = tpu.memref_squeeze %110 : memref<1x32x128xf32, #tpu.memory_space<any>> -> memref<32x128xf32, #tpu.memory_space<any>>
    %c0_i32_92 = arith.constant 0 : i32
    %c0_i32_93 = arith.constant 0 : i32
    %112 = tpu.memref_slice %arg7[%17, %c13_i32, %c0_i32_92, %c0_i32_93] : memref<2x16x32x128xf32, #tpu.memory_space<vmem>> -> memref<1x1x32x128xf32, #tpu.memory_space<vmem>>
    %113 = tpu.memref_squeeze %112 : memref<1x1x32x128xf32, #tpu.memory_space<vmem>> -> memref<32x128xf32, #tpu.memory_space<vmem>>
    %114 = tpu.memref_slice %arg8[%17, %c13_i32_90] : memref<2x16x!tpu.dma_semaphore, #tpu.memory_space<semaphore_mem>> -> memref<1x1x!tpu.dma_semaphore, #tpu.memory_space<semaphore_mem>>
    %115 = tpu.memref_squeeze %114 : memref<1x1x!tpu.dma_semaphore, #tpu.memory_space<semaphore_mem>> -> memref<!tpu.dma_semaphore, #tpu.memory_space<semaphore_mem>>
    tpu.wait_dma2 semaphore(%115 : memref<!tpu.dma_semaphore, #tpu.memory_space<semaphore_mem>>) src(%111 : memref<32x128xf32, #tpu.memory_space<any>>) dst(%113 : memref<32x128xf32, #tpu.memory_space<vmem>>)
    %c32_i32_94 = arith.constant 32 : i32
    %116 = arith.muli %arg1, %c32_i32_94 : i32
    %c0_i32_95 = arith.constant 0 : i32
    %c14_i32 = arith.constant 14 : i32
    %c14_i32_96 = arith.constant 14 : i32
    %c0_i32_97 = arith.constant 0 : i32
    %117 = tpu.memref_slice %arg5[%c0_i32_95, %116, %c0_i32_97] : memref<20x96x128xf32, #tpu.memory_space<any>> -> memref<1x32x128xf32, #tpu.memory_space<any>>
    %118 = tpu.memref_squeeze %117 : memref<1x32x128xf32, #tpu.memory_space<any>> -> memref<32x128xf32, #tpu.memory_space<any>>
    %c0_i32_98 = arith.constant 0 : i32
    %c0_i32_99 = arith.constant 0 : i32
    %119 = tpu.memref_slice %arg7[%17, %c14_i32, %c0_i32_98, %c0_i32_99] : memref<2x16x32x128xf32, #tpu.memory_space<vmem>> -> memref<1x1x32x128xf32, #tpu.memory_space<vmem>>
    %120 = tpu.memref_squeeze %119 : memref<1x1x32x128xf32, #tpu.memory_space<vmem>> -> memref<32x128xf32, #tpu.memory_space<vmem>>
    %121 = tpu.memref_slice %arg8[%17, %c14_i32_96] : memref<2x16x!tpu.dma_semaphore, #tpu.memory_space<semaphore_mem>> -> memref<1x1x!tpu.dma_semaphore, #tpu.memory_space<semaphore_mem>>
    %122 = tpu.memref_squeeze %121 : memref<1x1x!tpu.dma_semaphore, #tpu.memory_space<semaphore_mem>> -> memref<!tpu.dma_semaphore, #tpu.memory_space<semaphore_mem>>
    tpu.wait_dma2 semaphore(%122 : memref<!tpu.dma_semaphore, #tpu.memory_space<semaphore_mem>>) src(%118 : memref<32x128xf32, #tpu.memory_space<any>>) dst(%120 : memref<32x128xf32, #tpu.memory_space<vmem>>)
    %c32_i32_100 = arith.constant 32 : i32
    %123 = arith.muli %arg1, %c32_i32_100 : i32
    %c0_i32_101 = arith.constant 0 : i32
    %c15_i32 = arith.constant 15 : i32
    %c15_i32_102 = arith.constant 15 : i32
    %c0_i32_103 = arith.constant 0 : i32
    %124 = tpu.memref_slice %arg5[%c0_i32_101, %123, %c0_i32_103] : memref<20x96x128xf32, #tpu.memory_space<any>> -> memref<1x32x128xf32, #tpu.memory_space<any>>
    %125 = tpu.memref_squeeze %124 : memref<1x32x128xf32, #tpu.memory_space<any>> -> memref<32x128xf32, #tpu.memory_space<any>>
    %c0_i32_104 = arith.constant 0 : i32
    %c0_i32_105 = arith.constant 0 : i32
    %126 = tpu.memref_slice %arg7[%17, %c15_i32, %c0_i32_104, %c0_i32_105] : memref<2x16x32x128xf32, #tpu.memory_space<vmem>> -> memref<1x1x32x128xf32, #tpu.memory_space<vmem>>
    %127 = tpu.memref_squeeze %126 : memref<1x1x32x128xf32, #tpu.memory_space<vmem>> -> memref<32x128xf32, #tpu.memory_space<vmem>>
    %128 = tpu.memref_slice %arg8[%17, %c15_i32_102] : memref<2x16x!tpu.dma_semaphore, #tpu.memory_space<semaphore_mem>> -> memref<1x1x!tpu.dma_semaphore, #tpu.memory_space<semaphore_mem>>
    %129 = tpu.memref_squeeze %128 : memref<1x1x!tpu.dma_semaphore, #tpu.memory_space<semaphore_mem>> -> memref<!tpu.dma_semaphore, #tpu.memory_space<semaphore_mem>>
    tpu.wait_dma2 semaphore(%129 : memref<!tpu.dma_semaphore, #tpu.memory_space<semaphore_mem>>) src(%125 : memref<32x128xf32, #tpu.memory_space<any>>) dst(%127 : memref<32x128xf32, #tpu.memory_space<vmem>>)
    %c0 = arith.constant 0 : index
    %130 = memref.load %arg3[%c0] : memref<1xf32, #tpu.memory_space<smem>>
    %c0_106 = arith.constant 0 : index
    %c0_107 = arith.constant 0 : index
    %c0_108 = arith.constant 0 : index
    %131 = vector.load %arg4[%c0_106, %c0_107, %c0_108] : memref<16x32x128xf32, #tpu.memory_space<vmem>>, vector<16x32x128xf32>
    %132 = vector.broadcast %130 : f32 to vector<16x32x128xf32>
    %133 = arith.mulf %132, %131 : vector<16x32x128xf32>
    %cst = arith.constant 1.000000e+00 : f32
    %134 = arith.subf %cst, %130 : f32
    %135 = arith.index_cast %17 : i32 to index
    %c0_109 = arith.constant 0 : index
    %c0_110 = arith.constant 0 : index
    %c0_111 = arith.constant 0 : index
    %136 = vector.load %arg7[%135, %c0_109, %c0_110, %c0_111] : memref<2x16x32x128xf32, #tpu.memory_space<vmem>>, vector<1x16x32x128xf32>
    %137 = vector.shape_cast %136 : vector<1x16x32x128xf32> to vector<16x32x128xf32>
    %138 = vector.broadcast %134 : f32 to vector<16x32x128xf32>
    %139 = arith.mulf %138, %137 : vector<16x32x128xf32>
    %140 = arith.addf %133, %139 : vector<16x32x128xf32>
    %c0_112 = arith.constant 0 : index
    %c0_113 = arith.constant 0 : index
    %c0_114 = arith.constant 0 : index
    %141 = vector.load %arg6[%c0_112, %c0_113, %c0_114] : memref<16x32x128xf32, #tpu.memory_space<vmem>>, vector<16x32x128xf32>
    tpu.vector_store %arg6[%c0_112, %c0_113, %c0_114], %140 {strides = array<i32>} : memref<16x32x128xf32, #tpu.memory_space<vmem>>, vector<16x32x128xf32>,
    return
  }
  func.func @transform_0(%arg0: i32, %arg1: i32, %arg2: memref<20xi32, #tpu.memory_space<smem>>) -> i32 {
    %c0_i32 = arith.constant 0 : i32
    %c0_i32_0 = arith.constant 0 : i32
    return %c0_i32 : i32
  }
  func.func @transform_1(%arg0: i32, %arg1: i32, %arg2: memref<20xi32, #tpu.memory_space<smem>>) -> (i32, i32, i32) {
    %c0_i32 = arith.constant 0 : i32
    %c0_i32_0 = arith.constant 0 : i32
    return %arg0, %arg1, %c0_i32 : i32, i32, i32
  }
  func.func @transform_3(%arg0: i32, %arg1: i32, %arg2: memref<20xi32, #tpu.memory_space<smem>>) -> (i32, i32, i32) {
    %c0_i32 = arith.constant 0 : i32
    %c0_i32_0 = arith.constant 0 : i32
    return %arg0, %arg1, %c0_i32 : i32, i32, i32
  }
}

</mosaic_0001>

<llo_original>
// kernel: tpu_custom_call.1
$region0: #{tpu_custom_call.1}
  #allocation0 [shape = 'u32[]', space=smem, size = 0x4, offset = 0x4, fixed_abs, tag = 'smem constant byte address 0x4 - core index']
  #allocation1 [shape = 'u32[72,128]{1,0:T(1,128)}', space=vmem, size = 0x9000, scoped, tag = 'internal scratch']
  #allocation2 [shape = 'f32[2,16,32,128]{3,2,1,0:T(8,128)}', space=vmem, size = 0x80000, scoped, tag = 'scratch operand']
  #allocation3 [shape = 's32[32]{0}', space=sflag, size = 0x80, scoped, tag = 'scratch operand']
  #allocation4 [shape = 's32[1]{0}', space=sflag, size = 0x4, scoped, tag = 'scoped memory for tpu_custom_call.1']
  #allocation5 [shape = 'u8[512]{0}', space=smem, size = 0x200, scoped, tag = 'prefetched SMEM operand 0']
  #allocation6 [shape = 'f32[1]{0:T(128)S(6)}', space=smem, size = 0x200, scoped, tag = 'scoped memory for tpu_custom_call.1']
  #allocation11 [shape = 's32[]', space=sflag, size = 0x4, offset = 0, fixed_abs, tag = 'sflag constant byte address 0x0 - dummy sync flag']
  #allocation13 [shape = 's32[]', space=sflag, size = 0x4, offset = 0, fixed_abs, tag = 'sflag constant byte address 0x0 - dummy sync flag']
  #allocation14 [shape = 's32[]', space=sflag, size = 0x4, offset = 0, fixed_abs, tag = 'sflag constant byte address 0x0 - dummy sync flag']
  #allocation15 [shape = 'u32[]', space=smem, size = 0x4, offset = 0x44, fixed_abs, tag = 'smem constant byte address 0x44 - assertion arg 0']
  #allocation16 [shape = 'u32[]', space=smem, size = 0x4, offset = 0x48, fixed_abs, tag = 'smem constant byte address 0x48 - assertion arg 1']
  #allocation17 [shape = 's32[]', space=sflag, size = 0x4, offset = 0, fixed_abs, tag = 'sflag constant byte address 0x0 - dummy sync flag']
  #allocation18 [shape = 's32[]', space=sflag, size = 0x4, offset = 0, fixed_abs, tag = 'sflag constant byte address 0x0 - dummy sync flag']
  #allocation19 [shape = 's32[]', space=sflag, size = 0x4, offset = 0, fixed_abs, tag = 'sflag constant byte address 0x0 - dummy sync flag']
  #allocation20 [shape = 's32[]', space=sflag, size = 0x4, offset = 0, fixed_abs, tag = 'sflag constant byte address 0x0 - dummy sync flag']
  #allocation21 [shape = 's32[]', space=sflag, size = 0x4, offset = 0, fixed_abs, tag = 'sflag constant byte address 0x0 - dummy sync flag']
  #allocation22 [shape = 's32[]', space=sflag, size = 0x4, offset = 0, fixed_abs, tag = 'sflag constant byte address 0x0 - dummy sync flag']
  #allocation23 [shape = 's32[]', space=sflag, size = 0x4, offset = 0, fixed_abs, tag = 'sflag constant byte address 0x0 - dummy sync flag']
  #allocation24 [shape = 's32[]', space=sflag, size = 0x4, offset = 0, fixed_abs, tag = 'sflag constant byte address 0x0 - dummy sync flag']
  #allocation25 [shape = 's32[]', space=sflag, size = 0x4, offset = 0, fixed_abs, tag = 'sflag constant byte address 0x0 - dummy sync flag']
  #allocation26 [shape = 's32[]', space=sflag, size = 0x4, offset = 0, fixed_abs, tag = 'sflag constant byte address 0x0 - dummy sync flag']
  #allocation27 [shape = 's32[]', space=sflag, size = 0x4, offset = 0, fixed_abs, tag = 'sflag constant byte address 0x0 - dummy sync flag']
  #allocation28 [shape = 's32[]', space=sflag, size = 0x4, offset = 0, fixed_abs, tag = 'sflag constant byte address 0x0 - dummy sync flag']
  #allocation29 [shape = 's32[]', space=sflag, size = 0x4, offset = 0, fixed_abs, tag = 'sflag constant byte address 0x0 - dummy sync flag']
  #allocation30 [shape = 's32[]', space=sflag, size = 0x4, offset = 0, fixed_abs, tag = 'sflag constant byte address 0x0 - dummy sync flag']
  #allocation31 [shape = 's32[]', space=sflag, size = 0x4, offset = 0, fixed_abs, tag = 'sflag constant byte address 0x0 - dummy sync flag']
  #allocation32 [shape = 's32[]', space=sflag, size = 0x4, offset = 0, fixed_abs, tag = 'sflag constant byte address 0x0 - dummy sync flag']
  #allocation33 [shape = 's32[]', space=sflag, size = 0x4, offset = 0, fixed_abs, tag = 'sflag constant byte address 0x0 - dummy sync flag']
  #allocation34 [shape = 's32[]', space=sflag, size = 0x4, offset = 0, fixed_abs, tag = 'sflag constant byte address 0x0 - dummy sync flag']
  #allocation35 [shape = 's32[]', space=sflag, size = 0x4, offset = 0, fixed_abs, tag = 'sflag constant byte address 0x0 - dummy sync flag']
  #allocation36 [shape = 's32[]', space=sflag, size = 0x4, offset = 0, fixed_abs, tag = 'sflag constant byte address 0x0 - dummy sync flag']
  #allocation37 [shape = 's32[]', space=sflag, size = 0x4, offset = 0, fixed_abs, tag = 'sflag constant byte address 0x0 - dummy sync flag']
  #allocation38 [shape = 's32[]', space=sflag, size = 0x4, offset = 0, fixed_abs, tag = 'sflag constant byte address 0x0 - dummy sync flag']
  #allocation39 [shape = 's32[]', space=sflag, size = 0x4, offset = 0, fixed_abs, tag = 'sflag constant byte address 0x0 - dummy sync flag']
  #allocation40 [shape = 's32[]', space=sflag, size = 0x4, offset = 0, fixed_abs, tag = 'sflag constant byte address 0x0 - dummy sync flag']
  #allocation41 [shape = 's32[]', space=sflag, size = 0x4, offset = 0, fixed_abs, tag = 'sflag constant byte address 0x0 - dummy sync flag']
  #allocation42 [shape = 's32[]', space=sflag, size = 0x4, offset = 0, fixed_abs, tag = 'sflag constant byte address 0x0 - dummy sync flag']
  #allocation43 [shape = 's32[]', space=sflag, size = 0x4, offset = 0, fixed_abs, tag = 'sflag constant byte address 0x0 - dummy sync flag']
  #allocation44 [shape = 's32[]', space=sflag, size = 0x4, offset = 0, fixed_abs, tag = 'sflag constant byte address 0x0 - dummy sync flag']
  #allocation45 [shape = 's32[]', space=sflag, size = 0x4, offset = 0, fixed_abs, tag = 'sflag constant byte address 0x0 - dummy sync flag']
  #allocation46 [shape = 's32[]', space=sflag, size = 0x4, offset = 0, fixed_abs, tag = 'sflag constant byte address 0x0 - dummy sync flag']
  #allocation47 [shape = 's32[]', space=sflag, size = 0x4, offset = 0, fixed_abs, tag = 'sflag constant byte address 0x0 - dummy sync flag']
  #allocation48 [shape = 's32[]', space=sflag, size = 0x4, offset = 0, fixed_abs, tag = 'sflag constant byte address 0x0 - dummy sync flag']
  #allocation49 [shape = 's32[]', space=sflag, size = 0x4, offset = 0, fixed_abs, tag = 'sflag constant byte address 0x0 - dummy sync flag']
  #allocation50 [shape = 's32[]', space=sflag, size = 0x4, offset = 0, fixed_abs, tag = 'sflag constant byte address 0x0 - dummy sync flag']
  #allocation51 [shape = 's32[]', space=sflag, size = 0x4, offset = 0, fixed_abs, tag = 'sflag constant byte address 0x0 - dummy sync flag']
  #allocation52 [shape = 's32[]', space=sflag, size = 0x4, offset = 0, fixed_abs, tag = 'sflag constant byte address 0x0 - dummy sync flag']
  #allocation53 [shape = 's32[]', space=sflag, size = 0x4, offset = 0, fixed_abs, tag = 'sflag constant byte address 0x0 - dummy sync flag']
  #allocation54 [shape = 's32[]', space=sflag, size = 0x4, offset = 0, fixed_abs, tag = 'sflag constant byte address 0x0 - dummy sync flag']
  #allocation55 [shape = 's32[]', space=sflag, size = 0x4, offset = 0, fixed_abs, tag = 'sflag constant byte address 0x0 - dummy sync flag']
  #allocation56 [shape = 's32[]', space=sflag, size = 0x4, offset = 0, fixed_abs, tag = 'sflag constant byte address 0x0 - dummy sync flag']
  #allocation57 [shape = 's32[]', space=sflag, size = 0x4, offset = 0, fixed_abs, tag = 'sflag constant byte address 0x0 - dummy sync flag']
  #allocation58 [shape = 's32[]', space=sflag, size = 0x4, offset = 0, fixed_abs, tag = 'sflag constant byte address 0x0 - dummy sync flag']
  #allocation59 [shape = 's32[]', space=sflag, size = 0x4, offset = 0, fixed_abs, tag = 'sflag constant byte address 0x0 - dummy sync flag']
  #allocation60 [shape = 's32[]', space=sflag, size = 0x4, offset = 0, fixed_abs, tag = 'sflag constant byte address 0x0 - dummy sync flag']
  #allocation61 [shape = 's32[]', space=sflag, size = 0x4, offset = 0, fixed_abs, tag = 'sflag constant byte address 0x0 - dummy sync flag']
  #allocation62 [shape = 's32[]', space=sflag, size = 0x4, offset = 0, fixed_abs, tag = 'sflag constant byte address 0x0 - dummy sync flag']
  #allocation63 [shape = 's32[]', space=sflag, size = 0x4, offset = 0, fixed_abs, tag = 'sflag constant byte address 0x0 - dummy sync flag']
  #allocation64 [shape = 's32[]', space=sflag, size = 0x4, offset = 0, fixed_abs, tag = 'sflag constant byte address 0x0 - dummy sync flag']
  #allocation65 [shape = 's32[]', space=sflag, size = 0x4, offset = 0, fixed_abs, tag = 'sflag constant byte address 0x0 - dummy sync flag']
  #allocation66 [shape = 's32[]', space=sflag, size = 0x4, offset = 0, fixed_abs, tag = 'sflag constant byte address 0x0 - dummy sync flag']
  #allocation67 [shape = 's32[]', space=sflag, size = 0x4, offset = 0, fixed_abs, tag = 'sflag constant byte address 0x0 - dummy sync flag']
  #allocation68 [shape = 's32[]', space=sflag, size = 0x4, offset = 0, fixed_abs, tag = 'sflag constant byte address 0x0 - dummy sync flag']
  #allocation69 [shape = 's32[]', space=sflag, size = 0x4, offset = 0, fixed_abs, tag = 'sflag constant byte address 0x0 - dummy sync flag']
  #allocation70 [shape = 's32[]', space=sflag, size = 0x4, offset = 0, fixed_abs, tag = 'sflag constant byte address 0x0 - dummy sync flag']
  #allocation71 [shape = 's32[]', space=sflag, size = 0x4, offset = 0, fixed_abs, tag = 'sflag constant byte address 0x0 - dummy sync flag']
  #allocation72 [shape = 's32[]', space=sflag, size = 0x4, offset = 0, fixed_abs, tag = 'sflag constant byte address 0x0 - dummy sync flag']
  #allocation73 [shape = 's32[]', space=sflag, size = 0x4, offset = 0, fixed_abs, tag = 'sflag constant byte address 0x0 - dummy sync flag']
  #allocation74 [shape = 's32[]', space=sflag, size = 0x4, offset = 0, fixed_abs, tag = 'sflag constant byte address 0x0 - dummy sync flag']
  #allocation75 [shape = 's32[]', space=sflag, size = 0x4, offset = 0, fixed_abs, tag = 'sflag constant byte address 0x0 - dummy sync flag']
  #allocation76 [shape = 's32[]', space=sflag, size = 0x4, offset = 0, fixed_abs, tag = 'sflag constant byte address 0x0 - dummy sync flag']
  #allocation77 [shape = 's32[]', space=sflag, size = 0x4, offset = 0, fixed_abs, tag = 'sflag constant byte address 0x0 - dummy sync flag']
  #allocation78 [shape = 's32[]', space=sflag, size = 0x4, offset = 0, fixed_abs, tag = 'sflag constant byte address 0x0 - dummy sync flag']
  #allocation79 [shape = 's32[]', space=sflag, size = 0x4, offset = 0, fixed_abs, tag = 'sflag constant byte address 0x0 - dummy sync flag']
  %s0 = inlined_call_operand.vmem [shape: s32[20], index: 0, kind: input, shape index: {}]
  %s1 = inlined_call_operand.<no memory space> [shape: f32[1], index: 1, kind: input, shape index: {}]
  %s2 = inlined_call_operand.hbm [shape: f32[20,96,128], index: 2, kind: input, shape index: {}]
  %s3 = inlined_call_operand.hbm [shape: f32[20,96,128], index: 3, kind: input, shape index: {}]
  %s4 = inlined_call_operand.hbm [shape: f32[20,96,128], index: 4, kind: output, shape index: {}]
  %s5 = sld [smem:[#allocation0]]
  $region181: #{tpu_custom_call.1} parent=0
    _
  %s7 = ssub.s32 1, %s5
  %s8 = scalar_select 0, %s7, %s5
  %s10 = sshll.u32 %s0, 4
  %s11 = int_to_ptr.vmem [resolvable:$true] %s10
  %13 = dma.vmem_to_smem %s11, 16, [#allocation5], [#allocation4]
  %14 = sst [smem:[#allocation6]] %s1
  %16 = dma.done [#allocation4], 16
  %17 = sfence
  $region1: #{tpu_custom_call.1} parent=0
    #allocation7 [shape = 'u8[524288]{0}', space=vmem, size = 0x80000, scoped, tag = 'input window, operand 2']
    #allocation8 [shape = 's32[2]{0}', space=sflag, size = 0x8, scoped, tag = 'scoped memory for tpu_custom_call.1']
    #allocation9 [shape = 's32[2]{0}', space=sflag, size = 0x8, scoped, tag = 'scoped memory for tpu_custom_call.1']
    #allocation10 [shape = 'u8[524288]{0}', space=vmem, size = 0x80000, scoped, tag = 'output window, operand 0']
    %18 = vsyncpa [#allocation8], 0
    %s19 = scalar_lea.sflag [#allocation8], 1
    %20 = vsyncpa %s19, 0
    %21 = vsyncpa [#allocation9], 0
    %s22 = scalar_lea.sflag [#allocation9], 1
    %23 = vsyncpa %s22, 0
    loop: start=0, step=1, limit=8
    $region2: #{tpu_custom_call.1} parent=1 // loop_pre_header
      _
    $region3: #{tpu_custom_call.1} parent=1 // loop_header
      %s25 = sphi 0, %s29
      %p26 = scmp.ge.s32.totalorder %s25, 8
      %s32 = sphi 0, %s44
      %s33 = sphi 0, %s40
      %s34 = sphi 0, %s32
      %s35 = sphi 0, %s33
      %s36 = sphi 0, %s34
      %s37 = sphi 0, %s35
      %s45 = sphi 0, %s45
      %s47 = sphi 0, %s45
      %s48 = sphi 0, %s47
      %s62 = sphi 0, %s48
      %s70 = sphi 0, %s72
      %s73 = sphi 0, %s70
      %s74 = sphi 0, %s73
      %s90 = sphi 0, %s74
      %s98 = sphi 0, %s100
      %s101 = sphi 0, %s98
      %s102 = sphi 0, %s101
      %s118 = sphi 0, %s102
    $region4: #{tpu_custom_call.1} parent=1 // loop_header_branch
      %28 = sbr.rel (%p26) target = $region8
    $region5: #{tpu_custom_call.1} parent=1 // loop_body
      %s30 = ssub.s32 %s25, 1
      %s31 = ssub.s32 %s25, 2
      %s38 = sadd.s32 1, %s33
      %p39 = scmp.ge.s32.totalorder %s38, 3
      %s40 = scalar_select %p39, 0, %s38
      %s41 = sadd.s32 1, %s32
      %s42 = scalar_select %p39, %s41, %s32
      %p43 = scmp.ge.s32.totalorder %s42, 2
      %s44 = scalar_select %p43, 0, %s42
      %s46 = sadd.s32 %s45, 1
      %p49 = scmp.eq.s32.totalorder %s25, 5
      %p50 = scmp.ne.s32.totalorder %s45, %s47
      %p51 = scmp.eq.s32.totalorder %s25, 0
      %p52 = por %p50, %p51
      %p53 = scmp.ne.s32.totalorder %s45, %s47
      %p54 = scmp.eq.s32.totalorder %s30, 5
      %p55 = por %p53, %p54
      %p56 = scmp.ne.s32.totalorder %s47, %s48
      %p57 = scmp.eq.s32.totalorder %s30, 0
      %p58 = por %p56, %p57
      %p59 = scmp.ne.s32.totalorder %s47, %s48
      %p60 = scmp.eq.s32.totalorder %s31, 5
      %p61 = por %p59, %p60
      %p63 = scmp.ne.s32.totalorder %s48, %s62
      %p64 = scmp.eq.s32.totalorder %s31, 0
      %p65 = por %p63, %p64
      %s66 = ssub.s32 %s32, %s44
      %s67 = ssub.s32 %s33, %s40
      %s68 = sor.u32 %s66, %s67
      %p69 = scmp.eq.s32.totalorder %s68, 0
      %s71 = sadd.s32 %s70, 1
      %s72 = scalar_select %p69, %s70, %s71
      %p75 = pneg %p69
      %p76 = scmp.eq.s32.totalorder %s25, 5
      %p77 = por %p75, %p76
      %p78 = scmp.ne.s32.totalorder %s70, %s73
      %p79 = scmp.eq.s32.totalorder %s25, 0
      %p80 = por %p78, %p79
      %p81 = scmp.ne.s32.totalorder %s70, %s73
      %p82 = scmp.eq.s32.totalorder %s30, 5
      %p83 = por %p81, %p82
      %p84 = scmp.ne.s32.totalorder %s73, %s74
      %p85 = scmp.eq.s32.totalorder %s30, 0
      %p86 = por %p84, %p85
      %p87 = scmp.ne.s32.totalorder %s73, %s74
      %p88 = scmp.eq.s32.totalorder %s31, 5
      %p89 = por %p87, %p88
      %p91 = scmp.ne.s32.totalorder %s74, %s90
      %p92 = scmp.eq.s32.totalorder %s31, 0
      %p93 = por %p91, %p92
      %s94 = ssub.s32 %s32, %s44
      %s95 = ssub.s32 %s33, %s40
      %s96 = sor.u32 %s94, %s95
      %p97 = scmp.eq.s32.totalorder %s96, 0
      %s99 = sadd.s32 %s98, 1
      %s100 = scalar_select %p97, %s98, %s99
      %p103 = pneg %p97
      %p104 = scmp.eq.s32.totalorder %s25, 5
      %p105 = por %p103, %p104
      %p106 = scmp.ne.s32.totalorder %s98, %s101
      %p107 = scmp.eq.s32.totalorder %s25, 0
      %p108 = por %p106, %p107
      %p109 = scmp.ne.s32.totalorder %s98, %s101
      %p110 = scmp.eq.s32.totalorder %s30, 5
      %p111 = por %p109, %p110
      %p112 = scmp.ne.s32.totalorder %s101, %s102
      %p113 = scmp.eq.s32.totalorder %s30, 0
      %p114 = por %p112, %p113
      %p115 = scmp.ne.s32.totalorder %s101, %s102
      %p116 = scmp.eq.s32.totalorder %s31, 5
      %p117 = por %p115, %p116
      %p119 = scmp.ne.s32.totalorder %s102, %s118
      %p120 = scmp.eq.s32.totalorder %s31, 0
      %p121 = por %p119, %p120
      %p122 = scmp.le.s32.totalorder 1, %s25
      %p123 = scmp.lt.s32.totalorder %s25, 7
      %p124 = pnand %p122, %p123
      %p125 = pneg %p124
      // Predicated region
      $region9: #{tpu_custom_call.1} parent=5 // pred_check
        _
      $region10: #{tpu_custom_call.1} parent=5 // pred_check_branch
        %127 = sbr.rel (%p124) target = $region12
      $region11: #{tpu_custom_call.1} parent=5 // pred_region
        %s128 = ssub.s32 %s25, 1
        // Predicated region
        $region13: #{tpu_custom_call.1} parent=11 // pred_check
          %p129 = pneg %p58
        $region14: #{tpu_custom_call.1} parent=11 // pred_check_branch
          %131 = sbr.rel (%p129) target = $region16
        $region15: #{tpu_custom_call.1} parent=11 // pred_region
          _
        $region16: #{tpu_custom_call.1} parent=11 // pred_fallthru
          _
      $region12: #{tpu_custom_call.1} parent=5 // pred_fallthru
        _
      %p132 = scmp.lt.s32.totalorder %s25, 6
      // Predicated region
      $region17: #{tpu_custom_call.1} parent=5 // pred_check
        %p133 = pneg %p132
      $region18: #{tpu_custom_call.1} parent=5 // pred_check_branch
        %135 = sbr.rel (%p133) target = $region20
      $region19: #{tpu_custom_call.1} parent=5 // pred_region
        // Predicated region
        $region21: #{tpu_custom_call.1} parent=19 // pred_check
          %p136 = pneg %p80
        $region22: #{tpu_custom_call.1} parent=19 // pred_check_branch
          %138 = sbr.rel (%p136) target = $region24
        $region23: #{tpu_custom_call.1} parent=19 // pred_region
          #allocation12 [shape = 'u32[6]{0}', space=smem, size = 0x18, scoped, tag = 'DMA stride descriptor']
          %s139 = sand.u32 %s70, 1
          %s140 = scalar_lea.sflag [#allocation8], %s139
          %s141 = sand.u32 %s70, 1
          %s142 = smul.addr %s141, 512
          %s143 = scalar_lea.vmem [#allocation7], %s142
          %s144 = smul.u32 16, %s32
          %s145 = smul.u32 4, %s33
          %s146 = ssub.s32 20, %s144
          %p147 = scmp.lt.s32.totalorder %s146, 16
          %s148 = scalar_select %p147, %s146, 16
          %s149 = smul.u32 8, %s148
          %s150 = smul.u32 %s149, 4
          %s151 = ssub.s32 512, %s150
          %s152 = sshll.u32 %s151, 4
          %153 = vsyncadd %s140, %s152
          %p154 = scmp.ne.s32.totalorder 0, %s150
          %s155 = smul.addr %s144, 12
          %s156 = sadd.s32 %s145, %s155
          %s157 = smul.addr %s156, 8
          %s158 = scalar_lea.hbm %s2, %s157
          %s159 = smul.u32 32, %s148
          %s161 = sshll.u32 1, 14
          %s162 = sxor.u32 4294967295, %s161
          %s164 = sld [smem:[#allocation0]]
          %s165 = sadd.s32 2, %s164
          %s167 = sshll.u32 7, 26
          %s168 = sxor.u32 4294967295, %s167
          %s169 = sand.u32 0, %s168
          %s170 = sshll.u32 %s165, 26
          %s171 = sor.u32 %s169, %s170
          %s172 = sshll.u32 %s158, 4
          %s173 = int_to_ptr.hbm [resolvable:$true] %s172
          %s174 = sshll.u32 %s143, 4
          %s175 = int_to_ptr.vmem [resolvable:$true] %s174
          %s176 = sshll.u32 %s159, 4
          %181 = sst [smem:[#allocation12]] 1536
          %s182 = scalar_lea.smem [#allocation12], 1
          %183 = sst [smem:[%s182]] 512
          %s184 = scalar_lea.smem [#allocation12], 2
          %185 = sst [smem:[%s184]] 4
          %s186 = scalar_lea.smem [#allocation12], 3
          %187 = sst [smem:[%s186]] 128
          %s188 = scalar_lea.smem [#allocation12], 4
          %189 = sst [smem:[%s188]] 128
          %s190 = scalar_lea.smem [#allocation12], 5
          %191 = sst [smem:[%s190]] 8
          %193 = dma.general (%p154), %s173, %s176, %s175, %s140, [#allocation11], [#allocation12], %s171, 0
        $region24: #{tpu_custom_call.1} parent=19 // pred_fallthru
          _
      $region20: #{tpu_custom_call.1} parent=5 // pred_fallthru
        _
      %p194 = scmp.le.s32.totalorder 1, %s25
      %p195 = scmp.lt.s32.totalorder %s25, 7
      %p196 = pnand %p194, %p195
      %p197 = pneg %p196
      // Predicated region
      $region25: #{tpu_custom_call.1} parent=5 // pred_check
        _
      $region26: #{tpu_custom_call.1} parent=5 // pred_check_branch
        %199 = sbr.rel (%p196) target = $region28
      $region27: #{tpu_custom_call.1} parent=5 // pred_region
        %s200 = ssub.s32 %s25, 1
        %s201 = sand.u32 %s73, 1
        %s202 = scalar_lea.sflag [#allocation8], %s201
        %s203 = sand.u32 %s73, 1
        %s204 = smul.addr %s203, 512
        %s205 = scalar_lea.vmem [#allocation7], %s204
        // Predicated region
        $region29: #{tpu_custom_call.1} parent=27 // pred_check
          %p206 = pneg %p86
        $region30: #{tpu_custom_call.1} parent=27 // pred_check_branch
          %208 = sbr.rel (%p206) target = $region32
        $region31: #{tpu_custom_call.1} parent=27 // pred_region
          %210 = dma.done %s202, 8192
        $region32: #{tpu_custom_call.1} parent=27 // pred_fallthru
          _
        %p211 = pneg %p58
        %p212 = pneg %p55
        %s213 = sand.u32 %s73, 1
        %s214 = scalar_lea.sflag [#allocation8], %s213
        %s215 = sand.u32 %s73, 1
        %s216 = smul.addr %s215, 512
        %s217 = scalar_lea.vmem [#allocation7], %s216
        %p218 = pneg %p86
        %p219 = pneg %p83
        %p220 = pneg %p114
        %p221 = pneg %p111
        %s222 = sand.u32 %s101, 1
        %s223 = scalar_lea.sflag [#allocation9], %s222
        %s224 = sand.u32 %s101, 1
        %s225 = smul.addr %s224, 512
        %s226 = scalar_lea.vmem [#allocation10], %s225
        %s227 = smul.u32 16, %s34
        %s228 = smul.u32 4, %s35
        %s229 = ssub.s32 20, %s227
        %p230 = scmp.lt.s32.totalorder %s229, 16
        %s231 = scalar_select %p230, %s229, 16
        %s232 = smul.u32 8, %s231
        %s233 = smul.u32 %s232, 4
        %s234 = smul.u32 16, %s34
        %s235 = smul.u32 4, %s35
        %s236 = ssub.s32 20, %s234
        %p237 = scmp.lt.s32.totalorder %s236, 16
        %s238 = scalar_select %p237, %s236, 16
        %s239 = smul.u32 8, %s238
        %s240 = smul.u32 %s239, 4
        %s241 = smul.u32 %s34, 16
        %p242 = scmp.eq.s32.totalorder %s35, 0
        // Predicated region
        $region33: #{tpu_custom_call.1} parent=27 // pred_check
          %p243 = pneg %p242
        $region34: #{tpu_custom_call.1} parent=27 // pred_check_branch
          %245 = sbr.rel (%p243) target = $region36
        $region35: #{tpu_custom_call.1} parent=27 // pred_region
          %p246 = scmp.lt.s32.totalorder %s241, 19
          %s247 = scalar_select %p246, %s241, 19
          %s248 = sld [smem:[#allocation5 + %s247]]
          %s249 = smul.u32 %s248, 96
          %s250 = scalar_lea.hbm %s3, %s249
          // Predicated region
          $region37: #{tpu_custom_call.1} parent=35 // pred_check
            _
          $region38: #{tpu_custom_call.1} parent=35 // pred_check_branch
            %252 = sbr.rel target = $region40
          $region39: #{tpu_custom_call.1} parent=35 // pred_region
            %253 = sst [smem:[#allocation15]] [#allocation14]
            %254 = sst [smem:[#allocation16]] [#allocation13]
          $region40: #{tpu_custom_call.1} parent=35 // pred_fallthru
            _
          %256 = shalt.err (0)
          %s258 = sshll.u32 %s250, 4
          %s259 = int_to_ptr.hbm [resolvable:$true] %s258
          %s260 = sshll.u32 [#allocation2], 4
          %s261 = int_to_ptr.vmem [resolvable:$true] %s260
          %263 = dma.hbm_to_vmem [thread:$0]  %s259, 512, %s261, [#allocation3]
          %s264 = sadd.s32 %s241, 1
          %p265 = scmp.lt.s32.totalorder %s264, 19
          %s266 = scalar_select %p265, %s264, 19
          %s267 = sld [smem:[#allocation5 + %s266]]
          %s268 = smul.u32 %s267, 96
          %s269 = scalar_lea.hbm %s3, %s268
          %s270 = scalar_lea.vmem [#allocation2], 32
          %s271 = scalar_lea.sflag [#allocation3], 1
          // Predicated region
          $region41: #{tpu_custom_call.1} parent=35 // pred_check
            _
          $region42: #{tpu_custom_call.1} parent=35 // pred_check_branch
            %273 = sbr.rel target = $region44
          $region43: #{tpu_custom_call.1} parent=35 // pred_region
            %274 = sst [smem:[#allocation15]] [#allocation18]
            %275 = sst [smem:[#allocation16]] [#allocation17]
          $region44: #{tpu_custom_call.1} parent=35 // pred_fallthru
            _
          %277 = shalt.err (0)
          %s279 = sshll.u32 %s269, 4
          %s280 = int_to_ptr.hbm [resolvable:$true] %s279
          %s281 = sshll.u32 %s270, 4
          %s282 = int_to_ptr.vmem [resolvable:$true] %s281
          %284 = dma.hbm_to_vmem [thread:$0]  %s280, 512, %s282, %s271
          %s285 = sadd.s32 %s241, 2
          %p286 = scmp.lt.s32.totalorder %s285, 19
          %s287 = scalar_select %p286, %s285, 19
          %s288 = sld [smem:[#allocation5 + %s287]]
          %s289 = smul.u32 %s288, 96
          %s290 = scalar_lea.hbm %s3, %s289
          %s291 = scalar_lea.vmem [#allocation2], 64
          %s292 = scalar_lea.sflag [#allocation3], 2
          // Predicated region
          $region45: #{tpu_custom_call.1} parent=35 // pred_check
            _
          $region46: #{tpu_custom_call.1} parent=35 // pred_check_branch
            %294 = sbr.rel target = $region48
          $region47: #{tpu_custom_call.1} parent=35 // pred_region
            %295 = sst [smem:[#allocation15]] [#allocation20]
            %296 = sst [smem:[#allocation16]] [#allocation19]
          $region48: #{tpu_custom_call.1} parent=35 // pred_fallthru
            _
          %298 = shalt.err (0)
          %s300 = sshll.u32 %s290, 4
          %s301 = int_to_ptr.hbm [resolvable:$true] %s300
          %s302 = sshll.u32 %s291, 4
          %s303 = int_to_ptr.vmem [resolvable:$true] %s302
          %305 = dma.hbm_to_vmem [thread:$0]  %s301, 512, %s303, %s292
          %s306 = sadd.s32 %s241, 3
          %p307 = scmp.lt.s32.totalorder %s306, 19
          %s308 = scalar_select %p307, %s306, 19
          %s309 = sld [smem:[#allocation5 + %s308]]
          %s310 = smul.u32 %s309, 96
          %s311 = scalar_lea.hbm %s3, %s310
          %s312 = scalar_lea.vmem [#allocation2], 96
          %s313 = scalar_lea.sflag [#allocation3], 3
          // Predicated region
          $region49: #{tpu_custom_call.1} parent=35 // pred_check
            _
          $region50: #{tpu_custom_call.1} parent=35 // pred_check_branch
            %315 = sbr.rel target = $region52
          $region51: #{tpu_custom_call.1} parent=35 // pred_region
            %316 = sst [smem:[#allocation15]] [#allocation22]
            %317 = sst [smem:[#allocation16]] [#allocation21]
          $region52: #{tpu_custom_call.1} parent=35 // pred_fallthru
            _
          %319 = shalt.err (0)
          %s321 = sshll.u32 %s311, 4
          %s322 = int_to_ptr.hbm [resolvable:$true] %s321
          %s323 = sshll.u32 %s312, 4
          %s324 = int_to_ptr.vmem [resolvable:$true] %s323
          %326 = dma.hbm_to_vmem [thread:$0]  %s322, 512, %s324, %s313
          %s327 = sadd.s32 %s241, 4
          %p328 = scmp.lt.s32.totalorder %s327, 19
          %s329 = scalar_select %p328, %s327, 19
          %s330 = sld [smem:[#allocation5 + %s329]]
          %s331 = smul.u32 %s330, 96
          %s332 = scalar_lea.hbm %s3, %s331
          %s333 = scalar_lea.vmem [#allocation2], 128
          %s334 = scalar_lea.sflag [#allocation3], 4
          // Predicated region
          $region53: #{tpu_custom_call.1} parent=35 // pred_check
            _
          $region54: #{tpu_custom_call.1} parent=35 // pred_check_branch
            %336 = sbr.rel target = $region56
          $region55: #{tpu_custom_call.1} parent=35 // pred_region
            %337 = sst [smem:[#allocation15]] [#allocation24]
            %338 = sst [smem:[#allocation16]] [#allocation23]
          $region56: #{tpu_custom_call.1} parent=35 // pred_fallthru
            _
          %340 = shalt.err (0)
          %s342 = sshll.u32 %s332, 4
          %s343 = int_to_ptr.hbm [resolvable:$true] %s342
          %s344 = sshll.u32 %s333, 4
          %s345 = int_to_ptr.vmem [resolvable:$true] %s344
          %347 = dma.hbm_to_vmem [thread:$0]  %s343, 512, %s345, %s334
          %s348 = sadd.s32 %s241, 5
          %p349 = scmp.lt.s32.totalorder %s348, 19
          %s350 = scalar_select %p349, %s348, 19
          %s351 = sld [smem:[#allocation5 + %s350]]
          %s352 = smul.u32 %s351, 96
          %s353 = scalar_lea.hbm %s3, %s352
          %s354 = scalar_lea.vmem [#allocation2], 160
          %s355 = scalar_lea.sflag [#allocation3], 5
          // Predicated region
          $region57: #{tpu_custom_call.1} parent=35 // pred_check
            _
          $region58: #{tpu_custom_call.1} parent=35 // pred_check_branch
            %357 = sbr.rel target = $region60
          $region59: #{tpu_custom_call.1} parent=35 // pred_region
            %358 = sst [smem:[#allocation15]] [#allocation26]
            %359 = sst [smem:[#allocation16]] [#allocation25]
          $region60: #{tpu_custom_call.1} parent=35 // pred_fallthru
            _
          %361 = shalt.err (0)
          %s363 = sshll.u32 %s353, 4
          %s364 = int_to_ptr.hbm [resolvable:$true] %s363
          %s365 = sshll.u32 %s354, 4
          %s366 = int_to_ptr.vmem [resolvable:$true] %s365
          %368 = dma.hbm_to_vmem [thread:$0]  %s364, 512, %s366, %s355
          %s369 = sadd.s32 %s241, 6
          %p370 = scmp.lt.s32.totalorder %s369, 19
          %s371 = scalar_select %p370, %s369, 19
          %s372 = sld [smem:[#allocation5 + %s371]]
          %s373 = smul.u32 %s372, 96
          %s374 = scalar_lea.hbm %s3, %s373
          %s375 = scalar_lea.vmem [#allocation2], 192
          %s376 = scalar_lea.sflag [#allocation3], 6
          // Predicated region
          $region61: #{tpu_custom_call.1} parent=35 // pred_check
            _
          $region62: #{tpu_custom_call.1} parent=35 // pred_check_branch
            %378 = sbr.rel target = $region64
          $region63: #{tpu_custom_call.1} parent=35 // pred_region
            %379 = sst [smem:[#allocation15]] [#allocation28]
            %380 = sst [smem:[#allocation16]] [#allocation27]
          $region64: #{tpu_custom_call.1} parent=35 // pred_fallthru
            _
          %382 = shalt.err (0)
          %s384 = sshll.u32 %s374, 4
          %s385 = int_to_ptr.hbm [resolvable:$true] %s384
          %s386 = sshll.u32 %s375, 4
          %s387 = int_to_ptr.vmem [resolvable:$true] %s386
          %389 = dma.hbm_to_vmem [thread:$0]  %s385, 512, %s387, %s376
          %s390 = sadd.s32 %s241, 7
          %p391 = scmp.lt.s32.totalorder %s390, 19
          %s392 = scalar_select %p391, %s390, 19
          %s393 = sld [smem:[#allocation5 + %s392]]
          %s394 = smul.u32 %s393, 96
          %s395 = scalar_lea.hbm %s3, %s394
          %s396 = scalar_lea.vmem [#allocation2], 224
          %s397 = scalar_lea.sflag [#allocation3], 7
          // Predicated region
          $region65: #{tpu_custom_call.1} parent=35 // pred_check
            _
          $region66: #{tpu_custom_call.1} parent=35 // pred_check_branch
            %399 = sbr.rel target = $region68
          $region67: #{tpu_custom_call.1} parent=35 // pred_region
            %400 = sst [smem:[#allocation15]] [#allocation30]
            %401 = sst [smem:[#allocation16]] [#allocation29]
          $region68: #{tpu_custom_call.1} parent=35 // pred_fallthru
            _
          %403 = shalt.err (0)
          %s405 = sshll.u32 %s395, 4
          %s406 = int_to_ptr.hbm [resolvable:$true] %s405
          %s407 = sshll.u32 %s396, 4
          %s408 = int_to_ptr.vmem [resolvable:$true] %s407
          %410 = dma.hbm_to_vmem [thread:$0]  %s406, 512, %s408, %s397
          %s411 = sadd.s32 %s241, 8
          %p412 = scmp.lt.s32.totalorder %s411, 19
          %s413 = scalar_select %p412, %s411, 19
          %s414 = sld [smem:[#allocation5 + %s413]]
          %s415 = smul.u32 %s414, 96
          %s416 = scalar_lea.hbm %s3, %s415
          %s417 = scalar_lea.vmem [#allocation2], 256
          %s418 = scalar_lea.sflag [#allocation3], 8
          // Predicated region
          $region69: #{tpu_custom_call.1} parent=35 // pred_check
            _
          $region70: #{tpu_custom_call.1} parent=35 // pred_check_branch
            %420 = sbr.rel target = $region72
          $region71: #{tpu_custom_call.1} parent=35 // pred_region
            %421 = sst [smem:[#allocation15]] [#allocation32]
            %422 = sst [smem:[#allocation16]] [#allocation31]
          $region72: #{tpu_custom_call.1} parent=35 // pred_fallthru
            _
          %424 = shalt.err (0)
          %s426 = sshll.u32 %s416, 4
          %s427 = int_to_ptr.hbm [resolvable:$true] %s426
          %s428 = sshll.u32 %s417, 4
          %s429 = int_to_ptr.vmem [resolvable:$true] %s428
          %431 = dma.hbm_to_vmem [thread:$0]  %s427, 512, %s429, %s418
          %s432 = sadd.s32 %s241, 9
          %p433 = scmp.lt.s32.totalorder %s432, 19
          %s434 = scalar_select %p433, %s432, 19
          %s435 = sld [smem:[#allocation5 + %s434]]
          %s436 = smul.u32 %s435, 96
          %s437 = scalar_lea.hbm %s3, %s436
          %s438 = scalar_lea.vmem [#allocation2], 288
          %s439 = scalar_lea.sflag [#allocation3], 9
          // Predicated region
          $region73: #{tpu_custom_call.1} parent=35 // pred_check
            _
          $region74: #{tpu_custom_call.1} parent=35 // pred_check_branch
            %441 = sbr.rel target = $region76
          $region75: #{tpu_custom_call.1} parent=35 // pred_region
            %442 = sst [smem:[#allocation15]] [#allocation34]
            %443 = sst [smem:[#allocation16]] [#allocation33]
          $region76: #{tpu_custom_call.1} parent=35 // pred_fallthru
            _
          %445 = shalt.err (0)
          %s447 = sshll.u32 %s437, 4
          %s448 = int_to_ptr.hbm [resolvable:$true] %s447
          %s449 = sshll.u32 %s438, 4
          %s450 = int_to_ptr.vmem [resolvable:$true] %s449
          %452 = dma.hbm_to_vmem [thread:$0]  %s448, 512, %s450, %s439
          %s453 = sadd.s32 %s241, 10
          %p454 = scmp.lt.s32.totalorder %s453, 19
          %s455 = scalar_select %p454, %s453, 19
          %s456 = sld [smem:[#allocation5 + %s455]]
          %s457 = smul.u32 %s456, 96
          %s458 = scalar_lea.hbm %s3, %s457
          %s459 = scalar_lea.vmem [#allocation2], 320
          %s460 = scalar_lea.sflag [#allocation3], 10
          // Predicated region
          $region77: #{tpu_custom_call.1} parent=35 // pred_check
            _
          $region78: #{tpu_custom_call.1} parent=35 // pred_check_branch
            %462 = sbr.rel target = $region80
          $region79: #{tpu_custom_call.1} parent=35 // pred_region
            %463 = sst [smem:[#allocation15]] [#allocation36]
            %464 = sst [smem:[#allocation16]] [#allocation35]
          $region80: #{tpu_custom_call.1} parent=35 // pred_fallthru
            _
          %466 = shalt.err (0)
          %s468 = sshll.u32 %s458, 4
          %s469 = int_to_ptr.hbm [resolvable:$true] %s468
          %s470 = sshll.u32 %s459, 4
          %s471 = int_to_ptr.vmem [resolvable:$true] %s470
          %473 = dma.hbm_to_vmem [thread:$0]  %s469, 512, %s471, %s460
          %s474 = sadd.s32 %s241, 11
          %p475 = scmp.lt.s32.totalorder %s474, 19
          %s476 = scalar_select %p475, %s474, 19
          %s477 = sld [smem:[#allocation5 + %s476]]
          %s478 = smul.u32 %s477, 96
          %s479 = scalar_lea.hbm %s3, %s478
          %s480 = scalar_lea.vmem [#allocation2], 352
          %s481 = scalar_lea.sflag [#allocation3], 11
          // Predicated region
          $region81: #{tpu_custom_call.1} parent=35 // pred_check
            _
          $region82: #{tpu_custom_call.1} parent=35 // pred_check_branch
            %483 = sbr.rel target = $region84
          $region83: #{tpu_custom_call.1} parent=35 // pred_region
            %484 = sst [smem:[#allocation15]] [#allocation38]
            %485 = sst [smem:[#allocation16]] [#allocation37]
          $region84: #{tpu_custom_call.1} parent=35 // pred_fallthru
            _
          %487 = shalt.err (0)
          %s489 = sshll.u32 %s479, 4
          %s490 = int_to_ptr.hbm [resolvable:$true] %s489
          %s491 = sshll.u32 %s480, 4
          %s492 = int_to_ptr.vmem [resolvable:$true] %s491
          %494 = dma.hbm_to_vmem [thread:$0]  %s490, 512, %s492, %s481
          %s495 = sadd.s32 %s241, 12
          %p496 = scmp.lt.s32.totalorder %s495, 19
          %s497 = scalar_select %p496, %s495, 19
          %s498 = sld [smem:[#allocation5 + %s497]]
          %s499 = smul.u32 %s498, 96
          %s500 = scalar_lea.hbm %s3, %s499
          %s501 = scalar_lea.vmem [#allocation2], 384
          %s502 = scalar_lea.sflag [#allocation3], 12
          // Predicated region
          $region85: #{tpu_custom_call.1} parent=35 // pred_check
            _
          $region86: #{tpu_custom_call.1} parent=35 // pred_check_branch
            %504 = sbr.rel target = $region88
          $region87: #{tpu_custom_call.1} parent=35 // pred_region
            %505 = sst [smem:[#allocation15]] [#allocation40]
            %506 = sst [smem:[#allocation16]] [#allocation39]
          $region88: #{tpu_custom_call.1} parent=35 // pred_fallthru
            _
          %508 = shalt.err (0)
          %s510 = sshll.u32 %s500, 4
          %s511 = int_to_ptr.hbm [resolvable:$true] %s510
          %s512 = sshll.u32 %s501, 4
          %s513 = int_to_ptr.vmem [resolvable:$true] %s512
          %515 = dma.hbm_to_vmem [thread:$0]  %s511, 512, %s513, %s502
          %s516 = sadd.s32 %s241, 13
          %p517 = scmp.lt.s32.totalorder %s516, 19
          %s518 = scalar_select %p517, %s516, 19
          %s519 = sld [smem:[#allocation5 + %s518]]
          %s520 = smul.u32 %s519, 96
          %s521 = scalar_lea.hbm %s3, %s520
          %s522 = scalar_lea.vmem [#allocation2], 416
          %s523 = scalar_lea.sflag [#allocation3], 13
          // Predicated region
          $region89: #{tpu_custom_call.1} parent=35 // pred_check
            _
          $region90: #{tpu_custom_call.1} parent=35 // pred_check_branch
            %525 = sbr.rel target = $region92
          $region91: #{tpu_custom_call.1} parent=35 // pred_region
            %526 = sst [smem:[#allocation15]] [#allocation42]
            %527 = sst [smem:[#allocation16]] [#allocation41]
          $region92: #{tpu_custom_call.1} parent=35 // pred_fallthru
            _
          %529 = shalt.err (0)
          %s531 = sshll.u32 %s521, 4
          %s532 = int_to_ptr.hbm [resolvable:$true] %s531
          %s533 = sshll.u32 %s522, 4
          %s534 = int_to_ptr.vmem [resolvable:$true] %s533
          %536 = dma.hbm_to_vmem [thread:$0]  %s532, 512, %s534, %s523
          %s537 = sadd.s32 %s241, 14
          %p538 = scmp.lt.s32.totalorder %s537, 19
          %s539 = scalar_select %p538, %s537, 19
          %s540 = sld [smem:[#allocation5 + %s539]]
          %s541 = smul.u32 %s540, 96
          %s542 = scalar_lea.hbm %s3, %s541
          %s543 = scalar_lea.vmem [#allocation2], 448
          %s544 = scalar_lea.sflag [#allocation3], 14
          // Predicated region
          $region93: #{tpu_custom_call.1} parent=35 // pred_check
            _
          $region94: #{tpu_custom_call.1} parent=35 // pred_check_branch
            %546 = sbr.rel target = $region96
          $region95: #{tpu_custom_call.1} parent=35 // pred_region
            %547 = sst [smem:[#allocation15]] [#allocation44]
            %548 = sst [smem:[#allocation16]] [#allocation43]
          $region96: #{tpu_custom_call.1} parent=35 // pred_fallthru
            _
          %550 = shalt.err (0)
          %s552 = sshll.u32 %s542, 4
          %s553 = int_to_ptr.hbm [resolvable:$true] %s552
          %s554 = sshll.u32 %s543, 4
          %s555 = int_to_ptr.vmem [resolvable:$true] %s554
          %557 = dma.hbm_to_vmem [thread:$0]  %s553, 512, %s555, %s544
          %s558 = sadd.s32 %s241, 15
          %p559 = scmp.lt.s32.totalorder %s558, 19
          %s560 = scalar_select %p559, %s558, 19
          %s561 = sld [smem:[#allocation5 + %s560]]
          %s562 = smul.u32 %s561, 96
          %s563 = scalar_lea.hbm %s3, %s562
          %s564 = scalar_lea.vmem [#allocation2], 480
          %s565 = scalar_lea.sflag [#allocation3], 15
          // Predicated region
          $region97: #{tpu_custom_call.1} parent=35 // pred_check
            _
          $region98: #{tpu_custom_call.1} parent=35 // pred_check_branch
            %567 = sbr.rel target = $region100
          $region99: #{tpu_custom_call.1} parent=35 // pred_region
            %568 = sst [smem:[#allocation15]] [#allocation46]
            %569 = sst [smem:[#allocation16]] [#allocation45]
          $region100: #{tpu_custom_call.1} parent=35 // pred_fallthru
            _
          %571 = shalt.err (0)
          %s573 = sshll.u32 %s563, 4
          %s574 = int_to_ptr.hbm [resolvable:$true] %s573
          %s575 = sshll.u32 %s564, 4
          %s576 = int_to_ptr.vmem [resolvable:$true] %s575
          %578 = dma.hbm_to_vmem [thread:$0]  %s574, 512, %s576, %s565
        $region36: #{tpu_custom_call.1} parent=27 // pred_fallthru
          _
        %s579 = sadd.s32 %s35, 1
        %p580 = scmp.lt.s32.totalorder %s579, 3
        // Predicated region
        $region101: #{tpu_custom_call.1} parent=27 // pred_check
          %p581 = pneg %p580
        $region102: #{tpu_custom_call.1} parent=27 // pred_check_branch
          %583 = sbr.rel (%p581) target = $region104
        $region103: #{tpu_custom_call.1} parent=27 // pred_region
          %p584 = scmp.lt.s32.totalorder %s579, 0
          %s585 = ssub.s32 0, %s579
          %s586 = scalar_select %p584, %s585, %s579
          %s587 = sand.u32 %s586, 1
          %s588 = ssub.s32 0, %s587
          %s589 = scalar_select %p584, %s588, %s587
          %p590 = scmp.ne.s32.totalorder %s589, 0
          %p591 = scmp.lt.s32.totalorder %s589, 0
          %p592 = pnand %p591, %p590
          %p593 = pneg %p592
          %s594 = sadd.s32 %s589, 2
          %s595 = scalar_select %p593, %s594, %s589
          %s596 = smul.u32 %s579, 32
          %p597 = scmp.lt.s32.totalorder %s241, 19
          %s598 = scalar_select %p597, %s241, 19
          %s599 = sld [smem:[#allocation5 + %s598]]
          %s600 = smul.u32 %s599, 96
          %s601 = sadd.s32 %s596, %s600
          %s602 = scalar_lea.hbm %s3, %s601
          %s603 = smul.u32 %s595, 512
          %s604 = scalar_lea.vmem [#allocation2], %s603
          %s605 = smul.u32 %s595, 16
          %s606 = scalar_lea.sflag [#allocation3], %s605
          // Predicated region
          $region105: #{tpu_custom_call.1} parent=103 // pred_check
            _
          $region106: #{tpu_custom_call.1} parent=103 // pred_check_branch
            %608 = sbr.rel target = $region108
          $region107: #{tpu_custom_call.1} parent=103 // pred_region
            %609 = sst [smem:[#allocation15]] [#allocation48]
            %610 = sst [smem:[#allocation16]] [#allocation47]
          $region108: #{tpu_custom_call.1} parent=103 // pred_fallthru
            _
          %612 = shalt.err (0)
          %s614 = sshll.u32 %s602, 4
          %s615 = int_to_ptr.hbm [resolvable:$true] %s614
          %s616 = sshll.u32 %s604, 4
          %s617 = int_to_ptr.vmem [resolvable:$true] %s616
          %619 = dma.hbm_to_vmem [thread:$0]  %s615, 512, %s617, %s606
          %s620 = sadd.s32 %s241, 1
          %p621 = scmp.lt.s32.totalorder %s620, 19
          %s622 = scalar_select %p621, %s620, 19
          %s623 = sld [smem:[#allocation5 + %s622]]
          %s624 = smul.u32 %s623, 96
          %s625 = sadd.s32 %s596, %s624
          %s626 = scalar_lea.hbm %s3, %s625
          %s627 = sadd.s32 32, %s603
          %s628 = scalar_lea.vmem [#allocation2], %s627
          %s629 = sadd.s32 1, %s605
          %s630 = scalar_lea.sflag [#allocation3], %s629
          // Predicated region
          $region109: #{tpu_custom_call.1} parent=103 // pred_check
            _
          $region110: #{tpu_custom_call.1} parent=103 // pred_check_branch
            %632 = sbr.rel target = $region112
          $region111: #{tpu_custom_call.1} parent=103 // pred_region
            %633 = sst [smem:[#allocation15]] [#allocation50]
            %634 = sst [smem:[#allocation16]] [#allocation49]
          $region112: #{tpu_custom_call.1} parent=103 // pred_fallthru
            _
          %636 = shalt.err (0)
          %s638 = sshll.u32 %s626, 4
          %s639 = int_to_ptr.hbm [resolvable:$true] %s638
          %s640 = sshll.u32 %s628, 4
          %s641 = int_to_ptr.vmem [resolvable:$true] %s640
          %643 = dma.hbm_to_vmem [thread:$0]  %s639, 512, %s641, %s630
          %s644 = sadd.s32 %s241, 2
          %p645 = scmp.lt.s32.totalorder %s644, 19
          %s646 = scalar_select %p645, %s644, 19
          %s647 = sld [smem:[#allocation5 + %s646]]
          %s648 = smul.u32 %s647, 96
          %s649 = sadd.s32 %s596, %s648
          %s650 = scalar_lea.hbm %s3, %s649
          %s651 = sadd.s32 64, %s603
          %s652 = scalar_lea.vmem [#allocation2], %s651
          %s653 = sadd.s32 2, %s605
          %s654 = scalar_lea.sflag [#allocation3], %s653
          // Predicated region
          $region113: #{tpu_custom_call.1} parent=103 // pred_check
            _
          $region114: #{tpu_custom_call.1} parent=103 // pred_check_branch
            %656 = sbr.rel target = $region116
          $region115: #{tpu_custom_call.1} parent=103 // pred_region
            %657 = sst [smem:[#allocation15]] [#allocation52]
            %658 = sst [smem:[#allocation16]] [#allocation51]
          $region116: #{tpu_custom_call.1} parent=103 // pred_fallthru
            _
          %660 = shalt.err (0)
          %s662 = sshll.u32 %s650, 4
          %s663 = int_to_ptr.hbm [resolvable:$true] %s662
          %s664 = sshll.u32 %s652, 4
          %s665 = int_to_ptr.vmem [resolvable:$true] %s664
          %667 = dma.hbm_to_vmem [thread:$0]  %s663, 512, %s665, %s654
          %s668 = sadd.s32 %s241, 3
          %p669 = scmp.lt.s32.totalorder %s668, 19
          %s670 = scalar_select %p669, %s668, 19
          %s671 = sld [smem:[#allocation5 + %s670]]
          %s672 = smul.u32 %s671, 96
          %s673 = sadd.s32 %s596, %s672
          %s674 = scalar_lea.hbm %s3, %s673
          %s675 = sadd.s32 96, %s603
          %s676 = scalar_lea.vmem [#allocation2], %s675
          %s677 = sadd.s32 3, %s605
          %s678 = scalar_lea.sflag [#allocation3], %s677
          // Predicated region
          $region117: #{tpu_custom_call.1} parent=103 // pred_check
            _
          $region118: #{tpu_custom_call.1} parent=103 // pred_check_branch
            %680 = sbr.rel target = $region120
          $region119: #{tpu_custom_call.1} parent=103 // pred_region
            %681 = sst [smem:[#allocation15]] [#allocation54]
            %682 = sst [smem:[#allocation16]] [#allocation53]
          $region120: #{tpu_custom_call.1} parent=103 // pred_fallthru
            _
          %684 = shalt.err (0)
          %s686 = sshll.u32 %s674, 4
          %s687 = int_to_ptr.hbm [resolvable:$true] %s686
          %s688 = sshll.u32 %s676, 4
          %s689 = int_to_ptr.vmem [resolvable:$true] %s688
          %691 = dma.hbm_to_vmem [thread:$0]  %s687, 512, %s689, %s678
          %s692 = sadd.s32 %s241, 4
          %p693 = scmp.lt.s32.totalorder %s692, 19
          %s694 = scalar_select %p693, %s692, 19
          %s695 = sld [smem:[#allocation5 + %s694]]
          %s696 = smul.u32 %s695, 96
          %s697 = sadd.s32 %s596, %s696
          %s698 = scalar_lea.hbm %s3, %s697
          %s699 = sadd.s32 128, %s603
          %s700 = scalar_lea.vmem [#allocation2], %s699
          %s701 = sadd.s32 4, %s605
          %s702 = scalar_lea.sflag [#allocation3], %s701
          // Predicated region
          $region121: #{tpu_custom_call.1} parent=103 // pred_check
            _
          $region122: #{tpu_custom_call.1} parent=103 // pred_check_branch
            %704 = sbr.rel target = $region124
          $region123: #{tpu_custom_call.1} parent=103 // pred_region
            %705 = sst [smem:[#allocation15]] [#allocation56]
            %706 = sst [smem:[#allocation16]] [#allocation55]
          $region124: #{tpu_custom_call.1} parent=103 // pred_fallthru
            _
          %708 = shalt.err (0)
          %s710 = sshll.u32 %s698, 4
          %s711 = int_to_ptr.hbm [resolvable:$true] %s710
          %s712 = sshll.u32 %s700, 4
          %s713 = int_to_ptr.vmem [resolvable:$true] %s712
          %715 = dma.hbm_to_vmem [thread:$0]  %s711, 512, %s713, %s702
          %s716 = sadd.s32 %s241, 5
          %p717 = scmp.lt.s32.totalorder %s716, 19
          %s718 = scalar_select %p717, %s716, 19
          %s719 = sld [smem:[#allocation5 + %s718]]
          %s720 = smul.u32 %s719, 96
          %s721 = sadd.s32 %s596, %s720
          %s722 = scalar_lea.hbm %s3, %s721
          %s723 = sadd.s32 160, %s603
          %s724 = scalar_lea.vmem [#allocation2], %s723
          %s725 = sadd.s32 5, %s605
          %s726 = scalar_lea.sflag [#allocation3], %s725
          // Predicated region
          $region125: #{tpu_custom_call.1} parent=103 // pred_check
            _
          $region126: #{tpu_custom_call.1} parent=103 // pred_check_branch
            %728 = sbr.rel target = $region128
          $region127: #{tpu_custom_call.1} parent=103 // pred_region
            %729 = sst [smem:[#allocation15]] [#allocation58]
            %730 = sst [smem:[#allocation16]] [#allocation57]
          $region128: #{tpu_custom_call.1} parent=103 // pred_fallthru
            _
          %732 = shalt.err (0)
          %s734 = sshll.u32 %s722, 4
          %s735 = int_to_ptr.hbm [resolvable:$true] %s734
          %s736 = sshll.u32 %s724, 4
          %s737 = int_to_ptr.vmem [resolvable:$true] %s736
          %739 = dma.hbm_to_vmem [thread:$0]  %s735, 512, %s737, %s726
          %s740 = sadd.s32 %s241, 6
          %p741 = scmp.lt.s32.totalorder %s740, 19
          %s742 = scalar_select %p741, %s740, 19
          %s743 = sld [smem:[#allocation5 + %s742]]
          %s744 = smul.u32 %s743, 96
          %s745 = sadd.s32 %s596, %s744
          %s746 = scalar_lea.hbm %s3, %s745
          %s747 = sadd.s32 192, %s603
          %s748 = scalar_lea.vmem [#allocation2], %s747
          %s749 = sadd.s32 6, %s605
          %s750 = scalar_lea.sflag [#allocation3], %s749
          // Predicated region
          $region129: #{tpu_custom_call.1} parent=103 // pred_check
            _
          $region130: #{tpu_custom_call.1} parent=103 // pred_check_branch
            %752 = sbr.rel target = $region132
          $region131: #{tpu_custom_call.1} parent=103 // pred_region
            %753 = sst [smem:[#allocation15]] [#allocation60]
            %754 = sst [smem:[#allocation16]] [#allocation59]
          $region132: #{tpu_custom_call.1} parent=103 // pred_fallthru
            _
          %756 = shalt.err (0)
          %s758 = sshll.u32 %s746, 4
          %s759 = int_to_ptr.hbm [resolvable:$true] %s758
          %s760 = sshll.u32 %s748, 4
          %s761 = int_to_ptr.vmem [resolvable:$true] %s760
          %763 = dma.hbm_to_vmem [thread:$0]  %s759, 512, %s761, %s750
          %s764 = sadd.s32 %s241, 7
          %p765 = scmp.lt.s32.totalorder %s764, 19
          %s766 = scalar_select %p765, %s764, 19
          %s767 = sld [smem:[#allocation5 + %s766]]
          %s768 = smul.u32 %s767, 96
          %s769 = sadd.s32 %s596, %s768
          %s770 = scalar_lea.hbm %s3, %s769
          %s771 = sadd.s32 224, %s603
          %s772 = scalar_lea.vmem [#allocation2], %s771
          %s773 = sadd.s32 7, %s605
          %s774 = scalar_lea.sflag [#allocation3], %s773
          // Predicated region
          $region133: #{tpu_custom_call.1} parent=103 // pred_check
            _
          $region134: #{tpu_custom_call.1} parent=103 // pred_check_branch
            %776 = sbr.rel target = $region136
          $region135: #{tpu_custom_call.1} parent=103 // pred_region
            %777 = sst [smem:[#allocation15]] [#allocation62]
            %778 = sst [smem:[#allocation16]] [#allocation61]
          $region136: #{tpu_custom_call.1} parent=103 // pred_fallthru
            _
          %780 = shalt.err (0)
          %s782 = sshll.u32 %s770, 4
          %s783 = int_to_ptr.hbm [resolvable:$true] %s782
          %s784 = sshll.u32 %s772, 4
          %s785 = int_to_ptr.vmem [resolvable:$true] %s784
          %787 = dma.hbm_to_vmem [thread:$0]  %s783, 512, %s785, %s774
          %s788 = sadd.s32 %s241, 8
          %p789 = scmp.lt.s32.totalorder %s788, 19
          %s790 = scalar_select %p789, %s788, 19
          %s791 = sld [smem:[#allocation5 + %s790]]
          %s792 = smul.u32 %s791, 96
          %s793 = sadd.s32 %s596, %s792
          %s794 = scalar_lea.hbm %s3, %s793
          %s795 = sadd.s32 256, %s603
          %s796 = scalar_lea.vmem [#allocation2], %s795
          %s797 = sadd.s32 8, %s605
          %s798 = scalar_lea.sflag [#allocation3], %s797
          // Predicated region
          $region137: #{tpu_custom_call.1} parent=103 // pred_check
            _
          $region138: #{tpu_custom_call.1} parent=103 // pred_check_branch
            %800 = sbr.rel target = $region140
          $region139: #{tpu_custom_call.1} parent=103 // pred_region
            %801 = sst [smem:[#allocation15]] [#allocation64]
            %802 = sst [smem:[#allocation16]] [#allocation63]
          $region140: #{tpu_custom_call.1} parent=103 // pred_fallthru
            _
          %804 = shalt.err (0)
          %s806 = sshll.u32 %s794, 4
          %s807 = int_to_ptr.hbm [resolvable:$true] %s806
          %s808 = sshll.u32 %s796, 4
          %s809 = int_to_ptr.vmem [resolvable:$true] %s808
          %811 = dma.hbm_to_vmem [thread:$0]  %s807, 512, %s809, %s798
          %s812 = sadd.s32 %s241, 9
          %p813 = scmp.lt.s32.totalorder %s812, 19
          %s814 = scalar_select %p813, %s812, 19
          %s815 = sld [smem:[#allocation5 + %s814]]
          %s816 = smul.u32 %s815, 96
          %s817 = sadd.s32 %s596, %s816
          %s818 = scalar_lea.hbm %s3, %s817
          %s819 = sadd.s32 288, %s603
          %s820 = scalar_lea.vmem [#allocation2], %s819
          %s821 = sadd.s32 9, %s605
          %s822 = scalar_lea.sflag [#allocation3], %s821
          // Predicated region
          $region141: #{tpu_custom_call.1} parent=103 // pred_check
            _
          $region142: #{tpu_custom_call.1} parent=103 // pred_check_branch
            %824 = sbr.rel target = $region144
          $region143: #{tpu_custom_call.1} parent=103 // pred_region
            %825 = sst [smem:[#allocation15]] [#allocation66]
            %826 = sst [smem:[#allocation16]] [#allocation65]
          $region144: #{tpu_custom_call.1} parent=103 // pred_fallthru
            _
          %828 = shalt.err (0)
          %s830 = sshll.u32 %s818, 4
          %s831 = int_to_ptr.hbm [resolvable:$true] %s830
          %s832 = sshll.u32 %s820, 4
          %s833 = int_to_ptr.vmem [resolvable:$true] %s832
          %835 = dma.hbm_to_vmem [thread:$0]  %s831, 512, %s833, %s822
          %s836 = sadd.s32 %s241, 10
          %p837 = scmp.lt.s32.totalorder %s836, 19
          %s838 = scalar_select %p837, %s836, 19
          %s839 = sld [smem:[#allocation5 + %s838]]
          %s840 = smul.u32 %s839, 96
          %s841 = sadd.s32 %s596, %s840
          %s842 = scalar_lea.hbm %s3, %s841
          %s843 = sadd.s32 320, %s603
          %s844 = scalar_lea.vmem [#allocation2], %s843
          %s845 = sadd.s32 10, %s605
          %s846 = scalar_lea.sflag [#allocation3], %s845
          // Predicated region
          $region145: #{tpu_custom_call.1} parent=103 // pred_check
            _
          $region146: #{tpu_custom_call.1} parent=103 // pred_check_branch
            %848 = sbr.rel target = $region148
          $region147: #{tpu_custom_call.1} parent=103 // pred_region
            %849 = sst [smem:[#allocation15]] [#allocation68]
            %850 = sst [smem:[#allocation16]] [#allocation67]
          $region148: #{tpu_custom_call.1} parent=103 // pred_fallthru
            _
          %852 = shalt.err (0)
          %s854 = sshll.u32 %s842, 4
          %s855 = int_to_ptr.hbm [resolvable:$true] %s854
          %s856 = sshll.u32 %s844, 4
          %s857 = int_to_ptr.vmem [resolvable:$true] %s856
          %859 = dma.hbm_to_vmem [thread:$0]  %s855, 512, %s857, %s846
          %s860 = sadd.s32 %s241, 11
          %p861 = scmp.lt.s32.totalorder %s860, 19
          %s862 = scalar_select %p861, %s860, 19
          %s863 = sld [smem:[#allocation5 + %s862]]
          %s864 = smul.u32 %s863, 96
          %s865 = sadd.s32 %s596, %s864
          %s866 = scalar_lea.hbm %s3, %s865
          %s867 = sadd.s32 352, %s603
          %s868 = scalar_lea.vmem [#allocation2], %s867
          %s869 = sadd.s32 11, %s605
          %s870 = scalar_lea.sflag [#allocation3], %s869
          // Predicated region
          $region149: #{tpu_custom_call.1} parent=103 // pred_check
            _
          $region150: #{tpu_custom_call.1} parent=103 // pred_check_branch
            %872 = sbr.rel target = $region152
          $region151: #{tpu_custom_call.1} parent=103 // pred_region
            %873 = sst [smem:[#allocation15]] [#allocation70]
            %874 = sst [smem:[#allocation16]] [#allocation69]
          $region152: #{tpu_custom_call.1} parent=103 // pred_fallthru
            _
          %876 = shalt.err (0)
          %s878 = sshll.u32 %s866, 4
          %s879 = int_to_ptr.hbm [resolvable:$true] %s878
          %s880 = sshll.u32 %s868, 4
          %s881 = int_to_ptr.vmem [resolvable:$true] %s880
          %883 = dma.hbm_to_vmem [thread:$0]  %s879, 512, %s881, %s870
          %s884 = sadd.s32 %s241, 12
          %p885 = scmp.lt.s32.totalorder %s884, 19
          %s886 = scalar_select %p885, %s884, 19
          %s887 = sld [smem:[#allocation5 + %s886]]
          %s888 = smul.u32 %s887, 96
          %s889 = sadd.s32 %s596, %s888
          %s890 = scalar_lea.hbm %s3, %s889
          %s891 = sadd.s32 384, %s603
          %s892 = scalar_lea.vmem [#allocation2], %s891
          %s893 = sadd.s32 12, %s605
          %s894 = scalar_lea.sflag [#allocation3], %s893
          // Predicated region
          $region153: #{tpu_custom_call.1} parent=103 // pred_check
            _
          $region154: #{tpu_custom_call.1} parent=103 // pred_check_branch
            %896 = sbr.rel target = $region156
          $region155: #{tpu_custom_call.1} parent=103 // pred_region
            %897 = sst [smem:[#allocation15]] [#allocation72]
            %898 = sst [smem:[#allocation16]] [#allocation71]
          $region156: #{tpu_custom_call.1} parent=103 // pred_fallthru
            _
          %900 = shalt.err (0)
          %s902 = sshll.u32 %s890, 4
          %s903 = int_to_ptr.hbm [resolvable:$true] %s902
          %s904 = sshll.u32 %s892, 4
          %s905 = int_to_ptr.vmem [resolvable:$true] %s904
          %907 = dma.hbm_to_vmem [thread:$0]  %s903, 512, %s905, %s894
          %s908 = sadd.s32 %s241, 13
          %p909 = scmp.lt.s32.totalorder %s908, 19
          %s910 = scalar_select %p909, %s908, 19
          %s911 = sld [smem:[#allocation5 + %s910]]
          %s912 = smul.u32 %s911, 96
          %s913 = sadd.s32 %s596, %s912
          %s914 = scalar_lea.hbm %s3, %s913
          %s915 = sadd.s32 416, %s603
          %s916 = scalar_lea.vmem [#allocation2], %s915
          %s917 = sadd.s32 13, %s605
          %s918 = scalar_lea.sflag [#allocation3], %s917
          // Predicated region
          $region157: #{tpu_custom_call.1} parent=103 // pred_check
            _
          $region158: #{tpu_custom_call.1} parent=103 // pred_check_branch
            %920 = sbr.rel target = $region160
          $region159: #{tpu_custom_call.1} parent=103 // pred_region
            %921 = sst [smem:[#allocation15]] [#allocation74]
            %922 = sst [smem:[#allocation16]] [#allocation73]
          $region160: #{tpu_custom_call.1} parent=103 // pred_fallthru
            _
          %924 = shalt.err (0)
          %s926 = sshll.u32 %s914, 4
          %s927 = int_to_ptr.hbm [resolvable:$true] %s926
          %s928 = sshll.u32 %s916, 4
          %s929 = int_to_ptr.vmem [resolvable:$true] %s928
          %931 = dma.hbm_to_vmem [thread:$0]  %s927, 512, %s929, %s918
          %s932 = sadd.s32 %s241, 14
          %p933 = scmp.lt.s32.totalorder %s932, 19
          %s934 = scalar_select %p933, %s932, 19
          %s935 = sld [smem:[#allocation5 + %s934]]
          %s936 = smul.u32 %s935, 96
          %s937 = sadd.s32 %s596, %s936
          %s938 = scalar_lea.hbm %s3, %s937
          %s939 = sadd.s32 448, %s603
          %s940 = scalar_lea.vmem [#allocation2], %s939
          %s941 = sadd.s32 14, %s605
          %s942 = scalar_lea.sflag [#allocation3], %s941
          // Predicated region
          $region161: #{tpu_custom_call.1} parent=103 // pred_check
            _
          $region162: #{tpu_custom_call.1} parent=103 // pred_check_branch
            %944 = sbr.rel target = $region164
          $region163: #{tpu_custom_call.1} parent=103 // pred_region
            %945 = sst [smem:[#allocation15]] [#allocation76]
            %946 = sst [smem:[#allocation16]] [#allocation75]
          $region164: #{tpu_custom_call.1} parent=103 // pred_fallthru
            _
          %948 = shalt.err (0)
          %s950 = sshll.u32 %s938, 4
          %s951 = int_to_ptr.hbm [resolvable:$true] %s950
          %s952 = sshll.u32 %s940, 4
          %s953 = int_to_ptr.vmem [resolvable:$true] %s952
          %955 = dma.hbm_to_vmem [thread:$0]  %s951, 512, %s953, %s942
          %s956 = sadd.s32 %s241, 15
          %p957 = scmp.lt.s32.totalorder %s956, 19
          %s958 = scalar_select %p957, %s956, 19
          %s959 = sld [smem:[#allocation5 + %s958]]
          %s960 = smul.u32 %s959, 96
          %s961 = sadd.s32 %s596, %s960
          %s962 = scalar_lea.hbm %s3, %s961
          %s963 = sadd.s32 480, %s603
          %s964 = scalar_lea.vmem [#allocation2], %s963
          %s965 = sadd.s32 15, %s605
          %s966 = scalar_lea.sflag [#allocation3], %s965
          // Predicated region
          $region165: #{tpu_custom_call.1} parent=103 // pred_check
            _
          $region166: #{tpu_custom_call.1} parent=103 // pred_check_branch
            %968 = sbr.rel target = $region168
          $region167: #{tpu_custom_call.1} parent=103 // pred_region
            %969 = sst [smem:[#allocation15]] [#allocation78]
            %970 = sst [smem:[#allocation16]] [#allocation77]
          $region168: #{tpu_custom_call.1} parent=103 // pred_fallthru
            _
          %972 = shalt.err (0)
          %s974 = sshll.u32 %s962, 4
          %s975 = int_to_ptr.hbm [resolvable:$true] %s974
          %s976 = sshll.u32 %s964, 4
          %s977 = int_to_ptr.vmem [resolvable:$true] %s976
          %979 = dma.hbm_to_vmem [thread:$0]  %s975, 512, %s977, %s966
        $region104: #{tpu_custom_call.1} parent=27 // pred_fallthru
          _
        %p980 = scmp.lt.s32.totalorder %s35, 0
        %s981 = ssub.s32 0, %s35
        %s982 = scalar_select %p980, %s981, %s35
        %s983 = sand.u32 %s982, 1
        %s984 = ssub.s32 0, %s983
        %s985 = scalar_select %p980, %s984, %s983
        %p986 = scmp.ne.s32.totalorder %s985, 0
        %p987 = scmp.lt.s32.totalorder %s985, 0
        %p988 = pnand %p987, %p986
        %p989 = pneg %p988
        %s990 = sadd.s32 %s985, 2
        %s991 = scalar_select %p989, %s990, %s985
        %s992 = smul.u32 %s991, 16
        %s993 = scalar_lea.sflag [#allocation3], %s992
        %s994 = smul.u32 32, 1
        %s995 = sshll.u32 %s994, 4
        %996 = dma.done %s993, %s995
        %s997 = sadd.s32 1, %s992
        %s998 = scalar_lea.sflag [#allocation3], %s997
        %s999 = sshll.u32 %s994, 4
        %1000 = dma.done %s998, %s999
        %s1001 = sadd.s32 2, %s992
        %s1002 = scalar_lea.sflag [#allocation3], %s1001
        %s1003 = sshll.u32 %s994, 4
        %1004 = dma.done %s1002, %s1003
        %s1005 = sadd.s32 3, %s992
        %s1006 = scalar_lea.sflag [#allocation3], %s1005
        %s1007 = sshll.u32 %s994, 4
        %1008 = dma.done %s1006, %s1007
        %s1009 = sadd.s32 4, %s992
        %s1010 = scalar_lea.sflag [#allocation3], %s1009
        %s1011 = sshll.u32 %s994, 4
        %1012 = dma.done %s1010, %s1011
        %s1013 = sadd.s32 5, %s992
        %s1014 = scalar_lea.sflag [#allocation3], %s1013
        %s1015 = sshll.u32 %s994, 4
        %1016 = dma.done %s1014, %s1015
        %s1017 = sadd.s32 6, %s992
        %s1018 = scalar_lea.sflag [#allocation3], %s1017
        %s1019 = sshll.u32 %s994, 4
        %1020 = dma.done %s1018, %s1019
        %s1021 = sadd.s32 7, %s992
        %s1022 = scalar_lea.sflag [#allocation3], %s1021
        %s1023 = sshll.u32 %s994, 4
        %1024 = dma.done %s1022, %s1023
        %s1025 = sadd.s32 8, %s992
        %s1026 = scalar_lea.sflag [#allocation3], %s1025
        %s1027 = sshll.u32 %s994, 4
        %1028 = dma.done %s1026, %s1027
        %s1029 = sadd.s32 9, %s992
        %s1030 = scalar_lea.sflag [#allocation3], %s1029
        %s1031 = sshll.u32 %s994, 4
        %1032 = dma.done %s1030, %s1031
        %s1033 = sadd.s32 10, %s992
        %s1034 = scalar_lea.sflag [#allocation3], %s1033
        %s1035 = sshll.u32 %s994, 4
        %1036 = dma.done %s1034, %s1035
        %s1037 = sadd.s32 11, %s992
        %s1038 = scalar_lea.sflag [#allocation3], %s1037
        %s1039 = sshll.u32 %s994, 4
        %1040 = dma.done %s1038, %s1039
        %s1041 = sadd.s32 12, %s992
        %s1042 = scalar_lea.sflag [#allocation3], %s1041
        %s1043 = sshll.u32 %s994, 4
        %1044 = dma.done %s1042, %s1043
        %s1045 = sadd.s32 13, %s992
        %s1046 = scalar_lea.sflag [#allocation3], %s1045
        %s1047 = sshll.u32 %s994, 4
        %1048 = dma.done %s1046, %s1047
        %s1049 = sadd.s32 14, %s992
        %s1050 = scalar_lea.sflag [#allocation3], %s1049
        %s1051 = sshll.u32 %s994, 4
        %1052 = dma.done %s1050, %s1051
        %s1053 = sadd.s32 15, %s992
        %s1054 = scalar_lea.sflag [#allocation3], %s1053
        %s1055 = sshll.u32 %s994, 4
        %1056 = dma.done %s1054, %s1055
        %s1057 = sld [smem:[#allocation6]]
        %v1058 = vld [vmem:[%s205] sm:$0xff]
        %v1059 = vld [vmem:[%s205 + $0x8] sm:$0xff]
        %v1060 = vld [vmem:[%s205 + $0x10] sm:$0xff]
        %v1061 = vld [vmem:[%s205 + $0x18] sm:$0xff]
        %v1062 = vld [vmem:[%s205 + $0x20] sm:$0xff]
        %v1063 = vld [vmem:[%s205 + $0x28] sm:$0xff]
        %v1064 = vld [vmem:[%s205 + $0x30] sm:$0xff]
        %v1065 = vld [vmem:[%s205 + $0x38] sm:$0xff]
        %v1066 = vld [vmem:[%s205 + $0x40] sm:$0xff]
        %v1067 = vld [vmem:[%s205 + $0x48] sm:$0xff]
        %v1068 = vld [vmem:[%s205 + $0x50] sm:$0xff]
        %v1069 = vld [vmem:[%s205 + $0x58] sm:$0xff]
        %v1070 = vld [vmem:[%s205 + $0x60] sm:$0xff]
        %v1071 = vld [vmem:[%s205 + $0x68] sm:$0xff]
        %v1072 = vld [vmem:[%s205 + $0x70] sm:$0xff]
        %v1073 = vld [vmem:[%s205 + $0x78] sm:$0xff]
        %v1074 = vld [vmem:[%s205 + $0x80] sm:$0xff]
        %v1075 = vld [vmem:[%s205 + $0x88] sm:$0xff]
        %v1076 = vld [vmem:[%s205 + $0x90] sm:$0xff]
        %v1077 = vld [vmem:[%s205 + $0x98] sm:$0xff]
        %v1078 = vld [vmem:[%s205 + $0xa0] sm:$0xff]
        %v1079 = vld [vmem:[%s205 + $0xa8] sm:$0xff]
        %v1080 = vld [vmem:[%s205 + $0xb0] sm:$0xff]
        %v1081 = vld [vmem:[%s205 + $0xb8] sm:$0xff]
        %v1082 = vld [vmem:[%s205 + $0xc0] sm:$0xff]
        %v1083 = vld [vmem:[%s205 + $0xc8] sm:$0xff]
        %v1084 = vld [vmem:[%s205 + $0xd0] sm:$0xff]
        %v1085 = vld [vmem:[%s205 + $0xd8] sm:$0xff]
        %v1086 = vld [vmem:[%s205 + $0xe0] sm:$0xff]
        %v1087 = vld [vmem:[%s205 + $0xe8] sm:$0xff]
        %v1088 = vld [vmem:[%s205 + $0xf0] sm:$0xff]
        %v1089 = vld [vmem:[%s205 + $0xf8] sm:$0xff]
        %v1090 = vld [vmem:[%s205 + $0x100] sm:$0xff]
        %v1091 = vld [vmem:[%s205 + $0x108] sm:$0xff]
        %v1092 = vld [vmem:[%s205 + $0x110] sm:$0xff]
        %v1093 = vld [vmem:[%s205 + $0x118] sm:$0xff]
        %v1094 = vld [vmem:[%s205 + $0x120] sm:$0xff]
        %v1095 = vld [vmem:[%s205 + $0x128] sm:$0xff]
        %v1096 = vld [vmem:[%s205 + $0x130] sm:$0xff]
        %v1097 = vld [vmem:[%s205 + $0x138] sm:$0xff]
        %v1098 = vld [vmem:[%s205 + $0x140] sm:$0xff]
        %v1099 = vld [vmem:[%s205 + $0x148] sm:$0xff]
        %v1100 = vld [vmem:[%s205 + $0x150] sm:$0xff]
        %v1101 = vld [vmem:[%s205 + $0x158] sm:$0xff]
        %v1102 = vld [vmem:[%s205 + $0x160] sm:$0xff]
        %v1103 = vld [vmem:[%s205 + $0x168] sm:$0xff]
        %v1104 = vld [vmem:[%s205 + $0x170] sm:$0xff]
        %v1105 = vld [vmem:[%s205 + $0x178] sm:$0xff]
        %v1106 = vld [vmem:[%s205 + $0x180] sm:$0xff]
        %v1107 = vld [vmem:[%s205 + $0x188] sm:$0xff]
        %v1108 = vld [vmem:[%s205 + $0x190] sm:$0xff]
        %v1109 = vld [vmem:[%s205 + $0x198] sm:$0xff]
        %v1110 = vld [vmem:[%s205 + $0x1a0] sm:$0xff]
        %v1111 = vld [vmem:[%s205 + $0x1a8] sm:$0xff]
        %v1112 = vld [vmem:[%s205 + $0x1b0] sm:$0xff]
        %v1113 = vld [vmem:[%s205 + $0x1b8] sm:$0xff]
        %v1114 = vld [vmem:[%s205 + $0x1c0] sm:$0xff]
        %v1115 = vld [vmem:[%s205 + $0x1c8] sm:$0xff]
        %v1116 = vld [vmem:[%s205 + $0x1d0] sm:$0xff]
        %v1117 = vld [vmem:[%s205 + $0x1d8] sm:$0xff]
        %v1118 = vld [vmem:[%s205 + $0x1e0] sm:$0xff]
        %v1119 = vld [vmem:[%s205 + $0x1e8] sm:$0xff]
        %v1120 = vld [vmem:[%s205 + $0x1f0] sm:$0xff]
        %v1121 = vld [vmem:[%s205 + $0x1f8] sm:$0xff]
        %v1122 = vstv %s1057
        %v1123 = vmul.f32 %v1122, %v1058
        %v1124 = vmul.f32 %v1122, %v1059
        %v1125 = vmul.f32 %v1122, %v1060
        %v1126 = vmul.f32 %v1122, %v1061
        %v1127 = vmul.f32 %v1122, %v1062
        %v1128 = vmul.f32 %v1122, %v1063
        %v1129 = vmul.f32 %v1122, %v1064
        %v1130 = vmul.f32 %v1122, %v1065
        %v1131 = vmul.f32 %v1122, %v1066
        %v1132 = vmul.f32 %v1122, %v1067
        %v1133 = vmul.f32 %v1122, %v1068
        %v1134 = vmul.f32 %v1122, %v1069
        %v1135 = vmul.f32 %v1122, %v1070
        %v1136 = vmul.f32 %v1122, %v1071
        %v1137 = vmul.f32 %v1122, %v1072
        %v1138 = vmul.f32 %v1122, %v1073
        %v1139 = vmul.f32 %v1122, %v1074
        %v1140 = vmul.f32 %v1122, %v1075
        %v1141 = vmul.f32 %v1122, %v1076
        %v1142 = vmul.f32 %v1122, %v1077
        %v1143 = vmul.f32 %v1122, %v1078
        %v1144 = vmul.f32 %v1122, %v1079
        %v1145 = vmul.f32 %v1122, %v1080
        %v1146 = vmul.f32 %v1122, %v1081
        %v1147 = vmul.f32 %v1122, %v1082
        %v1148 = vmul.f32 %v1122, %v1083
        %v1149 = vmul.f32 %v1122, %v1084
        %v1150 = vmul.f32 %v1122, %v1085
        %v1151 = vmul.f32 %v1122, %v1086
        %v1152 = vmul.f32 %v1122, %v1087
        %v1153 = vmul.f32 %v1122, %v1088
        %v1154 = vmul.f32 %v1122, %v1089
        %v1155 = vmul.f32 %v1122, %v1090
        %v1156 = vmul.f32 %v1122, %v1091
        %v1157 = vmul.f32 %v1122, %v1092
        %v1158 = vmul.f32 %v1122, %v1093
        %v1159 = vmul.f32 %v1122, %v1094
        %v1160 = vmul.f32 %v1122, %v1095
        %v1161 = vmul.f32 %v1122, %v1096
        %v1162 = vmul.f32 %v1122, %v1097
        %v1163 = vmul.f32 %v1122, %v1098
        %v1164 = vmul.f32 %v1122, %v1099
        %v1165 = vmul.f32 %v1122, %v1100
        %v1166 = vmul.f32 %v1122, %v1101
        %v1167 = vmul.f32 %v1122, %v1102
        %v1168 = vmul.f32 %v1122, %v1103
        %v1169 = vmul.f32 %v1122, %v1104
        %v1170 = vmul.f32 %v1122, %v1105
        %v1171 = vmul.f32 %v1122, %v1106
        %v1172 = vmul.f32 %v1122, %v1107
        %v1173 = vmul.f32 %v1122, %v1108
        %v1174 = vmul.f32 %v1122, %v1109
        %v1175 = vmul.f32 %v1122, %v1110
        %v1176 = vmul.f32 %v1122, %v1111
        %v1177 = vmul.f32 %v1122, %v1112
        %v1178 = vmul.f32 %v1122, %v1113
        %v1179 = vmul.f32 %v1122, %v1114
        %v1180 = vmul.f32 %v1122, %v1115
        %v1181 = vmul.f32 %v1122, %v1116
        %v1182 = vmul.f32 %v1122, %v1117
        %v1183 = vmul.f32 %v1122, %v1118
        %v1184 = vmul.f32 %v1122, %v1119
        %v1185 = vmul.f32 %v1122, %v1120
        %v1186 = vmul.f32 %v1122, %v1121
        %s1187 = ssub.f32 1.0, %s1057
        %s1188 = smul.u32 %s991, 512
        %s1189 = scalar_lea.vmem [#allocation2], %s1188
        %v1190 = vld [vmem:[%s1189] sm:$0xff]
        %v1191 = vld [vmem:[%s1189 + $0x8] sm:$0xff]
        %v1192 = vld [vmem:[%s1189 + $0x10] sm:$0xff]
        %v1193 = vld [vmem:[%s1189 + $0x18] sm:$0xff]
        %v1194 = vld [vmem:[%s1189 + $0x20] sm:$0xff]
        %v1195 = vld [vmem:[%s1189 + $0x28] sm:$0xff]
        %v1196 = vld [vmem:[%s1189 + $0x30] sm:$0xff]
        %v1197 = vld [vmem:[%s1189 + $0x38] sm:$0xff]
        %v1198 = vld [vmem:[%s1189 + $0x40] sm:$0xff]
        %v1199 = vld [vmem:[%s1189 + $0x48] sm:$0xff]
        %v1200 = vld [vmem:[%s1189 + $0x50] sm:$0xff]
        %v1201 = vld [vmem:[%s1189 + $0x58] sm:$0xff]
        %v1202 = vld [vmem:[%s1189 + $0x60] sm:$0xff]
        %v1203 = vld [vmem:[%s1189 + $0x68] sm:$0xff]
        %v1204 = vld [vmem:[%s1189 + $0x70] sm:$0xff]
        %v1205 = vld [vmem:[%s1189 + $0x78] sm:$0xff]
        %v1206 = vld [vmem:[%s1189 + $0x80] sm:$0xff]
        %v1207 = vld [vmem:[%s1189 + $0x88] sm:$0xff]
        %v1208 = vld [vmem:[%s1189 + $0x90] sm:$0xff]
        %v1209 = vld [vmem:[%s1189 + $0x98] sm:$0xff]
        %v1210 = vld [vmem:[%s1189 + $0xa0] sm:$0xff]
        %v1211 = vld [vmem:[%s1189 + $0xa8] sm:$0xff]
        %v1212 = vld [vmem:[%s1189 + $0xb0] sm:$0xff]
        %v1213 = vld [vmem:[%s1189 + $0xb8] sm:$0xff]
        %v1214 = vld [vmem:[%s1189 + $0xc0] sm:$0xff]
        %v1215 = vld [vmem:[%s1189 + $0xc8] sm:$0xff]
        %v1216 = vld [vmem:[%s1189 + $0xd0] sm:$0xff]
        %v1217 = vld [vmem:[%s1189 + $0xd8] sm:$0xff]
        %v1218 = vld [vmem:[%s1189 + $0xe0] sm:$0xff]
        %v1219 = vld [vmem:[%s1189 + $0xe8] sm:$0xff]
        %v1220 = vld [vmem:[%s1189 + $0xf0] sm:$0xff]
        %v1221 = vld [vmem:[%s1189 + $0xf8] sm:$0xff]
        %v1222 = vld [vmem:[%s1189 + $0x100] sm:$0xff]
        %v1223 = vld [vmem:[%s1189 + $0x108] sm:$0xff]
        %v1224 = vld [vmem:[%s1189 + $0x110] sm:$0xff]
        %v1225 = vld [vmem:[%s1189 + $0x118] sm:$0xff]
        %v1226 = vld [vmem:[%s1189 + $0x120] sm:$0xff]
        %v1227 = vld [vmem:[%s1189 + $0x128] sm:$0xff]
        %v1228 = vld [vmem:[%s1189 + $0x130] sm:$0xff]
        %v1229 = vld [vmem:[%s1189 + $0x138] sm:$0xff]
        %v1230 = vld [vmem:[%s1189 + $0x140] sm:$0xff]
        %v1231 = vld [vmem:[%s1189 + $0x148] sm:$0xff]
        %v1232 = vld [vmem:[%s1189 + $0x150] sm:$0xff]
        %v1233 = vld [vmem:[%s1189 + $0x158] sm:$0xff]
        %v1234 = vld [vmem:[%s1189 + $0x160] sm:$0xff]
        %v1235 = vld [vmem:[%s1189 + $0x168] sm:$0xff]
        %v1236 = vld [vmem:[%s1189 + $0x170] sm:$0xff]
        %v1237 = vld [vmem:[%s1189 + $0x178] sm:$0xff]
        %v1238 = vld [vmem:[%s1189 + $0x180] sm:$0xff]
        %v1239 = vld [vmem:[%s1189 + $0x188] sm:$0xff]
        %v1240 = vld [vmem:[%s1189 + $0x190] sm:$0xff]
        %v1241 = vld [vmem:[%s1189 + $0x198] sm:$0xff]
        %v1242 = vld [vmem:[%s1189 + $0x1a0] sm:$0xff]
        %v1243 = vld [vmem:[%s1189 + $0x1a8] sm:$0xff]
        %v1244 = vld [vmem:[%s1189 + $0x1b0] sm:$0xff]
        %v1245 = vld [vmem:[%s1189 + $0x1b8] sm:$0xff]
        %v1246 = vld [vmem:[%s1189 + $0x1c0] sm:$0xff]
        %v1247 = vld [vmem:[%s1189 + $0x1c8] sm:$0xff]
        %v1248 = vld [vmem:[%s1189 + $0x1d0] sm:$0xff]
        %v1249 = vld [vmem:[%s1189 + $0x1d8] sm:$0xff]
        %v1250 = vld [vmem:[%s1189 + $0x1e0] sm:$0xff]
        %v1251 = vld [vmem:[%s1189 + $0x1e8] sm:$0xff]
        %v1252 = vld [vmem:[%s1189 + $0x1f0] sm:$0xff]
        %v1253 = vld [vmem:[%s1189 + $0x1f8] sm:$0xff]
        %v1254 = vstv %s1187
        %v1255 = vmul.f32 %v1254, %v1190
        %v1256 = vmul.f32 %v1254, %v1191
        %v1257 = vmul.f32 %v1254, %v1192
        %v1258 = vmul.f32 %v1254, %v1193
        %v1259 = vmul.f32 %v1254, %v1194
        %v1260 = vmul.f32 %v1254, %v1195
        %v1261 = vmul.f32 %v1254, %v1196
        %v1262 = vmul.f32 %v1254, %v1197
        %v1263 = vmul.f32 %v1254, %v1198
        %v1264 = vmul.f32 %v1254, %v1199
        %v1265 = vmul.f32 %v1254, %v1200
        %v1266 = vmul.f32 %v1254, %v1201
        %v1267 = vmul.f32 %v1254, %v1202
        %v1268 = vmul.f32 %v1254, %v1203
        %v1269 = vmul.f32 %v1254, %v1204
        %v1270 = vmul.f32 %v1254, %v1205
        %v1271 = vmul.f32 %v1254, %v1206
        %v1272 = vmul.f32 %v1254, %v1207
        %v1273 = vmul.f32 %v1254, %v1208
        %v1274 = vmul.f32 %v1254, %v1209
        %v1275 = vmul.f32 %v1254, %v1210
        %v1276 = vmul.f32 %v1254, %v1211
        %v1277 = vmul.f32 %v1254, %v1212
        %v1278 = vmul.f32 %v1254, %v1213
        %v1279 = vmul.f32 %v1254, %v1214
        %v1280 = vmul.f32 %v1254, %v1215
        %v1281 = vmul.f32 %v1254, %v1216
        %v1282 = vmul.f32 %v1254, %v1217
        %v1283 = vmul.f32 %v1254, %v1218
        %v1284 = vmul.f32 %v1254, %v1219
        %v1285 = vmul.f32 %v1254, %v1220
        %v1286 = vmul.f32 %v1254, %v1221
        %v1287 = vmul.f32 %v1254, %v1222
        %v1288 = vmul.f32 %v1254, %v1223
        %v1289 = vmul.f32 %v1254, %v1224
        %v1290 = vmul.f32 %v1254, %v1225
        %v1291 = vmul.f32 %v1254, %v1226
        %v1292 = vmul.f32 %v1254, %v1227
        %v1293 = vmul.f32 %v1254, %v1228
        %v1294 = vmul.f32 %v1254, %v1229
        %v1295 = vmul.f32 %v1254, %v1230
        %v1296 = vmul.f32 %v1254, %v1231
        %v1297 = vmul.f32 %v1254, %v1232
        %v1298 = vmul.f32 %v1254, %v1233
        %v1299 = vmul.f32 %v1254, %v1234
        %v1300 = vmul.f32 %v1254, %v1235
        %v1301 = vmul.f32 %v1254, %v1236
        %v1302 = vmul.f32 %v1254, %v1237
        %v1303 = vmul.f32 %v1254, %v1238
        %v1304 = vmul.f32 %v1254, %v1239
        %v1305 = vmul.f32 %v1254, %v1240
        %v1306 = vmul.f32 %v1254, %v1241
        %v1307 = vmul.f32 %v1254, %v1242
        %v1308 = vmul.f32 %v1254, %v1243
        %v1309 = vmul.f32 %v1254, %v1244
        %v1310 = vmul.f32 %v1254, %v1245
        %v1311 = vmul.f32 %v1254, %v1246
        %v1312 = vmul.f32 %v1254, %v1247
        %v1313 = vmul.f32 %v1254, %v1248
        %v1314 = vmul.f32 %v1254, %v1249
        %v1315 = vmul.f32 %v1254, %v1250
        %v1316 = vmul.f32 %v1254, %v1251
        %v1317 = vmul.f32 %v1254, %v1252
        %v1318 = vmul.f32 %v1254, %v1253
        %v1319 = vadd.f32 %v1123, %v1255
        %v1320 = vadd.f32 %v1124, %v1256
        %v1321 = vadd.f32 %v1125, %v1257
        %v1322 = vadd.f32 %v1126, %v1258
        %v1323 = vadd.f32 %v1127, %v1259
        %v1324 = vadd.f32 %v1128, %v1260
        %v1325 = vadd.f32 %v1129, %v1261
        %v1326 = vadd.f32 %v1130, %v1262
        %v1327 = vadd.f32 %v1131, %v1263
        %v1328 = vadd.f32 %v1132, %v1264
        %v1329 = vadd.f32 %v1133, %v1265
        %v1330 = vadd.f32 %v1134, %v1266
        %v1331 = vadd.f32 %v1135, %v1267
        %v1332 = vadd.f32 %v1136, %v1268
        %v1333 = vadd.f32 %v1137, %v1269
        %v1334 = vadd.f32 %v1138, %v1270
        %v1335 = vadd.f32 %v1139, %v1271
        %v1336 = vadd.f32 %v1140, %v1272
        %v1337 = vadd.f32 %v1141, %v1273
        %v1338 = vadd.f32 %v1142, %v1274
        %v1339 = vadd.f32 %v1143, %v1275
        %v1340 = vadd.f32 %v1144, %v1276
        %v1341 = vadd.f32 %v1145, %v1277
        %v1342 = vadd.f32 %v1146, %v1278
        %v1343 = vadd.f32 %v1147, %v1279
        %v1344 = vadd.f32 %v1148, %v1280
        %v1345 = vadd.f32 %v1149, %v1281
        %v1346 = vadd.f32 %v1150, %v1282
        %v1347 = vadd.f32 %v1151, %v1283
        %v1348 = vadd.f32 %v1152, %v1284
        %v1349 = vadd.f32 %v1153, %v1285
        %v1350 = vadd.f32 %v1154, %v1286
        %v1351 = vadd.f32 %v1155, %v1287
        %v1352 = vadd.f32 %v1156, %v1288
        %v1353 = vadd.f32 %v1157, %v1289
        %v1354 = vadd.f32 %v1158, %v1290
        %v1355 = vadd.f32 %v1159, %v1291
        %v1356 = vadd.f32 %v1160, %v1292
        %v1357 = vadd.f32 %v1161, %v1293
        %v1358 = vadd.f32 %v1162, %v1294
        %v1359 = vadd.f32 %v1163, %v1295
        %v1360 = vadd.f32 %v1164, %v1296
        %v1361 = vadd.f32 %v1165, %v1297
        %v1362 = vadd.f32 %v1166, %v1298
        %v1363 = vadd.f32 %v1167, %v1299
        %v1364 = vadd.f32 %v1168, %v1300
        %v1365 = vadd.f32 %v1169, %v1301
        %v1366 = vadd.f32 %v1170, %v1302
        %v1367 = vadd.f32 %v1171, %v1303
        %v1368 = vadd.f32 %v1172, %v1304
        %v1369 = vadd.f32 %v1173, %v1305
        %v1370 = vadd.f32 %v1174, %v1306
        %v1371 = vadd.f32 %v1175, %v1307
        %v1372 = vadd.f32 %v1176, %v1308
        %v1373 = vadd.f32 %v1177, %v1309
        %v1374 = vadd.f32 %v1178, %v1310
        %v1375 = vadd.f32 %v1179, %v1311
        %v1376 = vadd.f32 %v1180, %v1312
        %v1377 = vadd.f32 %v1181, %v1313
        %v1378 = vadd.f32 %v1182, %v1314
        %v1379 = vadd.f32 %v1183, %v1315
        %v1380 = vadd.f32 %v1184, %v1316
        %v1381 = vadd.f32 %v1185, %v1317
        %v1382 = vadd.f32 %v1186, %v1318
        %1383 = vst [vmem:[%s226] sm:$0xff] %v1319
        %1384 = vst [vmem:[%s226 + $0x8] sm:$0xff] %v1320
        %1385 = vst [vmem:[%s226 + $0x10] sm:$0xff] %v1321
        %1386 = vst [vmem:[%s226 + $0x18] sm:$0xff] %v1322
        %1387 = vst [vmem:[%s226 + $0x20] sm:$0xff] %v1323
        %1388 = vst [vmem:[%s226 + $0x28] sm:$0xff] %v1324
        %1389 = vst [vmem:[%s226 + $0x30] sm:$0xff] %v1325
        %1390 = vst [vmem:[%s226 + $0x38] sm:$0xff] %v1326
        %1391 = vst [vmem:[%s226 + $0x40] sm:$0xff] %v1327
        %1392 = vst [vmem:[%s226 + $0x48] sm:$0xff] %v1328
        %1393 = vst [vmem:[%s226 + $0x50] sm:$0xff] %v1329
        %1394 = vst [vmem:[%s226 + $0x58] sm:$0xff] %v1330
        %1395 = vst [vmem:[%s226 + $0x60] sm:$0xff] %v1331
        %1396 = vst [vmem:[%s226 + $0x68] sm:$0xff] %v1332
        %1397 = vst [vmem:[%s226 + $0x70] sm:$0xff] %v1333
        %1398 = vst [vmem:[%s226 + $0x78] sm:$0xff] %v1334
        %1399 = vst [vmem:[%s226 + $0x80] sm:$0xff] %v1335
        %1400 = vst [vmem:[%s226 + $0x88] sm:$0xff] %v1336
        %1401 = vst [vmem:[%s226 + $0x90] sm:$0xff] %v1337
        %1402 = vst [vmem:[%s226 + $0x98] sm:$0xff] %v1338
        %1403 = vst [vmem:[%s226 + $0xa0] sm:$0xff] %v1339
        %1404 = vst [vmem:[%s226 + $0xa8] sm:$0xff] %v1340
        %1405 = vst [vmem:[%s226 + $0xb0] sm:$0xff] %v1341
        %1406 = vst [vmem:[%s226 + $0xb8] sm:$0xff] %v1342
        %1407 = vst [vmem:[%s226 + $0xc0] sm:$0xff] %v1343
        %1408 = vst [vmem:[%s226 + $0xc8] sm:$0xff] %v1344
        %1409 = vst [vmem:[%s226 + $0xd0] sm:$0xff] %v1345
        %1410 = vst [vmem:[%s226 + $0xd8] sm:$0xff] %v1346
        %1411 = vst [vmem:[%s226 + $0xe0] sm:$0xff] %v1347
        %1412 = vst [vmem:[%s226 + $0xe8] sm:$0xff] %v1348
        %1413 = vst [vmem:[%s226 + $0xf0] sm:$0xff] %v1349
        %1414 = vst [vmem:[%s226 + $0xf8] sm:$0xff] %v1350
        %1415 = vst [vmem:[%s226 + $0x100] sm:$0xff] %v1351
        %1416 = vst [vmem:[%s226 + $0x108] sm:$0xff] %v1352
        %1417 = vst [vmem:[%s226 + $0x110] sm:$0xff] %v1353
        %1418 = vst [vmem:[%s226 + $0x118] sm:$0xff] %v1354
        %1419 = vst [vmem:[%s226 + $0x120] sm:$0xff] %v1355
        %1420 = vst [vmem:[%s226 + $0x128] sm:$0xff] %v1356
        %1421 = vst [vmem:[%s226 + $0x130] sm:$0xff] %v1357
        %1422 = vst [vmem:[%s226 + $0x138] sm:$0xff] %v1358
        %1423 = vst [vmem:[%s226 + $0x140] sm:$0xff] %v1359
        %1424 = vst [vmem:[%s226 + $0x148] sm:$0xff] %v1360
        %1425 = vst [vmem:[%s226 + $0x150] sm:$0xff] %v1361
        %1426 = vst [vmem:[%s226 + $0x158] sm:$0xff] %v1362
        %1427 = vst [vmem:[%s226 + $0x160] sm:$0xff] %v1363
        %1428 = vst [vmem:[%s226 + $0x168] sm:$0xff] %v1364
        %1429 = vst [vmem:[%s226 + $0x170] sm:$0xff] %v1365
        %1430 = vst [vmem:[%s226 + $0x178] sm:$0xff] %v1366
        %1431 = vst [vmem:[%s226 + $0x180] sm:$0xff] %v1367
        %1432 = vst [vmem:[%s226 + $0x188] sm:$0xff] %v1368
        %1433 = vst [vmem:[%s226 + $0x190] sm:$0xff] %v1369
        %1434 = vst [vmem:[%s226 + $0x198] sm:$0xff] %v1370
        %1435 = vst [vmem:[%s226 + $0x1a0] sm:$0xff] %v1371
        %1436 = vst [vmem:[%s226 + $0x1a8] sm:$0xff] %v1372
        %1437 = vst [vmem:[%s226 + $0x1b0] sm:$0xff] %v1373
        %1438 = vst [vmem:[%s226 + $0x1b8] sm:$0xff] %v1374
        %1439 = vst [vmem:[%s226 + $0x1c0] sm:$0xff] %v1375
        %1440 = vst [vmem:[%s226 + $0x1c8] sm:$0xff] %v1376
        %1441 = vst [vmem:[%s226 + $0x1d0] sm:$0xff] %v1377
        %1442 = vst [vmem:[%s226 + $0x1d8] sm:$0xff] %v1378
        %1443 = vst [vmem:[%s226 + $0x1e0] sm:$0xff] %v1379
        %1444 = vst [vmem:[%s226 + $0x1e8] sm:$0xff] %v1380
        %1445 = vst [vmem:[%s226 + $0x1f0] sm:$0xff] %v1381
        %1446 = vst [vmem:[%s226 + $0x1f8] sm:$0xff] %v1382
        %s1447 = sand.u32 %s101, 1
        %s1448 = scalar_lea.sflag [#allocation9], %s1447
        %s1449 = sand.u32 %s101, 1
        %s1450 = smul.addr %s1449, 512
        %s1451 = scalar_lea.vmem [#allocation10], %s1450
        // Predicated region
        $region169: #{tpu_custom_call.1} parent=27 // pred_check
          %p1452 = pneg %p111
        $region170: #{tpu_custom_call.1} parent=27 // pred_check_branch
          %1454 = sbr.rel (%p1452) target = $region172
        $region171: #{tpu_custom_call.1} parent=27 // pred_region
          #allocation80 [shape = 'u32[6]{0}', space=smem, size = 0x18, scoped, tag = 'DMA stride descriptor']
          %s1455 = smul.u32 16, %s34
          %s1456 = smul.u32 4, %s35
          %s1457 = ssub.s32 20, %s1455
          %p1458 = scmp.lt.s32.totalorder %s1457, 16
          %s1459 = scalar_select %p1458, %s1457, 16
          %s1460 = smul.u32 8, %s1459
          %s1461 = smul.u32 %s1460, 4
          %s1462 = ssub.s32 512, %s1461
          %s1463 = sshll.u32 %s1462, 4
          %1464 = vsyncadd %s1448, %s1463
          %p1465 = scmp.ne.s32.totalorder 0, %s1461
          %s1466 = smul.addr %s1455, 12
          %s1467 = sadd.s32 %s1456, %s1466
          %s1468 = smul.addr %s1467, 8
          %s1469 = scalar_lea.hbm %s4, %s1468
          %s1470 = smul.u32 32, %s1459
          %s1472 = sshll.u32 1, 14
          %s1473 = sxor.u32 4294967295, %s1472
          %s1476 = sshll.u32 7, 18
          %s1477 = sxor.u32 4294967295, %s1476
          %s1478 = sand.u32 0, %s1477
          %s1480 = sor.u32 %s1478, 0
          %s1481 = sshll.u32 %s1451, 4
          %s1482 = int_to_ptr.vmem [resolvable:$true] %s1481
          %s1483 = sshll.u32 %s1469, 4
          %s1484 = int_to_ptr.hbm [resolvable:$true] %s1483
          %s1485 = sshll.u32 %s1470, 4
          %1490 = sst [smem:[#allocation80]] 512
          %s1491 = scalar_lea.smem [#allocation80], 1
          %1492 = sst [smem:[%s1491]] 1536
          %s1493 = scalar_lea.smem [#allocation80], 2
          %1494 = sst [smem:[%s1493]] 4
          %s1495 = scalar_lea.smem [#allocation80], 3
          %1496 = sst [smem:[%s1495]] 128
          %s1497 = scalar_lea.smem [#allocation80], 4
          %1498 = sst [smem:[%s1497]] 128
          %s1499 = scalar_lea.smem [#allocation80], 5
          %1500 = sst [smem:[%s1499]] 8
          %1502 = dma.general (%p1465), %s1482, %s1485, %s1484, %s1448, [#allocation79], [#allocation80], %s1480, 0
        $region172: #{tpu_custom_call.1} parent=27 // pred_fallthru
          _
      $region28: #{tpu_custom_call.1} parent=5 // pred_fallthru
        _
      %p1503 = scmp.le.s32.totalorder 2, %s25
      // Predicated region
      $region173: #{tpu_custom_call.1} parent=5 // pred_check
        %p1504 = pneg %p1503
      $region174: #{tpu_custom_call.1} parent=5 // pred_check_branch
        %1506 = sbr.rel (%p1504) target = $region176
      $region175: #{tpu_custom_call.1} parent=5 // pred_region
        %s1507 = ssub.s32 %s25, 2
        // Predicated region
        $region177: #{tpu_custom_call.1} parent=175 // pred_check
          %p1508 = pneg %p117
        $region178: #{tpu_custom_call.1} parent=175 // pred_check_branch
          %1510 = sbr.rel (%p1508) target = $region180
        $region179: #{tpu_custom_call.1} parent=175 // pred_region
          %s1511 = sand.u32 %s102, 1
          %s1512 = scalar_lea.sflag [#allocation9], %s1511
          %s1513 = sand.u32 %s102, 1
          %s1514 = smul.addr %s1513, 512
          %s1515 = scalar_lea.vmem [#allocation10], %s1514
          %1517 = dma.done %s1512, 8192
        $region180: #{tpu_custom_call.1} parent=175 // pred_fallthru
          _
      $region176: #{tpu_custom_call.1} parent=5 // pred_fallthru
        _
    $region6: #{tpu_custom_call.1} parent=1 // loop_footer
      %s29 = sadd.s32 1, %s25
    $region7: #{tpu_custom_call.1} parent=1 // loop_footer_branch
      %24 = sbr.rel target = $region3
    $region8: #{tpu_custom_call.1} parent=1 // loop_exit
      _
    %1518 = vsyncpa [#allocation8], 1
    %s1519 = scalar_lea.sflag [#allocation8], 1
    %1520 = vsyncpa %s1519, 1
    %1521 = vsyncpa [#allocation9], 1
    %s1522 = scalar_lea.sflag [#allocation9], 1
    %1523 = vsyncpa %s1522, 1
  %1524 = vsyncmov [#allocation3]
  %s1525 = vpop.sfrf %1524
  %p1526 = scmp.eq.s32.totalorder %s1525, 0
  %p1527 = pneg %p1526
  %1529 = shalt.err (%p1527)
  %s1530 = scalar_lea.sflag [#allocation3], 1
  %1531 = vsyncmov %s1530
  %s1532 = vpop.sfrf %1531
  %p1533 = scmp.eq.s32.totalorder %s1532, 0
  %p1534 = pneg %p1533
  %1536 = shalt.err (%p1534)
  %s1537 = scalar_lea.sflag [#allocation3], 2
  %1538 = vsyncmov %s1537
  %s1539 = vpop.sfrf %1538
  %p1540 = scmp.eq.s32.totalorder %s1539, 0
  %p1541 = pneg %p1540
  %1543 = shalt.err (%p1541)
  %s1544 = scalar_lea.sflag [#allocation3], 3
  %1545 = vsyncmov %s1544
  %s1546 = vpop.sfrf %1545
  %p1547 = scmp.eq.s32.totalorder %s1546, 0
  %p1548 = pneg %p1547
  %1550 = shalt.err (%p1548)
  %s1551 = scalar_lea.sflag [#allocation3], 4
  %1552 = vsyncmov %s1551
  %s1553 = vpop.sfrf %1552
  %p1554 = scmp.eq.s32.totalorder %s1553, 0
  %p1555 = pneg %p1554
  %1557 = shalt.err (%p1555)
  %s1558 = scalar_lea.sflag [#allocation3], 5
  %1559 = vsyncmov %s1558
  %s1560 = vpop.sfrf %1559
  %p1561 = scmp.eq.s32.totalorder %s1560, 0
  %p1562 = pneg %p1561
  %1564 = shalt.err (%p1562)
  %s1565 = scalar_lea.sflag [#allocation3], 6
  %1566 = vsyncmov %s1565
  %s1567 = vpop.sfrf %1566
  %p1568 = scmp.eq.s32.totalorder %s1567, 0
  %p1569 = pneg %p1568
  %1571 = shalt.err (%p1569)
  %s1572 = scalar_lea.sflag [#allocation3], 7
  %1573 = vsyncmov %s1572
  %s1574 = vpop.sfrf %1573
  %p1575 = scmp.eq.s32.totalorder %s1574, 0
  %p1576 = pneg %p1575
  %1578 = shalt.err (%p1576)
  %s1579 = scalar_lea.sflag [#allocation3], 8
  %1580 = vsyncmov %s1579
  %s1581 = vpop.sfrf %1580
  %p1582 = scmp.eq.s32.totalorder %s1581, 0
  %p1583 = pneg %p1582
  %1585 = shalt.err (%p1583)
  %s1586 = scalar_lea.sflag [#allocation3], 9
  %1587 = vsyncmov %s1586
  %s1588 = vpop.sfrf %1587
  %p1589 = scmp.eq.s32.totalorder %s1588, 0
  %p1590 = pneg %p1589
  %1592 = shalt.err (%p1590)
  %s1593 = scalar_lea.sflag [#allocation3], 10
  %1594 = vsyncmov %s1593
  %s1595 = vpop.sfrf %1594
  %p1596 = scmp.eq.s32.totalorder %s1595, 0
  %p1597 = pneg %p1596
  %1599 = shalt.err (%p1597)
  %s1600 = scalar_lea.sflag [#allocation3], 11
  %1601 = vsyncmov %s1600
  %s1602 = vpop.sfrf %1601
  %p1603 = scmp.eq.s32.totalorder %s1602, 0
  %p1604 = pneg %p1603
  %1606 = shalt.err (%p1604)
  %s1607 = scalar_lea.sflag [#allocation3], 12
  %1608 = vsyncmov %s1607
  %s1609 = vpop.sfrf %1608
  %p1610 = scmp.eq.s32.totalorder %s1609, 0
  %p1611 = pneg %p1610
  %1613 = shalt.err (%p1611)
  %s1614 = scalar_lea.sflag [#allocation3], 13
  %1615 = vsyncmov %s1614
  %s1616 = vpop.sfrf %1615
  %p1617 = scmp.eq.s32.totalorder %s1616, 0
  %p1618 = pneg %p1617
  %1620 = shalt.err (%p1618)
  %s1621 = scalar_lea.sflag [#allocation3], 14
  %1622 = vsyncmov %s1621
  %s1623 = vpop.sfrf %1622
  %p1624 = scmp.eq.s32.totalorder %s1623, 0
  %p1625 = pneg %p1624
  %1627 = shalt.err (%p1625)
  %s1628 = scalar_lea.sflag [#allocation3], 15
  %1629 = vsyncmov %s1628
  %s1630 = vpop.sfrf %1629
  %p1631 = scmp.eq.s32.totalorder %s1630, 0
  %p1632 = pneg %p1631
  %1634 = shalt.err (%p1632)
  %s1635 = scalar_lea.sflag [#allocation3], 16
  %1636 = vsyncmov %s1635
  %s1637 = vpop.sfrf %1636
  %p1638 = scmp.eq.s32.totalorder %s1637, 0
  %p1639 = pneg %p1638
  %1641 = shalt.err (%p1639)
  %s1642 = scalar_lea.sflag [#allocation3], 17
  %1643 = vsyncmov %s1642
  %s1644 = vpop.sfrf %1643
  %p1645 = scmp.eq.s32.totalorder %s1644, 0
  %p1646 = pneg %p1645
  %1648 = shalt.err (%p1646)
  %s1649 = scalar_lea.sflag [#allocation3], 18
  %1650 = vsyncmov %s1649
  %s1651 = vpop.sfrf %1650
  %p1652 = scmp.eq.s32.totalorder %s1651, 0
  %p1653 = pneg %p1652
  %1655 = shalt.err (%p1653)
  %s1656 = scalar_lea.sflag [#allocation3], 19
  %1657 = vsyncmov %s1656
  %s1658 = vpop.sfrf %1657
  %p1659 = scmp.eq.s32.totalorder %s1658, 0
  %p1660 = pneg %p1659
  %1662 = shalt.err (%p1660)
  %s1663 = scalar_lea.sflag [#allocation3], 20
  %1664 = vsyncmov %s1663
  %s1665 = vpop.sfrf %1664
  %p1666 = scmp.eq.s32.totalorder %s1665, 0
  %p1667 = pneg %p1666
  %1669 = shalt.err (%p1667)
  %s1670 = scalar_lea.sflag [#allocation3], 21
  %1671 = vsyncmov %s1670
  %s1672 = vpop.sfrf %1671
  %p1673 = scmp.eq.s32.totalorder %s1672, 0
  %p1674 = pneg %p1673
  %1676 = shalt.err (%p1674)
  %s1677 = scalar_lea.sflag [#allocation3], 22
  %1678 = vsyncmov %s1677
  %s1679 = vpop.sfrf %1678
  %p1680 = scmp.eq.s32.totalorder %s1679, 0
  %p1681 = pneg %p1680
  %1683 = shalt.err (%p1681)
  %s1684 = scalar_lea.sflag [#allocation3], 23
  %1685 = vsyncmov %s1684
  %s1686 = vpop.sfrf %1685
  %p1687 = scmp.eq.s32.totalorder %s1686, 0
  %p1688 = pneg %p1687
  %1690 = shalt.err (%p1688)
  %s1691 = scalar_lea.sflag [#allocation3], 24
  %1692 = vsyncmov %s1691
  %s1693 = vpop.sfrf %1692
  %p1694 = scmp.eq.s32.totalorder %s1693, 0
  %p1695 = pneg %p1694
  %1697 = shalt.err (%p1695)
  %s1698 = scalar_lea.sflag [#allocation3], 25
  %1699 = vsyncmov %s1698
  %s1700 = vpop.sfrf %1699
  %p1701 = scmp.eq.s32.totalorder %s1700, 0
  %p1702 = pneg %p1701
  %1704 = shalt.err (%p1702)
  %s1705 = scalar_lea.sflag [#allocation3], 26
  %1706 = vsyncmov %s1705
  %s1707 = vpop.sfrf %1706
  %p1708 = scmp.eq.s32.totalorder %s1707, 0
  %p1709 = pneg %p1708
  %1711 = shalt.err (%p1709)
  %s1712 = scalar_lea.sflag [#allocation3], 27
  %1713 = vsyncmov %s1712
  %s1714 = vpop.sfrf %1713
  %p1715 = scmp.eq.s32.totalorder %s1714, 0
  %p1716 = pneg %p1715
  %1718 = shalt.err (%p1716)
  %s1719 = scalar_lea.sflag [#allocation3], 28
  %1720 = vsyncmov %s1719
  %s1721 = vpop.sfrf %1720
  %p1722 = scmp.eq.s32.totalorder %s1721, 0
  %p1723 = pneg %p1722
  %1725 = shalt.err (%p1723)
  %s1726 = scalar_lea.sflag [#allocation3], 29
  %1727 = vsyncmov %s1726
  %s1728 = vpop.sfrf %1727
  %p1729 = scmp.eq.s32.totalorder %s1728, 0
  %p1730 = pneg %p1729
  %1732 = shalt.err (%p1730)
  %s1733 = scalar_lea.sflag [#allocation3], 30
  %1734 = vsyncmov %s1733
  %s1735 = vpop.sfrf %1734
  %p1736 = scmp.eq.s32.totalorder %s1735, 0
  %p1737 = pneg %p1736
  %1739 = shalt.err (%p1737)
  %s1740 = scalar_lea.sflag [#allocation3], 31
  %1741 = vsyncmov %s1740
  %s1742 = vpop.sfrf %1741
  %p1743 = scmp.eq.s32.totalorder %s1742, 0
  %p1744 = pneg %p1743
  %1746 = shalt.err (%p1744)

</llo_original>
